<compile_context>
chip_gen: v7x
topology: tpu7x:2x2x1
jax: 0.10.0
libtpu: 0.0.40
codegen_flags: <defaults>
</compile_context>

<pallas_src>
import jax
import jax.numpy as jnp
from jax import lax
from jax.experimental import pallas as pl
from jax.experimental.pallas import tpu as pltpu


# ----------------------------------------------------------------------------
# Fused forward kernel: the entire `neuro` network for one batch element.
# ----------------------------------------------------------------------------
def _make_fused_kernel(H, W, n_c, n_trunk, c_out):
    HW = H * W
    w_pow2 = (W & (W - 1)) == 0

    def kernel(lv_ref, hv_ref, lv1w_ref, lv1b_ref, stdw_ref, stdb_ref,
               headw_ref, headb_ref, outw_ref, outb_ref, big_ref, feat_ref):

        # x-coordinate of every lane (pixel) of the flattened image; used for
        # the left/right boundary masks.  Computed once, reused by every conv.
        lane = lax.broadcasted_iota(jnp.int32, (1, HW), 1)
        xcol = (lane & (W - 1)) if w_pow2 else (lane % W)
        masks = {}
        for d in (1, 2):
            masks[d] = ((xcol < (W - d)).astype(jnp.bfloat16),   # valid when reading x+d
                        (xcol >= d).astype(jnp.bfloat16))        # valid when reading x-d

        def im2col(x, d):
            """x: (C, HW) f32 -> (9C, HW) bf16 patch ('same' zero pad, dilation d).

            Row order = (ky*3 + kx)*C + c, matching w.reshape(9*C, Cout).T.
            Channel-major: a spatial tap is a lane shift of the flattened image.
            The flat zero padding handles the y boundary exactly; the lane masks
            zero the columns whose x-shift crossed a row boundary.
            """
            C = x.shape[0]
            mask_r, mask_l = masks[d]
            xb = x.astype(jnp.bfloat16)                     # cast early (half the shuffle traffic)
            pad = d * (W + 1)                               # max |flat shift|
            z = jnp.zeros((C, pad), jnp.bfloat16)
            xp = jnp.concatenate([z, xb, z], axis=1)        # (C, HW + 2*pad)
            rows = []
            for ky in range(3):
                for kx in range(3):
                    s = ((ky - 1) * W + (kx - 1)) * d       # flat shift of this tap
                    sl = xp[:, pad + s: pad + s + HW]       # value at pixel p+s (0 outside image)
                    if kx == 2:
                        sl = sl * mask_r
                    elif kx == 0:
                        sl = sl * mask_l
                    rows.append(sl)
            return jnp.concatenate(rows, axis=0)            # (9C, HW) bf16

        def epilogue(acc, b, relu=False, residual=None):
            out = acc + b                                   # (Cout, 1) broadcasts over lanes
            if residual is not None:
                out = out + residual
            if relu:
                out = jnp.maximum(out, 0.0)
            return out

        def conv(x, w, b, d=1, relu=False, residual=None):
            """Single-image 3x3 conv: (Cout,9Cin) @ (9Cin,HW) -> (Cout,HW) f32."""
            acc = jnp.dot(w, im2col(x, d), preferred_element_type=jnp.float32)
            return epilogue(acc, b, relu, residual)

        def conv_dual(xs, w, b, relu=False, residual=None):
            """Shared-weight conv on the stacked [LV(d=1) | HV(d=2)] feature
            (C, 2*HW): two im2cols, ONE matmul."""
            patch = jnp.concatenate(
                [im2col(xs[:, :HW], 1), im2col(xs[:, HW:], 2)], axis=1)  # (9C, 2HW)
            acc = jnp.dot(w, patch, preferred_element_type=jnp.float32)
            return epilogue(acc, b, relu, residual)

        # ---- neuro_lv: conv_1 + 2 ResidualBlock_noBN, LV & HV stacked on lanes
        patch0 = jnp.concatenate(
            [im2col(lv_ref[0], 1), im2col(hv_ref[0], 2)], axis=1)        # (9*Cin, 2HW)
        f = epilogue(jnp.dot(lv1w_ref[...], patch0,
                             preferred_element_type=jnp.float32),
                     lv1b_ref[...], relu=True)                           # (n_c, 2HW)
        for blk in range(2):
            t = conv_dual(f, stdw_ref[2 * blk], stdb_ref[2 * blk], relu=True)
            f = conv_dual(t, stdw_ref[2 * blk + 1], stdb_ref[2 * blk + 1],
                          residual=f)

        feat = f[:, :HW] + f[:, HW:]                                     # lv + hv

        # ---- recon_trunk (n_trunk blocks) + last block's conv1/convh ----------
        for blk in range(n_trunk + 1):
            j = 4 + 2 * blk                        # weights loaded lazily at use
            t = conv(feat, stdw_ref[j], stdb_ref[j], relu=True)
            feat = conv(t, stdw_ref[j + 1], stdb_ref[j + 1], residual=feat)

        # ---- fused heads (3x 16->16) and fused block-diagonal output convs ----
        head = conv(feat, headw_ref[...], headb_ref[...], relu=True)     # (3*n_c, HW)
        big = conv(head, outw_ref[...], outb_ref[...])                   # (c_out, HW)

        # Channel-major result == flattened NCHW: store directly, no transpose.
        big_ref[0] = big.astype(big_ref.dtype)
        feat_ref[0] = feat.astype(feat_ref.dtype)

    return kernel


def _fused_neuro(packed, cat_lv, cat_hv, H, W):
    B, c_pad, HW = cat_lv.shape
    n_std, n_c, _ = packed["std_w"].shape
    n_trunk = (n_std - 6) // 2
    c_out = packed["out_w"].shape[0]

    kernel = _make_fused_kernel(H, W, n_c, n_trunk, c_out)

    # Advisory cost estimate so XLA schedules the small surrounding ops sensibly.
    macs_per_b = (n_c * 9 * c_pad * 2 * HW
                  + 4 * n_c * 9 * n_c * 2 * HW
                  + (2 * (n_trunk + 1) + 3) * n_c * 9 * n_c * HW
                  + c_out * 27 * n_c * HW)
    weight_bytes = sum(int(v.size) * v.dtype.itemsize for v in packed.values())
    cost = pl.CostEstimate(
        flops=int(2 * B * macs_per_b),
        transcendentals=0,
        bytes_accessed=int(2 * B * c_pad * HW * 4
                           + B * (c_out + n_c) * HW * 4 + weight_bytes))

    big, feat = pl.pallas_call(
        kernel,
        out_shape=[
            jax.ShapeDtypeStruct((B, c_out, HW), jnp.float32),
            jax.ShapeDtypeStruct((B, n_c, HW), jnp.float32),
        ],
        grid=(B,),
        in_specs=[
            pl.BlockSpec((1, c_pad, HW), lambda i: (i, 0, 0)),
            pl.BlockSpec((1, c_pad, HW), lambda i: (i, 0, 0)),
            pl.BlockSpec(packed["lv1_w"].shape, lambda i: (0, 0)),
            pl.BlockSpec(packed["lv1_b"].shape, lambda i: (0, 0)),
            pl.BlockSpec(packed["std_w"].shape, lambda i: (0, 0, 0)),
            pl.BlockSpec(packed["std_b"].shape, lambda i: (0, 0, 0)),
            pl.BlockSpec(packed["head_w"].shape, lambda i: (0, 0)),
            pl.BlockSpec(packed["head_b"].shape, lambda i: (0, 0)),
            pl.BlockSpec(packed["out_w"].shape, lambda i: (0, 0)),
            pl.BlockSpec(packed["out_b"].shape, lambda i: (0, 0)),
        ],
        out_specs=[
            pl.BlockSpec((1, c_out, HW), lambda i: (i, 0, 0)),
            pl.BlockSpec((1, n_c, HW), lambda i: (i, 0, 0)),
        ],
        compiler_params=pltpu.CompilerParams(
            dimension_semantics=("parallel",),      # feeds both v7x TensorCores
            vmem_limit_bytes=32 * 1024 * 1024,      # working set << 32 MiB
        ),
        cost_estimate=cost,
    )(cat_lv, cat_hv,
      packed["lv1_w"], packed["lv1_b"], packed["std_w"], packed["std_b"],
      packed["head_w"], packed["head_b"], packed["out_w"], packed["out_b"])
    return big, feat


# ----------------------------------------------------------------------------
# Parameter construction (deterministic, mirrors the PyTorch __init__ shapes).
# ----------------------------------------------------------------------------
def init_params(key, n_c, n_b):
    keys = iter(jax.random.split(key, 64))

    def conv(cin, cout):
        # kaiming_normal (fan_in, a=0) scaled by 0.1, zero bias
        std = 0.1 * (2.0 / (cin * 9)) ** 0.5
        w = std * jax.random.normal(next(keys), (3, 3, cin, cout), jnp.float32)
        return {"w": w, "b": jnp.zeros((cout,), jnp.float32)}

    def block(nf):
        return {"conv1": conv(nf, nf), "conv2": conv(nf, nf)}

    scale = 4  # hard-coded in ResidualBlock_noBN_last(n_c, 4)
    return {
        "lv_conv1": conv(2 * n_c + 9, n_c),
        "lv_blocks": [block(n_c) for _ in range(2)],
        "trunk": [block(n_c) for _ in range(n_b - 2)],
        "rl_conv1": conv(n_c, n_c),
        "rl_convh": conv(n_c, n_c),
        "rl_head_o": conv(n_c, n_c),
        "rl_head_dl": conv(n_c, n_c),
        "rl_head_dr": conv(n_c, n_c),
        "rl_conv_o": conv(n_c, scale * scale * 3),
        "rl_conv_dl": conv(n_c, scale * scale * 3),
        "rl_conv_dr": conv(n_c, scale * scale * 3),
    }


def pack_params(params):
    """Reshape/fuse weights once (outside jit) into channel-major matrices.

    NOTE: weights here are (3,3,Cin,Cout); if importing from a PyTorch
    checkpoint (Cout,Cin,3,3) permute with .transpose(2,3,1,0) first.
    """
    f32, bf16 = jnp.float32, jnp.bfloat16
    n_c = params["rl_conv1"]["w"].shape[-1]

    def cm(w):  # (3,3,Cin,Cout) -> (Cout, 9*Cin)   (channel-major matmul LHS)
        k0, k1, ci, co = w.shape
        return w.reshape(k0 * k1 * ci, co).T

    # First conv: zero-pad input channels 41 -> multiple of 16 (48).
    w1 = params["lv_conv1"]["w"]
    c_in = w1.shape[2]
    c_pad = ((c_in + 15) // 16) * 16
    w1 = jnp.pad(w1, ((0, 0), (0, 0), (0, c_pad - c_in), (0, 0)))
    lv1_w = cm(w1).astype(bf16)                                   # (n_c, 9*c_pad)
    lv1_b = params["lv_conv1"]["b"].reshape(n_c, 1).astype(f32)

    # All 16->16 convs stacked: lv_blocks, trunk, rl_conv1, rl_convh.
    std = []
    for blk in params["lv_blocks"]:
        std += [blk["conv1"], blk["conv2"]]
    for blk in params["trunk"]:
        std += [blk["conv1"], blk["conv2"]]
    std += [params["rl_conv1"], params["rl_convh"]]
    std_w = jnp.stack([cm(c["w"]) for c in std]).astype(bf16)     # (n_std, n_c, 9*n_c)
    std_b = jnp.stack([c["b"].reshape(n_c, 1) for c in std]).astype(f32)

    # Three head convs fused along output channels (same input `feat`).
    head_w = cm(jnp.concatenate(
        [params["rl_head_o"]["w"], params["rl_head_dl"]["w"],
         params["rl_head_dr"]["w"]], axis=-1)).astype(bf16)        # (3*n_c, 9*n_c)
    head_b = jnp.concatenate(
        [params["rl_head_o"]["b"], params["rl_head_dl"]["b"],
         params["rl_head_dr"]["b"]]).reshape(3 * n_c, 1).astype(f32)

    # Three output convs fused block-diagonally (each head feeds its own conv).
    co = params["rl_conv_o"]["w"].shape[-1]                        # scale*scale*3
    wbig = jnp.zeros((3, 3, 3 * n_c, 3 * co), f32)
    wbig = wbig.at[:, :, 0:n_c, 0:co].set(params["rl_conv_o"]["w"])
    wbig = wbig.at[:, :, n_c:2 * n_c, co:2 * co].set(params["rl_conv_dl"]["w"])
    wbig = wbig.at[:, :, 2 * n_c:3 * n_c, 2 * co:3 * co].set(params["rl_conv_dr"]["w"])
    out_w = cm(wbig).astype(bf16)                                  # (3*co, 27*n_c)
    out_b = jnp.concatenate(
        [params["rl_conv_o"]["b"], params["rl_conv_dl"]["b"],
         params["rl_conv_dr"]["b"]]).reshape(3 * co, 1).astype(f32)

    return {"lv1_w": lv1_w, "lv1_b": lv1_b, "std_w": std_w, "std_b": std_b,
            "head_w": head_w, "head_b": head_b, "out_w": out_w, "out_b": out_b}


# ----------------------------------------------------------------------------
# Forward pass (matches neuro.forward); NCHW in / NCHW out.
# ----------------------------------------------------------------------------
def neuro_forward(packed, x, dif_left_mask_HV, dif_left_mask_LV,
                  dif_right_mask_HV, dif_right_mask_LV, h, h_):
    B, _, H, W = x.shape
    n_c = h.shape[1]
    HW = H * W
    flat = lambda a: a.reshape(a.shape[0], a.shape[1], HW)

    # Channel concat stays in NCHW (contiguous copy, no transposes): flattened
    # NCHW is exactly the channel-major (C, HW) layout the kernel works in.
    cat_lv = jnp.concatenate(
        [flat(x), flat(dif_left_mask_LV), flat(dif_right_mask_LV), flat(h), flat(h_)], axis=1)
    cat_hv = jnp.concatenate(
        [flat(x), flat(dif_left_mask_HV), flat(dif_right_mask_HV), flat(h), flat(h_)], axis=1)

    c_in = cat_lv.shape[1]
    c_pad = packed["lv1_w"].shape[1] // 9     # 41 -> 48 (weights zero-padded to match)
    if c_pad > c_in:
        pad = ((0, 0), (0, c_pad - c_in), (0, 0))
        cat_lv = jnp.pad(cat_lv, pad)
        cat_hv = jnp.pad(cat_hv, pad)

    big, feat = _fused_neuro(packed, cat_lv, cat_hv, H, W)   # (B,144,HW), (B,n_c,HW)

    co = big.shape[1] // 3
    big = big.reshape(B, 3 * co, H, W)                       # channel-major == NCHW
    x_o = big[:, 0:co]
    x_o_dl = big[:, co:2 * co]
    x_o_dr = big[:, 2 * co:3 * co]
    x_h = feat.reshape(B, n_c, H, W)
    return x_o, x_o_dl, x_o_dr, x_h


# ----------------------------------------------------------------------------
# Plain-JAX reference (fp32 convs) used as a sanity check in __main__.
# ----------------------------------------------------------------------------
def _conv_ref(x, w, b, d):
    out = lax.conv_general_dilated(
        x, w, window_strides=(1, 1), padding=((d, d), (d, d)),
        rhs_dilation=(d, d), dimension_numbers=("NCHW", "HWIO", "NCHW"))
    return out + b.reshape(1, -1, 1, 1)


def neuro_reference(params, x, dl_HV, dl_LV, dr_HV, dr_LV, h, h_):
    relu = jax.nn.relu

    def resblock(f, blk, d):
        t = relu(_conv_ref(f, blk["conv1"]["w"], blk["conv1"]["b"], d))
        return f + _conv_ref(t, blk["conv2"]["w"], blk["conv2"]["b"], d)

    def branch(left, right, d):
        f = jnp.concatenate([x, left, right, h, h_], axis=1)
        f = relu(_conv_ref(f, params["lv_conv1"]["w"], params["lv_conv1"]["b"], d))
        for blk in params["lv_blocks"]:
            f = resblock(f, blk, d)
        return f

    f = branch(dl_LV, dr_LV, 1) + branch(dl_HV, dr_HV, 2)
    for blk in params["trunk"]:
        f = resblock(f, blk, 1)
    t = relu(_conv_ref(f, params["rl_conv1"]["w"], params["rl_conv1"]["b"], 1))
    feat = f + _conv_ref(t, params["rl_convh"]["w"], params["rl_convh"]["b"], 1)

    def head_out(hname, oname):
        hh = relu(_conv_ref(feat, params[hname]["w"], params[hname]["b"], 1))
        return _conv_ref(hh, params[oname]["w"], params[oname]["b"], 1)

    return (head_out("rl_head_o", "rl_conv_o"),
            head_out("rl_head_dl", "rl_conv_dl"),
            head_out("rl_head_dr", "rl_conv_dr"),
            feat)


# ----------------------------------------------------------------------------
if __name__ == "__main__":
    n_c, n_b, scale = 16, 4, 4
    B, H, W = 2, 16, 16

    root = jax.random.PRNGKey(0)
    pkey, dkey = jax.random.split(root)
    params = init_params(pkey, n_c, n_b)
    packed = pack_params(params)          # one-time weight reshape / fusion

    ks = jax.random.split(dkey, 7)
    s3 = (B, 3, H, W)
    x = jax.random.normal(ks[0], s3, jnp.float32)
    dl_HV = jax.random.normal(ks[1], s3, jnp.float32)
    dl_LV = jax.random.normal(ks[2], s3, jnp.float32)
    dr_HV = jax.random.normal(ks[3], s3, jnp.float32)
    dr_LV = jax.random.normal(ks[4], s3, jnp.float32)
    h = jax.random.normal(ks[5], (B, n_c, H, W), jnp.float32)
    h_ = jax.random.normal(ks[6], (B, n_c, H, W), jnp.float32)

    fwd = jax.jit(neuro_forward)
    outs = jax.block_until_ready(
        fwd(packed, x, dl_HV, dl_LV, dr_HV, dr_LV, h, h_))
    x_o, x_o_dl, x_o_dr, x_h = outs

    assert x_o.shape == (B, scale * scale * 3, H, W)
    assert x_o_dl.shape == (B, scale * scale * 3, H, W)
    assert x_o_dr.shape == (B, scale * scale * 3, H, W)
    assert x_h.shape == (B, n_c, H, W)

    # Sanity check vs the plain-JAX reference (kernel uses bf16 MXU products
    # with f32 accumulation, so a generous tolerance is applied).
    refs = jax.jit(neuro_reference)(params, x, dl_HV, dl_LV, dr_HV, dr_LV, h, h_)
    for got, ref in zip(outs, refs):
        err = float(jnp.max(jnp.abs(got - ref)))
        bound = 1e-2 + 5e-2 * float(jnp.max(jnp.abs(ref)))
        assert err <= bound, f"mismatch: max err {err} > {bound}"

    print("KERNEL_OK")
</pallas_src>

<mosaic_0001>
module attributes {stable_mosaic.version = 11 : i64} {
  func.func @kernel(%arg0: i32, %arg1: memref<1x48x256xf32, #tpu.memory_space<vmem>>, %arg2: memref<1x48x256xf32, #tpu.memory_space<vmem>>, %arg3: memref<16x432xbf16, #tpu.memory_space<vmem>>, %arg4: memref<16x1xf32, #tpu.memory_space<vmem>>, %arg5: memref<10x16x144xbf16, #tpu.memory_space<vmem>>, %arg6: memref<10x16x1xf32, #tpu.memory_space<vmem>>, %arg7: memref<48x144xbf16, #tpu.memory_space<vmem>>, %arg8: memref<48x1xf32, #tpu.memory_space<vmem>>, %arg9: memref<144x432xbf16, #tpu.memory_space<vmem>>, %arg10: memref<144x1xf32, #tpu.memory_space<vmem>>, %arg11: memref<1x144x256xf32, #tpu.memory_space<vmem>>, %arg12: memref<1x16x256xf32, #tpu.memory_space<vmem>>) attributes {dimension_semantics = [#tpu.dimension_semantics<parallel>], iteration_bounds = array<i64: 2>, scalar_prefetch = 0 : i64, scratch_operands = 0 : i64, tpu.core_type = #tpu.core_type<tc>, window_params = [{transform_indices = @transform_0, window_bounds = array<i64: 1, 48, 256>}, {transform_indices = @transform_1, window_bounds = array<i64: 1, 48, 256>}, {pipeline_mode = #tpu.pipeline_mode<synchronous>, transform_indices = @transform_2, window_bounds = array<i64: 16, 432>}, {pipeline_mode = #tpu.pipeline_mode<synchronous>, transform_indices = @transform_3, window_bounds = array<i64: 16, 1>}, {pipeline_mode = #tpu.pipeline_mode<synchronous>, transform_indices = @transform_4, window_bounds = array<i64: 10, 16, 144>}, {pipeline_mode = #tpu.pipeline_mode<synchronous>, transform_indices = @transform_5, window_bounds = array<i64: 10, 16, 1>}, {pipeline_mode = #tpu.pipeline_mode<synchronous>, transform_indices = @transform_6, window_bounds = array<i64: 48, 144>}, {pipeline_mode = #tpu.pipeline_mode<synchronous>, transform_indices = @transform_7, window_bounds = array<i64: 48, 1>}, {pipeline_mode = #tpu.pipeline_mode<synchronous>, transform_indices = @transform_8, window_bounds = array<i64: 144, 432>}, {pipeline_mode = #tpu.pipeline_mode<synchronous>, transform_indices = @transform_9, window_bounds = array<i64: 144, 1>}, {transform_indices = @transform_10, window_bounds = array<i64: 1, 144, 256>}, {transform_indices = @transform_11, window_bounds = array<i64: 1, 16, 256>}]} {
    %0 = tpu.iota {dimensions = array<i32: 1>} : vector<1x256xi32>
    %c15_i32 = arith.constant 15 : i32
    %1 = vector.broadcast %c15_i32 : i32 to vector<1x256xi32>
    %2 = arith.andi %0, %1 : vector<1x256xi32>
    %c15_i32_0 = arith.constant 15 : i32
    %3 = vector.broadcast %c15_i32_0 : i32 to vector<1x256xi32>
    %4 = arith.cmpi slt, %2, %3 : vector<1x256xi32>
    %5 = arith.extui %4 : vector<1x256xi1> to vector<1x256xi32>
    %6 = arith.sitofp %5 : vector<1x256xi32> to vector<1x256xf32>
    %7 = arith.truncf %6 : vector<1x256xf32> to vector<1x256xbf16>
    %c1_i32 = arith.constant 1 : i32
    %8 = vector.broadcast %c1_i32 : i32 to vector<1x256xi32>
    %9 = arith.cmpi sge, %2, %8 : vector<1x256xi32>
    %10 = arith.extui %9 : vector<1x256xi1> to vector<1x256xi32>
    %11 = arith.sitofp %10 : vector<1x256xi32> to vector<1x256xf32>
    %12 = arith.truncf %11 : vector<1x256xf32> to vector<1x256xbf16>
    %c14_i32 = arith.constant 14 : i32
    %13 = vector.broadcast %c14_i32 : i32 to vector<1x256xi32>
    %14 = arith.cmpi slt, %2, %13 : vector<1x256xi32>
    %15 = arith.extui %14 : vector<1x256xi1> to vector<1x256xi32>
    %16 = arith.sitofp %15 : vector<1x256xi32> to vector<1x256xf32>
    %17 = arith.truncf %16 : vector<1x256xf32> to vector<1x256xbf16>
    %c2_i32 = arith.constant 2 : i32
    %18 = vector.broadcast %c2_i32 : i32 to vector<1x256xi32>
    %19 = arith.cmpi sge, %2, %18 : vector<1x256xi32>
    %20 = arith.extui %19 : vector<1x256xi1> to vector<1x256xi32>
    %21 = arith.sitofp %20 : vector<1x256xi32> to vector<1x256xf32>
    %22 = arith.truncf %21 : vector<1x256xf32> to vector<1x256xbf16>
    %c0 = arith.constant 0 : index
    %c0_1 = arith.constant 0 : index
    %c0_2 = arith.constant 0 : index
    %23 = vector.load %arg1[%c0, %c0_1, %c0_2] : memref<1x48x256xf32, #tpu.memory_space<vmem>>, vector<1x48x256xf32>
    %24 = vector.shape_cast %23 : vector<1x48x256xf32> to vector<48x256xf32>
    %25 = arith.truncf %24 : vector<48x256xf32> to vector<48x256xbf16>
    %cst = arith.constant 0.000000e+00 : bf16
    %26 = vector.broadcast %cst : bf16 to vector<48x17xbf16>
    %27 = tpu.concatenate %26, %25, %26 in 1 : vector<48x17xbf16>, vector<48x256xbf16>, vector<48x17xbf16> -> vector<48x290xbf16>
    %28 = vector.extract_strided_slice %27 {offsets = [0, 0], sizes = [48, 256], strides = [1, 1]} : vector<48x290xbf16> to vector<48x256xbf16>
    %29 = vector.broadcast %12 : vector<1x256xbf16> to vector<48x256xbf16>
    %30 = arith.mulf %28, %29 : vector<48x256xbf16>
    %31 = vector.extract_strided_slice %27 {offsets = [0, 1], sizes = [48, 256], strides = [1, 1]} : vector<48x290xbf16> to vector<48x256xbf16>
    %32 = vector.extract_strided_slice %27 {offsets = [0, 2], sizes = [48, 256], strides = [1, 1]} : vector<48x290xbf16> to vector<48x256xbf16>
    %33 = vector.broadcast %7 : vector<1x256xbf16> to vector<48x256xbf16>
    %34 = arith.mulf %32, %33 : vector<48x256xbf16>
    %35 = vector.extract_strided_slice %27 {offsets = [0, 16], sizes = [48, 256], strides = [1, 1]} : vector<48x290xbf16> to vector<48x256xbf16>
    %36 = vector.broadcast %12 : vector<1x256xbf16> to vector<48x256xbf16>
    %37 = arith.mulf %35, %36 : vector<48x256xbf16>
    %38 = vector.extract_strided_slice %27 {offsets = [0, 17], sizes = [48, 256], strides = [1, 1]} : vector<48x290xbf16> to vector<48x256xbf16>
    %39 = vector.extract_strided_slice %27 {offsets = [0, 18], sizes = [48, 256], strides = [1, 1]} : vector<48x290xbf16> to vector<48x256xbf16>
    %40 = vector.broadcast %7 : vector<1x256xbf16> to vector<48x256xbf16>
    %41 = arith.mulf %39, %40 : vector<48x256xbf16>
    %42 = vector.extract_strided_slice %27 {offsets = [0, 32], sizes = [48, 256], strides = [1, 1]} : vector<48x290xbf16> to vector<48x256xbf16>
    %43 = vector.broadcast %12 : vector<1x256xbf16> to vector<48x256xbf16>
    %44 = arith.mulf %42, %43 : vector<48x256xbf16>
    %45 = vector.extract_strided_slice %27 {offsets = [0, 33], sizes = [48, 256], strides = [1, 1]} : vector<48x290xbf16> to vector<48x256xbf16>
    %46 = vector.extract_strided_slice %27 {offsets = [0, 34], sizes = [48, 256], strides = [1, 1]} : vector<48x290xbf16> to vector<48x256xbf16>
    %47 = vector.broadcast %7 : vector<1x256xbf16> to vector<48x256xbf16>
    %48 = arith.mulf %46, %47 : vector<48x256xbf16>
    %49 = tpu.concatenate %30, %31, %34, %37, %38, %41, %44, %45, %48 in 0 : vector<48x256xbf16>, vector<48x256xbf16>, vector<48x256xbf16>, vector<48x256xbf16>, vector<48x256xbf16>, vector<48x256xbf16>, vector<48x256xbf16>, vector<48x256xbf16>, vector<48x256xbf16> -> vector<432x256xbf16>
    %c0_3 = arith.constant 0 : index
    %c0_4 = arith.constant 0 : index
    %c0_5 = arith.constant 0 : index
    %50 = vector.load %arg2[%c0_3, %c0_4, %c0_5] : memref<1x48x256xf32, #tpu.memory_space<vmem>>, vector<1x48x256xf32>
    %51 = vector.shape_cast %50 : vector<1x48x256xf32> to vector<48x256xf32>
    %52 = arith.truncf %51 : vector<48x256xf32> to vector<48x256xbf16>
    %cst_6 = arith.constant 0.000000e+00 : bf16
    %53 = vector.broadcast %cst_6 : bf16 to vector<48x34xbf16>
    %54 = tpu.concatenate %53, %52, %53 in 1 : vector<48x34xbf16>, vector<48x256xbf16>, vector<48x34xbf16> -> vector<48x324xbf16>
    %55 = vector.extract_strided_slice %54 {offsets = [0, 0], sizes = [48, 256], strides = [1, 1]} : vector<48x324xbf16> to vector<48x256xbf16>
    %56 = vector.broadcast %22 : vector<1x256xbf16> to vector<48x256xbf16>
    %57 = arith.mulf %55, %56 : vector<48x256xbf16>
    %58 = vector.extract_strided_slice %54 {offsets = [0, 2], sizes = [48, 256], strides = [1, 1]} : vector<48x324xbf16> to vector<48x256xbf16>
    %59 = vector.extract_strided_slice %54 {offsets = [0, 4], sizes = [48, 256], strides = [1, 1]} : vector<48x324xbf16> to vector<48x256xbf16>
    %60 = vector.broadcast %17 : vector<1x256xbf16> to vector<48x256xbf16>
    %61 = arith.mulf %59, %60 : vector<48x256xbf16>
    %62 = vector.extract_strided_slice %54 {offsets = [0, 32], sizes = [48, 256], strides = [1, 1]} : vector<48x324xbf16> to vector<48x256xbf16>
    %63 = vector.broadcast %22 : vector<1x256xbf16> to vector<48x256xbf16>
    %64 = arith.mulf %62, %63 : vector<48x256xbf16>
    %65 = vector.extract_strided_slice %54 {offsets = [0, 34], sizes = [48, 256], strides = [1, 1]} : vector<48x324xbf16> to vector<48x256xbf16>
    %66 = vector.extract_strided_slice %54 {offsets = [0, 36], sizes = [48, 256], strides = [1, 1]} : vector<48x324xbf16> to vector<48x256xbf16>
    %67 = vector.broadcast %17 : vector<1x256xbf16> to vector<48x256xbf16>
    %68 = arith.mulf %66, %67 : vector<48x256xbf16>
    %69 = vector.extract_strided_slice %54 {offsets = [0, 64], sizes = [48, 256], strides = [1, 1]} : vector<48x324xbf16> to vector<48x256xbf16>
    %70 = vector.broadcast %22 : vector<1x256xbf16> to vector<48x256xbf16>
    %71 = arith.mulf %69, %70 : vector<48x256xbf16>
    %72 = vector.extract_strided_slice %54 {offsets = [0, 66], sizes = [48, 256], strides = [1, 1]} : vector<48x324xbf16> to vector<48x256xbf16>
    %73 = vector.extract_strided_slice %54 {offsets = [0, 68], sizes = [48, 256], strides = [1, 1]} : vector<48x324xbf16> to vector<48x256xbf16>
    %74 = vector.broadcast %17 : vector<1x256xbf16> to vector<48x256xbf16>
    %75 = arith.mulf %73, %74 : vector<48x256xbf16>
    %76 = tpu.concatenate %57, %58, %61, %64, %65, %68, %71, %72, %75 in 0 : vector<48x256xbf16>, vector<48x256xbf16>, vector<48x256xbf16>, vector<48x256xbf16>, vector<48x256xbf16>, vector<48x256xbf16>, vector<48x256xbf16>, vector<48x256xbf16>, vector<48x256xbf16> -> vector<432x256xbf16>
    %77 = tpu.concatenate %49, %76 in 1 : vector<432x256xbf16>, vector<432x256xbf16> -> vector<432x512xbf16>
    %c0_7 = arith.constant 0 : index
    %c0_8 = arith.constant 0 : index
    %78 = vector.load %arg3[%c0_7, %c0_8] : memref<16x432xbf16, #tpu.memory_space<vmem>>, vector<16x432xbf16>
    %cst_9 = arith.constant dense<0.000000e+00> : vector<16x512xf32>
    %79 = tpu.matmul %78, %77, %cst_9 {dimension_numbers = #tpu.dot_dimension_numbers<[1], [0], [0], [1], [0, 0, 1, 1], [], []>} : vector<16x432xbf16>, vector<432x512xbf16>, vector<16x512xf32> -> vector<16x512xf32>
    %c0_10 = arith.constant 0 : index
    %c0_11 = arith.constant 0 : index
    %80 = vector.load %arg4[%c0_10, %c0_11] : memref<16x1xf32, #tpu.memory_space<vmem>>, vector<16x1xf32>
    %81 = vector.broadcast %80 : vector<16x1xf32> to vector<16x512xf32>
    %82 = arith.addf %79, %81 : vector<16x512xf32>
    %cst_12 = arith.constant 0.000000e+00 : f32
    %83 = vector.broadcast %cst_12 : f32 to vector<16x512xf32>
    %84 = arith.maximumf %82, %83 : vector<16x512xf32>
    %c0_13 = arith.constant 0 : index
    %c0_14 = arith.constant 0 : index
    %c0_15 = arith.constant 0 : index
    %85 = vector.load %arg5[%c0_13, %c0_14, %c0_15] : memref<10x16x144xbf16, #tpu.memory_space<vmem>>, vector<1x16x144xbf16>
    %86 = vector.shape_cast %85 : vector<1x16x144xbf16> to vector<16x144xbf16>
    %c0_16 = arith.constant 0 : index
    %c0_17 = arith.constant 0 : index
    %c0_18 = arith.constant 0 : index
    %87 = vector.load %arg6[%c0_16, %c0_17, %c0_18] : memref<10x16x1xf32, #tpu.memory_space<vmem>>, vector<1x16x1xf32>
    %88 = vector.shape_cast %87 : vector<1x16x1xf32> to vector<16x1xf32>
    %89 = vector.extract_strided_slice %84 {offsets = [0, 0], sizes = [16, 256], strides = [1, 1]} : vector<16x512xf32> to vector<16x256xf32>
    %90 = arith.truncf %89 : vector<16x256xf32> to vector<16x256xbf16>
    %cst_19 = arith.constant 0.000000e+00 : bf16
    %91 = vector.broadcast %cst_19 : bf16 to vector<16x17xbf16>
    %92 = tpu.concatenate %91, %90, %91 in 1 : vector<16x17xbf16>, vector<16x256xbf16>, vector<16x17xbf16> -> vector<16x290xbf16>
    %93 = vector.extract_strided_slice %92 {offsets = [0, 0], sizes = [16, 256], strides = [1, 1]} : vector<16x290xbf16> to vector<16x256xbf16>
    %94 = vector.broadcast %12 : vector<1x256xbf16> to vector<16x256xbf16>
    %95 = arith.mulf %93, %94 : vector<16x256xbf16>
    %96 = vector.extract_strided_slice %92 {offsets = [0, 1], sizes = [16, 256], strides = [1, 1]} : vector<16x290xbf16> to vector<16x256xbf16>
    %97 = vector.extract_strided_slice %92 {offsets = [0, 2], sizes = [16, 256], strides = [1, 1]} : vector<16x290xbf16> to vector<16x256xbf16>
    %98 = vector.broadcast %7 : vector<1x256xbf16> to vector<16x256xbf16>
    %99 = arith.mulf %97, %98 : vector<16x256xbf16>
    %100 = vector.extract_strided_slice %92 {offsets = [0, 16], sizes = [16, 256], strides = [1, 1]} : vector<16x290xbf16> to vector<16x256xbf16>
    %101 = vector.broadcast %12 : vector<1x256xbf16> to vector<16x256xbf16>
    %102 = arith.mulf %100, %101 : vector<16x256xbf16>
    %103 = vector.extract_strided_slice %92 {offsets = [0, 17], sizes = [16, 256], strides = [1, 1]} : vector<16x290xbf16> to vector<16x256xbf16>
    %104 = vector.extract_strided_slice %92 {offsets = [0, 18], sizes = [16, 256], strides = [1, 1]} : vector<16x290xbf16> to vector<16x256xbf16>
    %105 = vector.broadcast %7 : vector<1x256xbf16> to vector<16x256xbf16>
    %106 = arith.mulf %104, %105 : vector<16x256xbf16>
    %107 = vector.extract_strided_slice %92 {offsets = [0, 32], sizes = [16, 256], strides = [1, 1]} : vector<16x290xbf16> to vector<16x256xbf16>
    %108 = vector.broadcast %12 : vector<1x256xbf16> to vector<16x256xbf16>
    %109 = arith.mulf %107, %108 : vector<16x256xbf16>
    %110 = vector.extract_strided_slice %92 {offsets = [0, 33], sizes = [16, 256], strides = [1, 1]} : vector<16x290xbf16> to vector<16x256xbf16>
    %111 = vector.extract_strided_slice %92 {offsets = [0, 34], sizes = [16, 256], strides = [1, 1]} : vector<16x290xbf16> to vector<16x256xbf16>
    %112 = vector.broadcast %7 : vector<1x256xbf16> to vector<16x256xbf16>
    %113 = arith.mulf %111, %112 : vector<16x256xbf16>
    %114 = tpu.concatenate %95, %96, %99, %102, %103, %106, %109, %110, %113 in 0 : vector<16x256xbf16>, vector<16x256xbf16>, vector<16x256xbf16>, vector<16x256xbf16>, vector<16x256xbf16>, vector<16x256xbf16>, vector<16x256xbf16>, vector<16x256xbf16>, vector<16x256xbf16> -> vector<144x256xbf16>
    %115 = vector.extract_strided_slice %84 {offsets = [0, 256], sizes = [16, 256], strides = [1, 1]} : vector<16x512xf32> to vector<16x256xf32>
    %116 = arith.truncf %115 : vector<16x256xf32> to vector<16x256xbf16>
    %cst_20 = arith.constant 0.000000e+00 : bf16
    %117 = vector.broadcast %cst_20 : bf16 to vector<16x34xbf16>
    %118 = tpu.concatenate %117, %116, %117 in 1 : vector<16x34xbf16>, vector<16x256xbf16>, vector<16x34xbf16> -> vector<16x324xbf16>
    %119 = vector.extract_strided_slice %118 {offsets = [0, 0], sizes = [16, 256], strides = [1, 1]} : vector<16x324xbf16> to vector<16x256xbf16>
    %120 = vector.broadcast %22 : vector<1x256xbf16> to vector<16x256xbf16>
    %121 = arith.mulf %119, %120 : vector<16x256xbf16>
    %122 = vector.extract_strided_slice %118 {offsets = [0, 2], sizes = [16, 256], strides = [1, 1]} : vector<16x324xbf16> to vector<16x256xbf16>
    %123 = vector.extract_strided_slice %118 {offsets = [0, 4], sizes = [16, 256], strides = [1, 1]} : vector<16x324xbf16> to vector<16x256xbf16>
    %124 = vector.broadcast %17 : vector<1x256xbf16> to vector<16x256xbf16>
    %125 = arith.mulf %123, %124 : vector<16x256xbf16>
    %126 = vector.extract_strided_slice %118 {offsets = [0, 32], sizes = [16, 256], strides = [1, 1]} : vector<16x324xbf16> to vector<16x256xbf16>
    %127 = vector.broadcast %22 : vector<1x256xbf16> to vector<16x256xbf16>
    %128 = arith.mulf %126, %127 : vector<16x256xbf16>
    %129 = vector.extract_strided_slice %118 {offsets = [0, 34], sizes = [16, 256], strides = [1, 1]} : vector<16x324xbf16> to vector<16x256xbf16>
    %130 = vector.extract_strided_slice %118 {offsets = [0, 36], sizes = [16, 256], strides = [1, 1]} : vector<16x324xbf16> to vector<16x256xbf16>
    %131 = vector.broadcast %17 : vector<1x256xbf16> to vector<16x256xbf16>
    %132 = arith.mulf %130, %131 : vector<16x256xbf16>
    %133 = vector.extract_strided_slice %118 {offsets = [0, 64], sizes = [16, 256], strides = [1, 1]} : vector<16x324xbf16> to vector<16x256xbf16>
    %134 = vector.broadcast %22 : vector<1x256xbf16> to vector<16x256xbf16>
    %135 = arith.mulf %133, %134 : vector<16x256xbf16>
    %136 = vector.extract_strided_slice %118 {offsets = [0, 66], sizes = [16, 256], strides = [1, 1]} : vector<16x324xbf16> to vector<16x256xbf16>
    %137 = vector.extract_strided_slice %118 {offsets = [0, 68], sizes = [16, 256], strides = [1, 1]} : vector<16x324xbf16> to vector<16x256xbf16>
    %138 = vector.broadcast %17 : vector<1x256xbf16> to vector<16x256xbf16>
    %139 = arith.mulf %137, %138 : vector<16x256xbf16>
    %140 = tpu.concatenate %121, %122, %125, %128, %129, %132, %135, %136, %139 in 0 : vector<16x256xbf16>, vector<16x256xbf16>, vector<16x256xbf16>, vector<16x256xbf16>, vector<16x256xbf16>, vector<16x256xbf16>, vector<16x256xbf16>, vector<16x256xbf16>, vector<16x256xbf16> -> vector<144x256xbf16>
    %141 = tpu.concatenate %114, %140 in 1 : vector<144x256xbf16>, vector<144x256xbf16> -> vector<144x512xbf16>
    %cst_21 = arith.constant dense<0.000000e+00> : vector<16x512xf32>
    %142 = tpu.matmul %86, %141, %cst_21 {dimension_numbers = #tpu.dot_dimension_numbers<[1], [0], [0], [1], [0, 0, 1, 1], [], []>} : vector<16x144xbf16>, vector<144x512xbf16>, vector<16x512xf32> -> vector<16x512xf32>
    %143 = vector.broadcast %88 : vector<16x1xf32> to vector<16x512xf32>
    %144 = arith.addf %142, %143 : vector<16x512xf32>
    %cst_22 = arith.constant 0.000000e+00 : f32
    %145 = vector.broadcast %cst_22 : f32 to vector<16x512xf32>
    %146 = arith.maximumf %144, %145 : vector<16x512xf32>
    %c1 = arith.constant 1 : index
    %c0_23 = arith.constant 0 : index
    %c0_24 = arith.constant 0 : index
    %147 = vector.load %arg5[%c1, %c0_23, %c0_24] : memref<10x16x144xbf16, #tpu.memory_space<vmem>>, vector<1x16x144xbf16>
    %148 = vector.shape_cast %147 : vector<1x16x144xbf16> to vector<16x144xbf16>
    %c1_25 = arith.constant 1 : index
    %c0_26 = arith.constant 0 : index
    %c0_27 = arith.constant 0 : index
    %149 = vector.load %arg6[%c1_25, %c0_26, %c0_27] : memref<10x16x1xf32, #tpu.memory_space<vmem>>, vector<1x16x1xf32>
    %150 = vector.shape_cast %149 : vector<1x16x1xf32> to vector<16x1xf32>
    %151 = vector.extract_strided_slice %146 {offsets = [0, 0], sizes = [16, 256], strides = [1, 1]} : vector<16x512xf32> to vector<16x256xf32>
    %152 = arith.truncf %151 : vector<16x256xf32> to vector<16x256xbf16>
    %cst_28 = arith.constant 0.000000e+00 : bf16
    %153 = vector.broadcast %cst_28 : bf16 to vector<16x17xbf16>
    %154 = tpu.concatenate %153, %152, %153 in 1 : vector<16x17xbf16>, vector<16x256xbf16>, vector<16x17xbf16> -> vector<16x290xbf16>
    %155 = vector.extract_strided_slice %154 {offsets = [0, 0], sizes = [16, 256], strides = [1, 1]} : vector<16x290xbf16> to vector<16x256xbf16>
    %156 = vector.broadcast %12 : vector<1x256xbf16> to vector<16x256xbf16>
    %157 = arith.mulf %155, %156 : vector<16x256xbf16>
    %158 = vector.extract_strided_slice %154 {offsets = [0, 1], sizes = [16, 256], strides = [1, 1]} : vector<16x290xbf16> to vector<16x256xbf16>
    %159 = vector.extract_strided_slice %154 {offsets = [0, 2], sizes = [16, 256], strides = [1, 1]} : vector<16x290xbf16> to vector<16x256xbf16>
    %160 = vector.broadcast %7 : vector<1x256xbf16> to vector<16x256xbf16>
    %161 = arith.mulf %159, %160 : vector<16x256xbf16>
    %162 = vector.extract_strided_slice %154 {offsets = [0, 16], sizes = [16, 256], strides = [1, 1]} : vector<16x290xbf16> to vector<16x256xbf16>
    %163 = vector.broadcast %12 : vector<1x256xbf16> to vector<16x256xbf16>
    %164 = arith.mulf %162, %163 : vector<16x256xbf16>
    %165 = vector.extract_strided_slice %154 {offsets = [0, 17], sizes = [16, 256], strides = [1, 1]} : vector<16x290xbf16> to vector<16x256xbf16>
    %166 = vector.extract_strided_slice %154 {offsets = [0, 18], sizes = [16, 256], strides = [1, 1]} : vector<16x290xbf16> to vector<16x256xbf16>
    %167 = vector.broadcast %7 : vector<1x256xbf16> to vector<16x256xbf16>
    %168 = arith.mulf %166, %167 : vector<16x256xbf16>
    %169 = vector.extract_strided_slice %154 {offsets = [0, 32], sizes = [16, 256], strides = [1, 1]} : vector<16x290xbf16> to vector<16x256xbf16>
    %170 = vector.broadcast %12 : vector<1x256xbf16> to vector<16x256xbf16>
    %171 = arith.mulf %169, %170 : vector<16x256xbf16>
    %172 = vector.extract_strided_slice %154 {offsets = [0, 33], sizes = [16, 256], strides = [1, 1]} : vector<16x290xbf16> to vector<16x256xbf16>
    %173 = vector.extract_strided_slice %154 {offsets = [0, 34], sizes = [16, 256], strides = [1, 1]} : vector<16x290xbf16> to vector<16x256xbf16>
    %174 = vector.broadcast %7 : vector<1x256xbf16> to vector<16x256xbf16>
    %175 = arith.mulf %173, %174 : vector<16x256xbf16>
    %176 = tpu.concatenate %157, %158, %161, %164, %165, %168, %171, %172, %175 in 0 : vector<16x256xbf16>, vector<16x256xbf16>, vector<16x256xbf16>, vector<16x256xbf16>, vector<16x256xbf16>, vector<16x256xbf16>, vector<16x256xbf16>, vector<16x256xbf16>, vector<16x256xbf16> -> vector<144x256xbf16>
    %177 = vector.extract_strided_slice %146 {offsets = [0, 256], sizes = [16, 256], strides = [1, 1]} : vector<16x512xf32> to vector<16x256xf32>
    %178 = arith.truncf %177 : vector<16x256xf32> to vector<16x256xbf16>
    %cst_29 = arith.constant 0.000000e+00 : bf16
    %179 = vector.broadcast %cst_29 : bf16 to vector<16x34xbf16>
    %180 = tpu.concatenate %179, %178, %179 in 1 : vector<16x34xbf16>, vector<16x256xbf16>, vector<16x34xbf16> -> vector<16x324xbf16>
    %181 = vector.extract_strided_slice %180 {offsets = [0, 0], sizes = [16, 256], strides = [1, 1]} : vector<16x324xbf16> to vector<16x256xbf16>
    %182 = vector.broadcast %22 : vector<1x256xbf16> to vector<16x256xbf16>
    %183 = arith.mulf %181, %182 : vector<16x256xbf16>
    %184 = vector.extract_strided_slice %180 {offsets = [0, 2], sizes = [16, 256], strides = [1, 1]} : vector<16x324xbf16> to vector<16x256xbf16>
    %185 = vector.extract_strided_slice %180 {offsets = [0, 4], sizes = [16, 256], strides = [1, 1]} : vector<16x324xbf16> to vector<16x256xbf16>
    %186 = vector.broadcast %17 : vector<1x256xbf16> to vector<16x256xbf16>
    %187 = arith.mulf %185, %186 : vector<16x256xbf16>
    %188 = vector.extract_strided_slice %180 {offsets = [0, 32], sizes = [16, 256], strides = [1, 1]} : vector<16x324xbf16> to vector<16x256xbf16>
    %189 = vector.broadcast %22 : vector<1x256xbf16> to vector<16x256xbf16>
    %190 = arith.mulf %188, %189 : vector<16x256xbf16>
    %191 = vector.extract_strided_slice %180 {offsets = [0, 34], sizes = [16, 256], strides = [1, 1]} : vector<16x324xbf16> to vector<16x256xbf16>
    %192 = vector.extract_strided_slice %180 {offsets = [0, 36], sizes = [16, 256], strides = [1, 1]} : vector<16x324xbf16> to vector<16x256xbf16>
    %193 = vector.broadcast %17 : vector<1x256xbf16> to vector<16x256xbf16>
    %194 = arith.mulf %192, %193 : vector<16x256xbf16>
    %195 = vector.extract_strided_slice %180 {offsets = [0, 64], sizes = [16, 256], strides = [1, 1]} : vector<16x324xbf16> to vector<16x256xbf16>
    %196 = vector.broadcast %22 : vector<1x256xbf16> to vector<16x256xbf16>
    %197 = arith.mulf %195, %196 : vector<16x256xbf16>
    %198 = vector.extract_strided_slice %180 {offsets = [0, 66], sizes = [16, 256], strides = [1, 1]} : vector<16x324xbf16> to vector<16x256xbf16>
    %199 = vector.extract_strided_slice %180 {offsets = [0, 68], sizes = [16, 256], strides = [1, 1]} : vector<16x324xbf16> to vector<16x256xbf16>
    %200 = vector.broadcast %17 : vector<1x256xbf16> to vector<16x256xbf16>
    %201 = arith.mulf %199, %200 : vector<16x256xbf16>
    %202 = tpu.concatenate %183, %184, %187, %190, %191, %194, %197, %198, %201 in 0 : vector<16x256xbf16>, vector<16x256xbf16>, vector<16x256xbf16>, vector<16x256xbf16>, vector<16x256xbf16>, vector<16x256xbf16>, vector<16x256xbf16>, vector<16x256xbf16>, vector<16x256xbf16> -> vector<144x256xbf16>
    %203 = tpu.concatenate %176, %202 in 1 : vector<144x256xbf16>, vector<144x256xbf16> -> vector<144x512xbf16>
    %cst_30 = arith.constant dense<0.000000e+00> : vector<16x512xf32>
    %204 = tpu.matmul %148, %203, %cst_30 {dimension_numbers = #tpu.dot_dimension_numbers<[1], [0], [0], [1], [0, 0, 1, 1], [], []>} : vector<16x144xbf16>, vector<144x512xbf16>, vector<16x512xf32> -> vector<16x512xf32>
    %205 = vector.broadcast %150 : vector<16x1xf32> to vector<16x512xf32>
    %206 = arith.addf %204, %205 : vector<16x512xf32>
    %207 = arith.addf %206, %84 : vector<16x512xf32>
    %c2 = arith.constant 2 : index
    %c0_31 = arith.constant 0 : index
    %c0_32 = arith.constant 0 : index
    %208 = vector.load %arg5[%c2, %c0_31, %c0_32] : memref<10x16x144xbf16, #tpu.memory_space<vmem>>, vector<1x16x144xbf16>
    %209 = vector.shape_cast %208 : vector<1x16x144xbf16> to vector<16x144xbf16>
    %c2_33 = arith.constant 2 : index
    %c0_34 = arith.constant 0 : index
    %c0_35 = arith.constant 0 : index
    %210 = vector.load %arg6[%c2_33, %c0_34, %c0_35] : memref<10x16x1xf32, #tpu.memory_space<vmem>>, vector<1x16x1xf32>
    %211 = vector.shape_cast %210 : vector<1x16x1xf32> to vector<16x1xf32>
    %212 = vector.extract_strided_slice %207 {offsets = [0, 0], sizes = [16, 256], strides = [1, 1]} : vector<16x512xf32> to vector<16x256xf32>
    %213 = arith.truncf %212 : vector<16x256xf32> to vector<16x256xbf16>
    %cst_36 = arith.constant 0.000000e+00 : bf16
    %214 = vector.broadcast %cst_36 : bf16 to vector<16x17xbf16>
    %215 = tpu.concatenate %214, %213, %214 in 1 : vector<16x17xbf16>, vector<16x256xbf16>, vector<16x17xbf16> -> vector<16x290xbf16>
    %216 = vector.extract_strided_slice %215 {offsets = [0, 0], sizes = [16, 256], strides = [1, 1]} : vector<16x290xbf16> to vector<16x256xbf16>
    %217 = vector.broadcast %12 : vector<1x256xbf16> to vector<16x256xbf16>
    %218 = arith.mulf %216, %217 : vector<16x256xbf16>
    %219 = vector.extract_strided_slice %215 {offsets = [0, 1], sizes = [16, 256], strides = [1, 1]} : vector<16x290xbf16> to vector<16x256xbf16>
    %220 = vector.extract_strided_slice %215 {offsets = [0, 2], sizes = [16, 256], strides = [1, 1]} : vector<16x290xbf16> to vector<16x256xbf16>
    %221 = vector.broadcast %7 : vector<1x256xbf16> to vector<16x256xbf16>
    %222 = arith.mulf %220, %221 : vector<16x256xbf16>
    %223 = vector.extract_strided_slice %215 {offsets = [0, 16], sizes = [16, 256], strides = [1, 1]} : vector<16x290xbf16> to vector<16x256xbf16>
    %224 = vector.broadcast %12 : vector<1x256xbf16> to vector<16x256xbf16>
    %225 = arith.mulf %223, %224 : vector<16x256xbf16>
    %226 = vector.extract_strided_slice %215 {offsets = [0, 17], sizes = [16, 256], strides = [1, 1]} : vector<16x290xbf16> to vector<16x256xbf16>
    %227 = vector.extract_strided_slice %215 {offsets = [0, 18], sizes = [16, 256], strides = [1, 1]} : vector<16x290xbf16> to vector<16x256xbf16>
    %228 = vector.broadcast %7 : vector<1x256xbf16> to vector<16x256xbf16>
    %229 = arith.mulf %227, %228 : vector<16x256xbf16>
    %230 = vector.extract_strided_slice %215 {offsets = [0, 32], sizes = [16, 256], strides = [1, 1]} : vector<16x290xbf16> to vector<16x256xbf16>
    %231 = vector.broadcast %12 : vector<1x256xbf16> to vector<16x256xbf16>
    %232 = arith.mulf %230, %231 : vector<16x256xbf16>
    %233 = vector.extract_strided_slice %215 {offsets = [0, 33], sizes = [16, 256], strides = [1, 1]} : vector<16x290xbf16> to vector<16x256xbf16>
    %234 = vector.extract_strided_slice %215 {offsets = [0, 34], sizes = [16, 256], strides = [1, 1]} : vector<16x290xbf16> to vector<16x256xbf16>
    %235 = vector.broadcast %7 : vector<1x256xbf16> to vector<16x256xbf16>
    %236 = arith.mulf %234, %235 : vector<16x256xbf16>
    %237 = tpu.concatenate %218, %219, %222, %225, %226, %229, %232, %233, %236 in 0 : vector<16x256xbf16>, vector<16x256xbf16>, vector<16x256xbf16>, vector<16x256xbf16>, vector<16x256xbf16>, vector<16x256xbf16>, vector<16x256xbf16>, vector<16x256xbf16>, vector<16x256xbf16> -> vector<144x256xbf16>
    %238 = vector.extract_strided_slice %207 {offsets = [0, 256], sizes = [16, 256], strides = [1, 1]} : vector<16x512xf32> to vector<16x256xf32>
    %239 = arith.truncf %238 : vector<16x256xf32> to vector<16x256xbf16>
    %cst_37 = arith.constant 0.000000e+00 : bf16
    %240 = vector.broadcast %cst_37 : bf16 to vector<16x34xbf16>
    %241 = tpu.concatenate %240, %239, %240 in 1 : vector<16x34xbf16>, vector<16x256xbf16>, vector<16x34xbf16> -> vector<16x324xbf16>
    %242 = vector.extract_strided_slice %241 {offsets = [0, 0], sizes = [16, 256], strides = [1, 1]} : vector<16x324xbf16> to vector<16x256xbf16>
    %243 = vector.broadcast %22 : vector<1x256xbf16> to vector<16x256xbf16>
    %244 = arith.mulf %242, %243 : vector<16x256xbf16>
    %245 = vector.extract_strided_slice %241 {offsets = [0, 2], sizes = [16, 256], strides = [1, 1]} : vector<16x324xbf16> to vector<16x256xbf16>
    %246 = vector.extract_strided_slice %241 {offsets = [0, 4], sizes = [16, 256], strides = [1, 1]} : vector<16x324xbf16> to vector<16x256xbf16>
    %247 = vector.broadcast %17 : vector<1x256xbf16> to vector<16x256xbf16>
    %248 = arith.mulf %246, %247 : vector<16x256xbf16>
    %249 = vector.extract_strided_slice %241 {offsets = [0, 32], sizes = [16, 256], strides = [1, 1]} : vector<16x324xbf16> to vector<16x256xbf16>
    %250 = vector.broadcast %22 : vector<1x256xbf16> to vector<16x256xbf16>
    %251 = arith.mulf %249, %250 : vector<16x256xbf16>
    %252 = vector.extract_strided_slice %241 {offsets = [0, 34], sizes = [16, 256], strides = [1, 1]} : vector<16x324xbf16> to vector<16x256xbf16>
    %253 = vector.extract_strided_slice %241 {offsets = [0, 36], sizes = [16, 256], strides = [1, 1]} : vector<16x324xbf16> to vector<16x256xbf16>
    %254 = vector.broadcast %17 : vector<1x256xbf16> to vector<16x256xbf16>
    %255 = arith.mulf %253, %254 : vector<16x256xbf16>
    %256 = vector.extract_strided_slice %241 {offsets = [0, 64], sizes = [16, 256], strides = [1, 1]} : vector<16x324xbf16> to vector<16x256xbf16>
    %257 = vector.broadcast %22 : vector<1x256xbf16> to vector<16x256xbf16>
    %258 = arith.mulf %256, %257 : vector<16x256xbf16>
    %259 = vector.extract_strided_slice %241 {offsets = [0, 66], sizes = [16, 256], strides = [1, 1]} : vector<16x324xbf16> to vector<16x256xbf16>
    %260 = vector.extract_strided_slice %241 {offsets = [0, 68], sizes = [16, 256], strides = [1, 1]} : vector<16x324xbf16> to vector<16x256xbf16>
    %261 = vector.broadcast %17 : vector<1x256xbf16> to vector<16x256xbf16>
    %262 = arith.mulf %260, %261 : vector<16x256xbf16>
    %263 = tpu.concatenate %244, %245, %248, %251, %252, %255, %258, %259, %262 in 0 : vector<16x256xbf16>, vector<16x256xbf16>, vector<16x256xbf16>, vector<16x256xbf16>, vector<16x256xbf16>, vector<16x256xbf16>, vector<16x256xbf16>, vector<16x256xbf16>, vector<16x256xbf16> -> vector<144x256xbf16>
    %264 = tpu.concatenate %237, %263 in 1 : vector<144x256xbf16>, vector<144x256xbf16> -> vector<144x512xbf16>
    %cst_38 = arith.constant dense<0.000000e+00> : vector<16x512xf32>
    %265 = tpu.matmul %209, %264, %cst_38 {dimension_numbers = #tpu.dot_dimension_numbers<[1], [0], [0], [1], [0, 0, 1, 1], [], []>} : vector<16x144xbf16>, vector<144x512xbf16>, vector<16x512xf32> -> vector<16x512xf32>
    %266 = vector.broadcast %211 : vector<16x1xf32> to vector<16x512xf32>
    %267 = arith.addf %265, %266 : vector<16x512xf32>
    %cst_39 = arith.constant 0.000000e+00 : f32
    %268 = vector.broadcast %cst_39 : f32 to vector<16x512xf32>
    %269 = arith.maximumf %267, %268 : vector<16x512xf32>
    %c3 = arith.constant 3 : index
    %c0_40 = arith.constant 0 : index
    %c0_41 = arith.constant 0 : index
    %270 = vector.load %arg5[%c3, %c0_40, %c0_41] : memref<10x16x144xbf16, #tpu.memory_space<vmem>>, vector<1x16x144xbf16>
    %271 = vector.shape_cast %270 : vector<1x16x144xbf16> to vector<16x144xbf16>
    %c3_42 = arith.constant 3 : index
    %c0_43 = arith.constant 0 : index
    %c0_44 = arith.constant 0 : index
    %272 = vector.load %arg6[%c3_42, %c0_43, %c0_44] : memref<10x16x1xf32, #tpu.memory_space<vmem>>, vector<1x16x1xf32>
    %273 = vector.shape_cast %272 : vector<1x16x1xf32> to vector<16x1xf32>
    %274 = vector.extract_strided_slice %269 {offsets = [0, 0], sizes = [16, 256], strides = [1, 1]} : vector<16x512xf32> to vector<16x256xf32>
    %275 = arith.truncf %274 : vector<16x256xf32> to vector<16x256xbf16>
    %cst_45 = arith.constant 0.000000e+00 : bf16
    %276 = vector.broadcast %cst_45 : bf16 to vector<16x17xbf16>
    %277 = tpu.concatenate %276, %275, %276 in 1 : vector<16x17xbf16>, vector<16x256xbf16>, vector<16x17xbf16> -> vector<16x290xbf16>
    %278 = vector.extract_strided_slice %277 {offsets = [0, 0], sizes = [16, 256], strides = [1, 1]} : vector<16x290xbf16> to vector<16x256xbf16>
    %279 = vector.broadcast %12 : vector<1x256xbf16> to vector<16x256xbf16>
    %280 = arith.mulf %278, %279 : vector<16x256xbf16>
    %281 = vector.extract_strided_slice %277 {offsets = [0, 1], sizes = [16, 256], strides = [1, 1]} : vector<16x290xbf16> to vector<16x256xbf16>
    %282 = vector.extract_strided_slice %277 {offsets = [0, 2], sizes = [16, 256], strides = [1, 1]} : vector<16x290xbf16> to vector<16x256xbf16>
    %283 = vector.broadcast %7 : vector<1x256xbf16> to vector<16x256xbf16>
    %284 = arith.mulf %282, %283 : vector<16x256xbf16>
    %285 = vector.extract_strided_slice %277 {offsets = [0, 16], sizes = [16, 256], strides = [1, 1]} : vector<16x290xbf16> to vector<16x256xbf16>
    %286 = vector.broadcast %12 : vector<1x256xbf16> to vector<16x256xbf16>
    %287 = arith.mulf %285, %286 : vector<16x256xbf16>
    %288 = vector.extract_strided_slice %277 {offsets = [0, 17], sizes = [16, 256], strides = [1, 1]} : vector<16x290xbf16> to vector<16x256xbf16>
    %289 = vector.extract_strided_slice %277 {offsets = [0, 18], sizes = [16, 256], strides = [1, 1]} : vector<16x290xbf16> to vector<16x256xbf16>
    %290 = vector.broadcast %7 : vector<1x256xbf16> to vector<16x256xbf16>
    %291 = arith.mulf %289, %290 : vector<16x256xbf16>
    %292 = vector.extract_strided_slice %277 {offsets = [0, 32], sizes = [16, 256], strides = [1, 1]} : vector<16x290xbf16> to vector<16x256xbf16>
    %293 = vector.broadcast %12 : vector<1x256xbf16> to vector<16x256xbf16>
    %294 = arith.mulf %292, %293 : vector<16x256xbf16>
    %295 = vector.extract_strided_slice %277 {offsets = [0, 33], sizes = [16, 256], strides = [1, 1]} : vector<16x290xbf16> to vector<16x256xbf16>
    %296 = vector.extract_strided_slice %277 {offsets = [0, 34], sizes = [16, 256], strides = [1, 1]} : vector<16x290xbf16> to vector<16x256xbf16>
    %297 = vector.broadcast %7 : vector<1x256xbf16> to vector<16x256xbf16>
    %298 = arith.mulf %296, %297 : vector<16x256xbf16>
    %299 = tpu.concatenate %280, %281, %284, %287, %288, %291, %294, %295, %298 in 0 : vector<16x256xbf16>, vector<16x256xbf16>, vector<16x256xbf16>, vector<16x256xbf16>, vector<16x256xbf16>, vector<16x256xbf16>, vector<16x256xbf16>, vector<16x256xbf16>, vector<16x256xbf16> -> vector<144x256xbf16>
    %300 = vector.extract_strided_slice %269 {offsets = [0, 256], sizes = [16, 256], strides = [1, 1]} : vector<16x512xf32> to vector<16x256xf32>
    %301 = arith.truncf %300 : vector<16x256xf32> to vector<16x256xbf16>
    %cst_46 = arith.constant 0.000000e+00 : bf16
    %302 = vector.broadcast %cst_46 : bf16 to vector<16x34xbf16>
    %303 = tpu.concatenate %302, %301, %302 in 1 : vector<16x34xbf16>, vector<16x256xbf16>, vector<16x34xbf16> -> vector<16x324xbf16>
    %304 = vector.extract_strided_slice %303 {offsets = [0, 0], sizes = [16, 256], strides = [1, 1]} : vector<16x324xbf16> to vector<16x256xbf16>
    %305 = vector.broadcast %22 : vector<1x256xbf16> to vector<16x256xbf16>
    %306 = arith.mulf %304, %305 : vector<16x256xbf16>
    %307 = vector.extract_strided_slice %303 {offsets = [0, 2], sizes = [16, 256], strides = [1, 1]} : vector<16x324xbf16> to vector<16x256xbf16>
    %308 = vector.extract_strided_slice %303 {offsets = [0, 4], sizes = [16, 256], strides = [1, 1]} : vector<16x324xbf16> to vector<16x256xbf16>
    %309 = vector.broadcast %17 : vector<1x256xbf16> to vector<16x256xbf16>
    %310 = arith.mulf %308, %309 : vector<16x256xbf16>
    %311 = vector.extract_strided_slice %303 {offsets = [0, 32], sizes = [16, 256], strides = [1, 1]} : vector<16x324xbf16> to vector<16x256xbf16>
    %312 = vector.broadcast %22 : vector<1x256xbf16> to vector<16x256xbf16>
    %313 = arith.mulf %311, %312 : vector<16x256xbf16>
    %314 = vector.extract_strided_slice %303 {offsets = [0, 34], sizes = [16, 256], strides = [1, 1]} : vector<16x324xbf16> to vector<16x256xbf16>
    %315 = vector.extract_strided_slice %303 {offsets = [0, 36], sizes = [16, 256], strides = [1, 1]} : vector<16x324xbf16> to vector<16x256xbf16>
    %316 = vector.broadcast %17 : vector<1x256xbf16> to vector<16x256xbf16>
    %317 = arith.mulf %315, %316 : vector<16x256xbf16>
    %318 = vector.extract_strided_slice %303 {offsets = [0, 64], sizes = [16, 256], strides = [1, 1]} : vector<16x324xbf16> to vector<16x256xbf16>
    %319 = vector.broadcast %22 : vector<1x256xbf16> to vector<16x256xbf16>
    %320 = arith.mulf %318, %319 : vector<16x256xbf16>
    %321 = vector.extract_strided_slice %303 {offsets = [0, 66], sizes = [16, 256], strides = [1, 1]} : vector<16x324xbf16> to vector<16x256xbf16>
    %322 = vector.extract_strided_slice %303 {offsets = [0, 68], sizes = [16, 256], strides = [1, 1]} : vector<16x324xbf16> to vector<16x256xbf16>
    %323 = vector.broadcast %17 : vector<1x256xbf16> to vector<16x256xbf16>
    %324 = arith.mulf %322, %323 : vector<16x256xbf16>
    %325 = tpu.concatenate %306, %307, %310, %313, %314, %317, %320, %321, %324 in 0 : vector<16x256xbf16>, vector<16x256xbf16>, vector<16x256xbf16>, vector<16x256xbf16>, vector<16x256xbf16>, vector<16x256xbf16>, vector<16x256xbf16>, vector<16x256xbf16>, vector<16x256xbf16> -> vector<144x256xbf16>
    %326 = tpu.concatenate %299, %325 in 1 : vector<144x256xbf16>, vector<144x256xbf16> -> vector<144x512xbf16>
    %cst_47 = arith.constant dense<0.000000e+00> : vector<16x512xf32>
    %327 = tpu.matmul %271, %326, %cst_47 {dimension_numbers = #tpu.dot_dimension_numbers<[1], [0], [0], [1], [0, 0, 1, 1], [], []>} : vector<16x144xbf16>, vector<144x512xbf16>, vector<16x512xf32> -> vector<16x512xf32>
    %328 = vector.broadcast %273 : vector<16x1xf32> to vector<16x512xf32>
    %329 = arith.addf %327, %328 : vector<16x512xf32>
    %330 = arith.addf %329, %207 : vector<16x512xf32>
    %331 = vector.extract_strided_slice %330 {offsets = [0, 0], sizes = [16, 256], strides = [1, 1]} : vector<16x512xf32> to vector<16x256xf32>
    %332 = vector.extract_strided_slice %330 {offsets = [0, 256], sizes = [16, 256], strides = [1, 1]} : vector<16x512xf32> to vector<16x256xf32>
    %333 = arith.addf %331, %332 : vector<16x256xf32>
    %c4 = arith.constant 4 : index
    %c0_48 = arith.constant 0 : index
    %c0_49 = arith.constant 0 : index
    %334 = vector.load %arg5[%c4, %c0_48, %c0_49] : memref<10x16x144xbf16, #tpu.memory_space<vmem>>, vector<1x16x144xbf16>
    %335 = vector.shape_cast %334 : vector<1x16x144xbf16> to vector<16x144xbf16>
    %c4_50 = arith.constant 4 : index
    %c0_51 = arith.constant 0 : index
    %c0_52 = arith.constant 0 : index
    %336 = vector.load %arg6[%c4_50, %c0_51, %c0_52] : memref<10x16x1xf32, #tpu.memory_space<vmem>>, vector<1x16x1xf32>
    %337 = vector.shape_cast %336 : vector<1x16x1xf32> to vector<16x1xf32>
    %338 = arith.truncf %333 : vector<16x256xf32> to vector<16x256xbf16>
    %cst_53 = arith.constant 0.000000e+00 : bf16
    %339 = vector.broadcast %cst_53 : bf16 to vector<16x17xbf16>
    %340 = tpu.concatenate %339, %338, %339 in 1 : vector<16x17xbf16>, vector<16x256xbf16>, vector<16x17xbf16> -> vector<16x290xbf16>
    %341 = vector.extract_strided_slice %340 {offsets = [0, 0], sizes = [16, 256], strides = [1, 1]} : vector<16x290xbf16> to vector<16x256xbf16>
    %342 = vector.broadcast %12 : vector<1x256xbf16> to vector<16x256xbf16>
    %343 = arith.mulf %341, %342 : vector<16x256xbf16>
    %344 = vector.extract_strided_slice %340 {offsets = [0, 1], sizes = [16, 256], strides = [1, 1]} : vector<16x290xbf16> to vector<16x256xbf16>
    %345 = vector.extract_strided_slice %340 {offsets = [0, 2], sizes = [16, 256], strides = [1, 1]} : vector<16x290xbf16> to vector<16x256xbf16>
    %346 = vector.broadcast %7 : vector<1x256xbf16> to vector<16x256xbf16>
    %347 = arith.mulf %345, %346 : vector<16x256xbf16>
    %348 = vector.extract_strided_slice %340 {offsets = [0, 16], sizes = [16, 256], strides = [1, 1]} : vector<16x290xbf16> to vector<16x256xbf16>
    %349 = vector.broadcast %12 : vector<1x256xbf16> to vector<16x256xbf16>
    %350 = arith.mulf %348, %349 : vector<16x256xbf16>
    %351 = vector.extract_strided_slice %340 {offsets = [0, 17], sizes = [16, 256], strides = [1, 1]} : vector<16x290xbf16> to vector<16x256xbf16>
    %352 = vector.extract_strided_slice %340 {offsets = [0, 18], sizes = [16, 256], strides = [1, 1]} : vector<16x290xbf16> to vector<16x256xbf16>
    %353 = vector.broadcast %7 : vector<1x256xbf16> to vector<16x256xbf16>
    %354 = arith.mulf %352, %353 : vector<16x256xbf16>
    %355 = vector.extract_strided_slice %340 {offsets = [0, 32], sizes = [16, 256], strides = [1, 1]} : vector<16x290xbf16> to vector<16x256xbf16>
    %356 = vector.broadcast %12 : vector<1x256xbf16> to vector<16x256xbf16>
    %357 = arith.mulf %355, %356 : vector<16x256xbf16>
    %358 = vector.extract_strided_slice %340 {offsets = [0, 33], sizes = [16, 256], strides = [1, 1]} : vector<16x290xbf16> to vector<16x256xbf16>
    %359 = vector.extract_strided_slice %340 {offsets = [0, 34], sizes = [16, 256], strides = [1, 1]} : vector<16x290xbf16> to vector<16x256xbf16>
    %360 = vector.broadcast %7 : vector<1x256xbf16> to vector<16x256xbf16>
    %361 = arith.mulf %359, %360 : vector<16x256xbf16>
    %362 = tpu.concatenate %343, %344, %347, %350, %351, %354, %357, %358, %361 in 0 : vector<16x256xbf16>, vector<16x256xbf16>, vector<16x256xbf16>, vector<16x256xbf16>, vector<16x256xbf16>, vector<16x256xbf16>, vector<16x256xbf16>, vector<16x256xbf16>, vector<16x256xbf16> -> vector<144x256xbf16>
    %cst_54 = arith.constant dense<0.000000e+00> : vector<16x256xf32>
    %363 = tpu.matmul %335, %362, %cst_54 {dimension_numbers = #tpu.dot_dimension_numbers<[1], [0], [0], [1], [0, 0, 1, 1], [], []>} : vector<16x144xbf16>, vector<144x256xbf16>, vector<16x256xf32> -> vector<16x256xf32>
    %364 = vector.broadcast %337 : vector<16x1xf32> to vector<16x256xf32>
    %365 = arith.addf %363, %364 : vector<16x256xf32>
    %cst_55 = arith.constant 0.000000e+00 : f32
    %366 = vector.broadcast %cst_55 : f32 to vector<16x256xf32>
    %367 = arith.maximumf %365, %366 : vector<16x256xf32>
    %c5 = arith.constant 5 : index
    %c0_56 = arith.constant 0 : index
    %c0_57 = arith.constant 0 : index
    %368 = vector.load %arg5[%c5, %c0_56, %c0_57] : memref<10x16x144xbf16, #tpu.memory_space<vmem>>, vector<1x16x144xbf16>
    %369 = vector.shape_cast %368 : vector<1x16x144xbf16> to vector<16x144xbf16>
    %c5_58 = arith.constant 5 : index
    %c0_59 = arith.constant 0 : index
    %c0_60 = arith.constant 0 : index
    %370 = vector.load %arg6[%c5_58, %c0_59, %c0_60] : memref<10x16x1xf32, #tpu.memory_space<vmem>>, vector<1x16x1xf32>
    %371 = vector.shape_cast %370 : vector<1x16x1xf32> to vector<16x1xf32>
    %372 = arith.truncf %367 : vector<16x256xf32> to vector<16x256xbf16>
    %cst_61 = arith.constant 0.000000e+00 : bf16
    %373 = vector.broadcast %cst_61 : bf16 to vector<16x17xbf16>
    %374 = tpu.concatenate %373, %372, %373 in 1 : vector<16x17xbf16>, vector<16x256xbf16>, vector<16x17xbf16> -> vector<16x290xbf16>
    %375 = vector.extract_strided_slice %374 {offsets = [0, 0], sizes = [16, 256], strides = [1, 1]} : vector<16x290xbf16> to vector<16x256xbf16>
    %376 = vector.broadcast %12 : vector<1x256xbf16> to vector<16x256xbf16>
    %377 = arith.mulf %375, %376 : vector<16x256xbf16>
    %378 = vector.extract_strided_slice %374 {offsets = [0, 1], sizes = [16, 256], strides = [1, 1]} : vector<16x290xbf16> to vector<16x256xbf16>
    %379 = vector.extract_strided_slice %374 {offsets = [0, 2], sizes = [16, 256], strides = [1, 1]} : vector<16x290xbf16> to vector<16x256xbf16>
    %380 = vector.broadcast %7 : vector<1x256xbf16> to vector<16x256xbf16>
    %381 = arith.mulf %379, %380 : vector<16x256xbf16>
    %382 = vector.extract_strided_slice %374 {offsets = [0, 16], sizes = [16, 256], strides = [1, 1]} : vector<16x290xbf16> to vector<16x256xbf16>
    %383 = vector.broadcast %12 : vector<1x256xbf16> to vector<16x256xbf16>
    %384 = arith.mulf %382, %383 : vector<16x256xbf16>
    %385 = vector.extract_strided_slice %374 {offsets = [0, 17], sizes = [16, 256], strides = [1, 1]} : vector<16x290xbf16> to vector<16x256xbf16>
    %386 = vector.extract_strided_slice %374 {offsets = [0, 18], sizes = [16, 256], strides = [1, 1]} : vector<16x290xbf16> to vector<16x256xbf16>
    %387 = vector.broadcast %7 : vector<1x256xbf16> to vector<16x256xbf16>
    %388 = arith.mulf %386, %387 : vector<16x256xbf16>
    %389 = vector.extract_strided_slice %374 {offsets = [0, 32], sizes = [16, 256], strides = [1, 1]} : vector<16x290xbf16> to vector<16x256xbf16>
    %390 = vector.broadcast %12 : vector<1x256xbf16> to vector<16x256xbf16>
    %391 = arith.mulf %389, %390 : vector<16x256xbf16>
    %392 = vector.extract_strided_slice %374 {offsets = [0, 33], sizes = [16, 256], strides = [1, 1]} : vector<16x290xbf16> to vector<16x256xbf16>
    %393 = vector.extract_strided_slice %374 {offsets = [0, 34], sizes = [16, 256], strides = [1, 1]} : vector<16x290xbf16> to vector<16x256xbf16>
    %394 = vector.broadcast %7 : vector<1x256xbf16> to vector<16x256xbf16>
    %395 = arith.mulf %393, %394 : vector<16x256xbf16>
    %396 = tpu.concatenate %377, %378, %381, %384, %385, %388, %391, %392, %395 in 0 : vector<16x256xbf16>, vector<16x256xbf16>, vector<16x256xbf16>, vector<16x256xbf16>, vector<16x256xbf16>, vector<16x256xbf16>, vector<16x256xbf16>, vector<16x256xbf16>, vector<16x256xbf16> -> vector<144x256xbf16>
    %cst_62 = arith.constant dense<0.000000e+00> : vector<16x256xf32>
    %397 = tpu.matmul %369, %396, %cst_62 {dimension_numbers = #tpu.dot_dimension_numbers<[1], [0], [0], [1], [0, 0, 1, 1], [], []>} : vector<16x144xbf16>, vector<144x256xbf16>, vector<16x256xf32> -> vector<16x256xf32>
    %398 = vector.broadcast %371 : vector<16x1xf32> to vector<16x256xf32>
    %399 = arith.addf %397, %398 : vector<16x256xf32>
    %400 = arith.addf %399, %333 : vector<16x256xf32>
    %c6 = arith.constant 6 : index
    %c0_63 = arith.constant 0 : index
    %c0_64 = arith.constant 0 : index
    %401 = vector.load %arg5[%c6, %c0_63, %c0_64] : memref<10x16x144xbf16, #tpu.memory_space<vmem>>, vector<1x16x144xbf16>
    %402 = vector.shape_cast %401 : vector<1x16x144xbf16> to vector<16x144xbf16>
    %c6_65 = arith.constant 6 : index
    %c0_66 = arith.constant 0 : index
    %c0_67 = arith.constant 0 : index
    %403 = vector.load %arg6[%c6_65, %c0_66, %c0_67] : memref<10x16x1xf32, #tpu.memory_space<vmem>>, vector<1x16x1xf32>
    %404 = vector.shape_cast %403 : vector<1x16x1xf32> to vector<16x1xf32>
    %405 = arith.truncf %400 : vector<16x256xf32> to vector<16x256xbf16>
    %cst_68 = arith.constant 0.000000e+00 : bf16
    %406 = vector.broadcast %cst_68 : bf16 to vector<16x17xbf16>
    %407 = tpu.concatenate %406, %405, %406 in 1 : vector<16x17xbf16>, vector<16x256xbf16>, vector<16x17xbf16> -> vector<16x290xbf16>
    %408 = vector.extract_strided_slice %407 {offsets = [0, 0], sizes = [16, 256], strides = [1, 1]} : vector<16x290xbf16> to vector<16x256xbf16>
    %409 = vector.broadcast %12 : vector<1x256xbf16> to vector<16x256xbf16>
    %410 = arith.mulf %408, %409 : vector<16x256xbf16>
    %411 = vector.extract_strided_slice %407 {offsets = [0, 1], sizes = [16, 256], strides = [1, 1]} : vector<16x290xbf16> to vector<16x256xbf16>
    %412 = vector.extract_strided_slice %407 {offsets = [0, 2], sizes = [16, 256], strides = [1, 1]} : vector<16x290xbf16> to vector<16x256xbf16>
    %413 = vector.broadcast %7 : vector<1x256xbf16> to vector<16x256xbf16>
    %414 = arith.mulf %412, %413 : vector<16x256xbf16>
    %415 = vector.extract_strided_slice %407 {offsets = [0, 16], sizes = [16, 256], strides = [1, 1]} : vector<16x290xbf16> to vector<16x256xbf16>
    %416 = vector.broadcast %12 : vector<1x256xbf16> to vector<16x256xbf16>
    %417 = arith.mulf %415, %416 : vector<16x256xbf16>
    %418 = vector.extract_strided_slice %407 {offsets = [0, 17], sizes = [16, 256], strides = [1, 1]} : vector<16x290xbf16> to vector<16x256xbf16>
    %419 = vector.extract_strided_slice %407 {offsets = [0, 18], sizes = [16, 256], strides = [1, 1]} : vector<16x290xbf16> to vector<16x256xbf16>
    %420 = vector.broadcast %7 : vector<1x256xbf16> to vector<16x256xbf16>
    %421 = arith.mulf %419, %420 : vector<16x256xbf16>
    %422 = vector.extract_strided_slice %407 {offsets = [0, 32], sizes = [16, 256], strides = [1, 1]} : vector<16x290xbf16> to vector<16x256xbf16>
    %423 = vector.broadcast %12 : vector<1x256xbf16> to vector<16x256xbf16>
    %424 = arith.mulf %422, %423 : vector<16x256xbf16>
    %425 = vector.extract_strided_slice %407 {offsets = [0, 33], sizes = [16, 256], strides = [1, 1]} : vector<16x290xbf16> to vector<16x256xbf16>
    %426 = vector.extract_strided_slice %407 {offsets = [0, 34], sizes = [16, 256], strides = [1, 1]} : vector<16x290xbf16> to vector<16x256xbf16>
    %427 = vector.broadcast %7 : vector<1x256xbf16> to vector<16x256xbf16>
    %428 = arith.mulf %426, %427 : vector<16x256xbf16>
    %429 = tpu.concatenate %410, %411, %414, %417, %418, %421, %424, %425, %428 in 0 : vector<16x256xbf16>, vector<16x256xbf16>, vector<16x256xbf16>, vector<16x256xbf16>, vector<16x256xbf16>, vector<16x256xbf16>, vector<16x256xbf16>, vector<16x256xbf16>, vector<16x256xbf16> -> vector<144x256xbf16>
    %cst_69 = arith.constant dense<0.000000e+00> : vector<16x256xf32>
    %430 = tpu.matmul %402, %429, %cst_69 {dimension_numbers = #tpu.dot_dimension_numbers<[1], [0], [0], [1], [0, 0, 1, 1], [], []>} : vector<16x144xbf16>, vector<144x256xbf16>, vector<16x256xf32> -> vector<16x256xf32>
    %431 = vector.broadcast %404 : vector<16x1xf32> to vector<16x256xf32>
    %432 = arith.addf %430, %431 : vector<16x256xf32>
    %cst_70 = arith.constant 0.000000e+00 : f32
    %433 = vector.broadcast %cst_70 : f32 to vector<16x256xf32>
    %434 = arith.maximumf %432, %433 : vector<16x256xf32>
    %c7 = arith.constant 7 : index
    %c0_71 = arith.constant 0 : index
    %c0_72 = arith.constant 0 : index
    %435 = vector.load %arg5[%c7, %c0_71, %c0_72] : memref<10x16x144xbf16, #tpu.memory_space<vmem>>, vector<1x16x144xbf16>
    %436 = vector.shape_cast %435 : vector<1x16x144xbf16> to vector<16x144xbf16>
    %c7_73 = arith.constant 7 : index
    %c0_74 = arith.constant 0 : index
    %c0_75 = arith.constant 0 : index
    %437 = vector.load %arg6[%c7_73, %c0_74, %c0_75] : memref<10x16x1xf32, #tpu.memory_space<vmem>>, vector<1x16x1xf32>
    %438 = vector.shape_cast %437 : vector<1x16x1xf32> to vector<16x1xf32>
    %439 = arith.truncf %434 : vector<16x256xf32> to vector<16x256xbf16>
    %cst_76 = arith.constant 0.000000e+00 : bf16
    %440 = vector.broadcast %cst_76 : bf16 to vector<16x17xbf16>
    %441 = tpu.concatenate %440, %439, %440 in 1 : vector<16x17xbf16>, vector<16x256xbf16>, vector<16x17xbf16> -> vector<16x290xbf16>
    %442 = vector.extract_strided_slice %441 {offsets = [0, 0], sizes = [16, 256], strides = [1, 1]} : vector<16x290xbf16> to vector<16x256xbf16>
    %443 = vector.broadcast %12 : vector<1x256xbf16> to vector<16x256xbf16>
    %444 = arith.mulf %442, %443 : vector<16x256xbf16>
    %445 = vector.extract_strided_slice %441 {offsets = [0, 1], sizes = [16, 256], strides = [1, 1]} : vector<16x290xbf16> to vector<16x256xbf16>
    %446 = vector.extract_strided_slice %441 {offsets = [0, 2], sizes = [16, 256], strides = [1, 1]} : vector<16x290xbf16> to vector<16x256xbf16>
    %447 = vector.broadcast %7 : vector<1x256xbf16> to vector<16x256xbf16>
    %448 = arith.mulf %446, %447 : vector<16x256xbf16>
    %449 = vector.extract_strided_slice %441 {offsets = [0, 16], sizes = [16, 256], strides = [1, 1]} : vector<16x290xbf16> to vector<16x256xbf16>
    %450 = vector.broadcast %12 : vector<1x256xbf16> to vector<16x256xbf16>
    %451 = arith.mulf %449, %450 : vector<16x256xbf16>
    %452 = vector.extract_strided_slice %441 {offsets = [0, 17], sizes = [16, 256], strides = [1, 1]} : vector<16x290xbf16> to vector<16x256xbf16>
    %453 = vector.extract_strided_slice %441 {offsets = [0, 18], sizes = [16, 256], strides = [1, 1]} : vector<16x290xbf16> to vector<16x256xbf16>
    %454 = vector.broadcast %7 : vector<1x256xbf16> to vector<16x256xbf16>
    %455 = arith.mulf %453, %454 : vector<16x256xbf16>
    %456 = vector.extract_strided_slice %441 {offsets = [0, 32], sizes = [16, 256], strides = [1, 1]} : vector<16x290xbf16> to vector<16x256xbf16>
    %457 = vector.broadcast %12 : vector<1x256xbf16> to vector<16x256xbf16>
    %458 = arith.mulf %456, %457 : vector<16x256xbf16>
    %459 = vector.extract_strided_slice %441 {offsets = [0, 33], sizes = [16, 256], strides = [1, 1]} : vector<16x290xbf16> to vector<16x256xbf16>
    %460 = vector.extract_strided_slice %441 {offsets = [0, 34], sizes = [16, 256], strides = [1, 1]} : vector<16x290xbf16> to vector<16x256xbf16>
    %461 = vector.broadcast %7 : vector<1x256xbf16> to vector<16x256xbf16>
    %462 = arith.mulf %460, %461 : vector<16x256xbf16>
    %463 = tpu.concatenate %444, %445, %448, %451, %452, %455, %458, %459, %462 in 0 : vector<16x256xbf16>, vector<16x256xbf16>, vector<16x256xbf16>, vector<16x256xbf16>, vector<16x256xbf16>, vector<16x256xbf16>, vector<16x256xbf16>, vector<16x256xbf16>, vector<16x256xbf16> -> vector<144x256xbf16>
    %cst_77 = arith.constant dense<0.000000e+00> : vector<16x256xf32>
    %464 = tpu.matmul %436, %463, %cst_77 {dimension_numbers = #tpu.dot_dimension_numbers<[1], [0], [0], [1], [0, 0, 1, 1], [], []>} : vector<16x144xbf16>, vector<144x256xbf16>, vector<16x256xf32> -> vector<16x256xf32>
    %465 = vector.broadcast %438 : vector<16x1xf32> to vector<16x256xf32>
    %466 = arith.addf %464, %465 : vector<16x256xf32>
    %467 = arith.addf %466, %400 : vector<16x256xf32>
    %c8 = arith.constant 8 : index
    %c0_78 = arith.constant 0 : index
    %c0_79 = arith.constant 0 : index
    %468 = vector.load %arg5[%c8, %c0_78, %c0_79] : memref<10x16x144xbf16, #tpu.memory_space<vmem>>, vector<1x16x144xbf16>
    %469 = vector.shape_cast %468 : vector<1x16x144xbf16> to vector<16x144xbf16>
    %c8_80 = arith.constant 8 : index
    %c0_81 = arith.constant 0 : index
    %c0_82 = arith.constant 0 : index
    %470 = vector.load %arg6[%c8_80, %c0_81, %c0_82] : memref<10x16x1xf32, #tpu.memory_space<vmem>>, vector<1x16x1xf32>
    %471 = vector.shape_cast %470 : vector<1x16x1xf32> to vector<16x1xf32>
    %472 = arith.truncf %467 : vector<16x256xf32> to vector<16x256xbf16>
    %cst_83 = arith.constant 0.000000e+00 : bf16
    %473 = vector.broadcast %cst_83 : bf16 to vector<16x17xbf16>
    %474 = tpu.concatenate %473, %472, %473 in 1 : vector<16x17xbf16>, vector<16x256xbf16>, vector<16x17xbf16> -> vector<16x290xbf16>
    %475 = vector.extract_strided_slice %474 {offsets = [0, 0], sizes = [16, 256], strides = [1, 1]} : vector<16x290xbf16> to vector<16x256xbf16>
    %476 = vector.broadcast %12 : vector<1x256xbf16> to vector<16x256xbf16>
    %477 = arith.mulf %475, %476 : vector<16x256xbf16>
    %478 = vector.extract_strided_slice %474 {offsets = [0, 1], sizes = [16, 256], strides = [1, 1]} : vector<16x290xbf16> to vector<16x256xbf16>
    %479 = vector.extract_strided_slice %474 {offsets = [0, 2], sizes = [16, 256], strides = [1, 1]} : vector<16x290xbf16> to vector<16x256xbf16>
    %480 = vector.broadcast %7 : vector<1x256xbf16> to vector<16x256xbf16>
    %481 = arith.mulf %479, %480 : vector<16x256xbf16>
    %482 = vector.extract_strided_slice %474 {offsets = [0, 16], sizes = [16, 256], strides = [1, 1]} : vector<16x290xbf16> to vector<16x256xbf16>
    %483 = vector.broadcast %12 : vector<1x256xbf16> to vector<16x256xbf16>
    %484 = arith.mulf %482, %483 : vector<16x256xbf16>
    %485 = vector.extract_strided_slice %474 {offsets = [0, 17], sizes = [16, 256], strides = [1, 1]} : vector<16x290xbf16> to vector<16x256xbf16>
    %486 = vector.extract_strided_slice %474 {offsets = [0, 18], sizes = [16, 256], strides = [1, 1]} : vector<16x290xbf16> to vector<16x256xbf16>
    %487 = vector.broadcast %7 : vector<1x256xbf16> to vector<16x256xbf16>
    %488 = arith.mulf %486, %487 : vector<16x256xbf16>
    %489 = vector.extract_strided_slice %474 {offsets = [0, 32], sizes = [16, 256], strides = [1, 1]} : vector<16x290xbf16> to vector<16x256xbf16>
    %490 = vector.broadcast %12 : vector<1x256xbf16> to vector<16x256xbf16>
    %491 = arith.mulf %489, %490 : vector<16x256xbf16>
    %492 = vector.extract_strided_slice %474 {offsets = [0, 33], sizes = [16, 256], strides = [1, 1]} : vector<16x290xbf16> to vector<16x256xbf16>
    %493 = vector.extract_strided_slice %474 {offsets = [0, 34], sizes = [16, 256], strides = [1, 1]} : vector<16x290xbf16> to vector<16x256xbf16>
    %494 = vector.broadcast %7 : vector<1x256xbf16> to vector<16x256xbf16>
    %495 = arith.mulf %493, %494 : vector<16x256xbf16>
    %496 = tpu.concatenate %477, %478, %481, %484, %485, %488, %491, %492, %495 in 0 : vector<16x256xbf16>, vector<16x256xbf16>, vector<16x256xbf16>, vector<16x256xbf16>, vector<16x256xbf16>, vector<16x256xbf16>, vector<16x256xbf16>, vector<16x256xbf16>, vector<16x256xbf16> -> vector<144x256xbf16>
    %cst_84 = arith.constant dense<0.000000e+00> : vector<16x256xf32>
    %497 = tpu.matmul %469, %496, %cst_84 {dimension_numbers = #tpu.dot_dimension_numbers<[1], [0], [0], [1], [0, 0, 1, 1], [], []>} : vector<16x144xbf16>, vector<144x256xbf16>, vector<16x256xf32> -> vector<16x256xf32>
    %498 = vector.broadcast %471 : vector<16x1xf32> to vector<16x256xf32>
    %499 = arith.addf %497, %498 : vector<16x256xf32>
    %cst_85 = arith.constant 0.000000e+00 : f32
    %500 = vector.broadcast %cst_85 : f32 to vector<16x256xf32>
    %501 = arith.maximumf %499, %500 : vector<16x256xf32>
    %c9 = arith.constant 9 : index
    %c0_86 = arith.constant 0 : index
    %c0_87 = arith.constant 0 : index
    %502 = vector.load %arg5[%c9, %c0_86, %c0_87] : memref<10x16x144xbf16, #tpu.memory_space<vmem>>, vector<1x16x144xbf16>
    %503 = vector.shape_cast %502 : vector<1x16x144xbf16> to vector<16x144xbf16>
    %c9_88 = arith.constant 9 : index
    %c0_89 = arith.constant 0 : index
    %c0_90 = arith.constant 0 : index
    %504 = vector.load %arg6[%c9_88, %c0_89, %c0_90] : memref<10x16x1xf32, #tpu.memory_space<vmem>>, vector<1x16x1xf32>
    %505 = vector.shape_cast %504 : vector<1x16x1xf32> to vector<16x1xf32>
    %506 = arith.truncf %501 : vector<16x256xf32> to vector<16x256xbf16>
    %cst_91 = arith.constant 0.000000e+00 : bf16
    %507 = vector.broadcast %cst_91 : bf16 to vector<16x17xbf16>
    %508 = tpu.concatenate %507, %506, %507 in 1 : vector<16x17xbf16>, vector<16x256xbf16>, vector<16x17xbf16> -> vector<16x290xbf16>
    %509 = vector.extract_strided_slice %508 {offsets = [0, 0], sizes = [16, 256], strides = [1, 1]} : vector<16x290xbf16> to vector<16x256xbf16>
    %510 = vector.broadcast %12 : vector<1x256xbf16> to vector<16x256xbf16>
    %511 = arith.mulf %509, %510 : vector<16x256xbf16>
    %512 = vector.extract_strided_slice %508 {offsets = [0, 1], sizes = [16, 256], strides = [1, 1]} : vector<16x290xbf16> to vector<16x256xbf16>
    %513 = vector.extract_strided_slice %508 {offsets = [0, 2], sizes = [16, 256], strides = [1, 1]} : vector<16x290xbf16> to vector<16x256xbf16>
    %514 = vector.broadcast %7 : vector<1x256xbf16> to vector<16x256xbf16>
    %515 = arith.mulf %513, %514 : vector<16x256xbf16>
    %516 = vector.extract_strided_slice %508 {offsets = [0, 16], sizes = [16, 256], strides = [1, 1]} : vector<16x290xbf16> to vector<16x256xbf16>
    %517 = vector.broadcast %12 : vector<1x256xbf16> to vector<16x256xbf16>
    %518 = arith.mulf %516, %517 : vector<16x256xbf16>
    %519 = vector.extract_strided_slice %508 {offsets = [0, 17], sizes = [16, 256], strides = [1, 1]} : vector<16x290xbf16> to vector<16x256xbf16>
    %520 = vector.extract_strided_slice %508 {offsets = [0, 18], sizes = [16, 256], strides = [1, 1]} : vector<16x290xbf16> to vector<16x256xbf16>
    %521 = vector.broadcast %7 : vector<1x256xbf16> to vector<16x256xbf16>
    %522 = arith.mulf %520, %521 : vector<16x256xbf16>
    %523 = vector.extract_strided_slice %508 {offsets = [0, 32], sizes = [16, 256], strides = [1, 1]} : vector<16x290xbf16> to vector<16x256xbf16>
    %524 = vector.broadcast %12 : vector<1x256xbf16> to vector<16x256xbf16>
    %525 = arith.mulf %523, %524 : vector<16x256xbf16>
    %526 = vector.extract_strided_slice %508 {offsets = [0, 33], sizes = [16, 256], strides = [1, 1]} : vector<16x290xbf16> to vector<16x256xbf16>
    %527 = vector.extract_strided_slice %508 {offsets = [0, 34], sizes = [16, 256], strides = [1, 1]} : vector<16x290xbf16> to vector<16x256xbf16>
    %528 = vector.broadcast %7 : vector<1x256xbf16> to vector<16x256xbf16>
    %529 = arith.mulf %527, %528 : vector<16x256xbf16>
    %530 = tpu.concatenate %511, %512, %515, %518, %519, %522, %525, %526, %529 in 0 : vector<16x256xbf16>, vector<16x256xbf16>, vector<16x256xbf16>, vector<16x256xbf16>, vector<16x256xbf16>, vector<16x256xbf16>, vector<16x256xbf16>, vector<16x256xbf16>, vector<16x256xbf16> -> vector<144x256xbf16>
    %cst_92 = arith.constant dense<0.000000e+00> : vector<16x256xf32>
    %531 = tpu.matmul %503, %530, %cst_92 {dimension_numbers = #tpu.dot_dimension_numbers<[1], [0], [0], [1], [0, 0, 1, 1], [], []>} : vector<16x144xbf16>, vector<144x256xbf16>, vector<16x256xf32> -> vector<16x256xf32>
    %532 = vector.broadcast %505 : vector<16x1xf32> to vector<16x256xf32>
    %533 = arith.addf %531, %532 : vector<16x256xf32>
    %534 = arith.addf %533, %467 : vector<16x256xf32>
    %c0_93 = arith.constant 0 : index
    %c0_94 = arith.constant 0 : index
    %535 = vector.load %arg7[%c0_93, %c0_94] : memref<48x144xbf16, #tpu.memory_space<vmem>>, vector<48x144xbf16>
    %c0_95 = arith.constant 0 : index
    %c0_96 = arith.constant 0 : index
    %536 = vector.load %arg8[%c0_95, %c0_96] : memref<48x1xf32, #tpu.memory_space<vmem>>, vector<48x1xf32>
    %537 = arith.truncf %534 : vector<16x256xf32> to vector<16x256xbf16>
    %cst_97 = arith.constant 0.000000e+00 : bf16
    %538 = vector.broadcast %cst_97 : bf16 to vector<16x17xbf16>
    %539 = tpu.concatenate %538, %537, %538 in 1 : vector<16x17xbf16>, vector<16x256xbf16>, vector<16x17xbf16> -> vector<16x290xbf16>
    %540 = vector.extract_strided_slice %539 {offsets = [0, 0], sizes = [16, 256], strides = [1, 1]} : vector<16x290xbf16> to vector<16x256xbf16>
    %541 = vector.broadcast %12 : vector<1x256xbf16> to vector<16x256xbf16>
    %542 = arith.mulf %540, %541 : vector<16x256xbf16>
    %543 = vector.extract_strided_slice %539 {offsets = [0, 1], sizes = [16, 256], strides = [1, 1]} : vector<16x290xbf16> to vector<16x256xbf16>
    %544 = vector.extract_strided_slice %539 {offsets = [0, 2], sizes = [16, 256], strides = [1, 1]} : vector<16x290xbf16> to vector<16x256xbf16>
    %545 = vector.broadcast %7 : vector<1x256xbf16> to vector<16x256xbf16>
    %546 = arith.mulf %544, %545 : vector<16x256xbf16>
    %547 = vector.extract_strided_slice %539 {offsets = [0, 16], sizes = [16, 256], strides = [1, 1]} : vector<16x290xbf16> to vector<16x256xbf16>
    %548 = vector.broadcast %12 : vector<1x256xbf16> to vector<16x256xbf16>
    %549 = arith.mulf %547, %548 : vector<16x256xbf16>
    %550 = vector.extract_strided_slice %539 {offsets = [0, 17], sizes = [16, 256], strides = [1, 1]} : vector<16x290xbf16> to vector<16x256xbf16>
    %551 = vector.extract_strided_slice %539 {offsets = [0, 18], sizes = [16, 256], strides = [1, 1]} : vector<16x290xbf16> to vector<16x256xbf16>
    %552 = vector.broadcast %7 : vector<1x256xbf16> to vector<16x256xbf16>
    %553 = arith.mulf %551, %552 : vector<16x256xbf16>
    %554 = vector.extract_strided_slice %539 {offsets = [0, 32], sizes = [16, 256], strides = [1, 1]} : vector<16x290xbf16> to vector<16x256xbf16>
    %555 = vector.broadcast %12 : vector<1x256xbf16> to vector<16x256xbf16>
    %556 = arith.mulf %554, %555 : vector<16x256xbf16>
    %557 = vector.extract_strided_slice %539 {offsets = [0, 33], sizes = [16, 256], strides = [1, 1]} : vector<16x290xbf16> to vector<16x256xbf16>
    %558 = vector.extract_strided_slice %539 {offsets = [0, 34], sizes = [16, 256], strides = [1, 1]} : vector<16x290xbf16> to vector<16x256xbf16>
    %559 = vector.broadcast %7 : vector<1x256xbf16> to vector<16x256xbf16>
    %560 = arith.mulf %558, %559 : vector<16x256xbf16>
    %561 = tpu.concatenate %542, %543, %546, %549, %550, %553, %556, %557, %560 in 0 : vector<16x256xbf16>, vector<16x256xbf16>, vector<16x256xbf16>, vector<16x256xbf16>, vector<16x256xbf16>, vector<16x256xbf16>, vector<16x256xbf16>, vector<16x256xbf16>, vector<16x256xbf16> -> vector<144x256xbf16>
    %cst_98 = arith.constant dense<0.000000e+00> : vector<48x256xf32>
    %562 = tpu.matmul %535, %561, %cst_98 {dimension_numbers = #tpu.dot_dimension_numbers<[1], [0], [0], [1], [0, 0, 1, 1], [], []>} : vector<48x144xbf16>, vector<144x256xbf16>, vector<48x256xf32> -> vector<48x256xf32>
    %563 = vector.broadcast %536 : vector<48x1xf32> to vector<48x256xf32>
    %564 = arith.addf %562, %563 : vector<48x256xf32>
    %cst_99 = arith.constant 0.000000e+00 : f32
    %565 = vector.broadcast %cst_99 : f32 to vector<48x256xf32>
    %566 = arith.maximumf %564, %565 : vector<48x256xf32>
    %c0_100 = arith.constant 0 : index
    %c0_101 = arith.constant 0 : index
    %567 = vector.load %arg9[%c0_100, %c0_101] : memref<144x432xbf16, #tpu.memory_space<vmem>>, vector<144x432xbf16>
    %c0_102 = arith.constant 0 : index
    %c0_103 = arith.constant 0 : index
    %568 = vector.load %arg10[%c0_102, %c0_103] : memref<144x1xf32, #tpu.memory_space<vmem>>, vector<144x1xf32>
    %569 = arith.truncf %566 : vector<48x256xf32> to vector<48x256xbf16>
    %cst_104 = arith.constant 0.000000e+00 : bf16
    %570 = vector.broadcast %cst_104 : bf16 to vector<48x17xbf16>
    %571 = tpu.concatenate %570, %569, %570 in 1 : vector<48x17xbf16>, vector<48x256xbf16>, vector<48x17xbf16> -> vector<48x290xbf16>
    %572 = vector.extract_strided_slice %571 {offsets = [0, 0], sizes = [48, 256], strides = [1, 1]} : vector<48x290xbf16> to vector<48x256xbf16>
    %573 = vector.broadcast %12 : vector<1x256xbf16> to vector<48x256xbf16>
    %574 = arith.mulf %572, %573 : vector<48x256xbf16>
    %575 = vector.extract_strided_slice %571 {offsets = [0, 1], sizes = [48, 256], strides = [1, 1]} : vector<48x290xbf16> to vector<48x256xbf16>
    %576 = vector.extract_strided_slice %571 {offsets = [0, 2], sizes = [48, 256], strides = [1, 1]} : vector<48x290xbf16> to vector<48x256xbf16>
    %577 = vector.broadcast %7 : vector<1x256xbf16> to vector<48x256xbf16>
    %578 = arith.mulf %576, %577 : vector<48x256xbf16>
    %579 = vector.extract_strided_slice %571 {offsets = [0, 16], sizes = [48, 256], strides = [1, 1]} : vector<48x290xbf16> to vector<48x256xbf16>
    %580 = vector.broadcast %12 : vector<1x256xbf16> to vector<48x256xbf16>
    %581 = arith.mulf %579, %580 : vector<48x256xbf16>
    %582 = vector.extract_strided_slice %571 {offsets = [0, 17], sizes = [48, 256], strides = [1, 1]} : vector<48x290xbf16> to vector<48x256xbf16>
    %583 = vector.extract_strided_slice %571 {offsets = [0, 18], sizes = [48, 256], strides = [1, 1]} : vector<48x290xbf16> to vector<48x256xbf16>
    %584 = vector.broadcast %7 : vector<1x256xbf16> to vector<48x256xbf16>
    %585 = arith.mulf %583, %584 : vector<48x256xbf16>
    %586 = vector.extract_strided_slice %571 {offsets = [0, 32], sizes = [48, 256], strides = [1, 1]} : vector<48x290xbf16> to vector<48x256xbf16>
    %587 = vector.broadcast %12 : vector<1x256xbf16> to vector<48x256xbf16>
    %588 = arith.mulf %586, %587 : vector<48x256xbf16>
    %589 = vector.extract_strided_slice %571 {offsets = [0, 33], sizes = [48, 256], strides = [1, 1]} : vector<48x290xbf16> to vector<48x256xbf16>
    %590 = vector.extract_strided_slice %571 {offsets = [0, 34], sizes = [48, 256], strides = [1, 1]} : vector<48x290xbf16> to vector<48x256xbf16>
    %591 = vector.broadcast %7 : vector<1x256xbf16> to vector<48x256xbf16>
    %592 = arith.mulf %590, %591 : vector<48x256xbf16>
    %593 = tpu.concatenate %574, %575, %578, %581, %582, %585, %588, %589, %592 in 0 : vector<48x256xbf16>, vector<48x256xbf16>, vector<48x256xbf16>, vector<48x256xbf16>, vector<48x256xbf16>, vector<48x256xbf16>, vector<48x256xbf16>, vector<48x256xbf16>, vector<48x256xbf16> -> vector<432x256xbf16>
    %cst_105 = arith.constant dense<0.000000e+00> : vector<144x256xf32>
    %594 = tpu.matmul %567, %593, %cst_105 {dimension_numbers = #tpu.dot_dimension_numbers<[1], [0], [0], [1], [0, 0, 1, 1], [], []>} : vector<144x432xbf16>, vector<432x256xbf16>, vector<144x256xf32> -> vector<144x256xf32>
    %595 = vector.broadcast %568 : vector<144x1xf32> to vector<144x256xf32>
    %596 = arith.addf %594, %595 : vector<144x256xf32>
    %c0_106 = arith.constant 0 : index
    %c0_107 = arith.constant 0 : index
    %c0_108 = arith.constant 0 : index
    %597 = vector.load %arg11[%c0_106, %c0_107, %c0_108] : memref<1x144x256xf32, #tpu.memory_space<vmem>>, vector<1x144x256xf32>
    %598 = vector.shape_cast %597 : vector<1x144x256xf32> to vector<144x256xf32>
    %599 = vector.shape_cast %596 : vector<144x256xf32> to vector<1x144x256xf32>
    tpu.vector_store %arg11[%c0_106, %c0_107, %c0_108], %599 {strides = array<i32>} : memref<1x144x256xf32, #tpu.memory_space<vmem>>, vector<1x144x256xf32>,
    %c0_109 = arith.constant 0 : index
    %c0_110 = arith.constant 0 : index
    %c0_111 = arith.constant 0 : index
    %600 = vector.load %arg12[%c0_109, %c0_110, %c0_111] : memref<1x16x256xf32, #tpu.memory_space<vmem>>, vector<1x16x256xf32>
    %601 = vector.shape_cast %600 : vector<1x16x256xf32> to vector<16x256xf32>
    %602 = vector.shape_cast %534 : vector<16x256xf32> to vector<1x16x256xf32>
    tpu.vector_store %arg12[%c0_109, %c0_110, %c0_111], %602 {strides = array<i32>} : memref<1x16x256xf32, #tpu.memory_space<vmem>>, vector<1x16x256xf32>,
    return
  }
  func.func @transform_0(%arg0: i32) -> (i32, i32, i32) {
    %c0_i32 = arith.constant 0 : i32
    %c0_i32_0 = arith.constant 0 : i32
    %c0_i32_1 = arith.constant 0 : i32
    return %arg0, %c0_i32, %c0_i32_0 : i32, i32, i32
  }
  func.func @transform_1(%arg0: i32) -> (i32, i32, i32) {
    %c0_i32 = arith.constant 0 : i32
    %c0_i32_0 = arith.constant 0 : i32
    %c0_i32_1 = arith.constant 0 : i32
    return %arg0, %c0_i32, %c0_i32_0 : i32, i32, i32
  }
  func.func @transform_2(%arg0: i32) -> (i32, i32) {
    %c0_i32 = arith.constant 0 : i32
    %c0_i32_0 = arith.constant 0 : i32
    %c0_i32_1 = arith.constant 0 : i32
    return %c0_i32, %c0_i32_0 : i32, i32
  }
  func.func @transform_3(%arg0: i32) -> (i32, i32) {
    %c0_i32 = arith.constant 0 : i32
    %c0_i32_0 = arith.constant 0 : i32
    %c0_i32_1 = arith.constant 0 : i32
    return %c0_i32, %c0_i32_0 : i32, i32
  }
  func.func @transform_4(%arg0: i32) -> (i32, i32, i32) {
    %c0_i32 = arith.constant 0 : i32
    %c0_i32_0 = arith.constant 0 : i32
    %c0_i32_1 = arith.constant 0 : i32
    %c0_i32_2 = arith.constant 0 : i32
    return %c0_i32, %c0_i32_0, %c0_i32_1 : i32, i32, i32
  }
  func.func @transform_5(%arg0: i32) -> (i32, i32, i32) {
    %c0_i32 = arith.constant 0 : i32
    %c0_i32_0 = arith.constant 0 : i32
    %c0_i32_1 = arith.constant 0 : i32
    %c0_i32_2 = arith.constant 0 : i32
    return %c0_i32, %c0_i32_0, %c0_i32_1 : i32, i32, i32
  }
  func.func @transform_6(%arg0: i32) -> (i32, i32) {
    %c0_i32 = arith.constant 0 : i32
    %c0_i32_0 = arith.constant 0 : i32
    %c0_i32_1 = arith.constant 0 : i32
    return %c0_i32, %c0_i32_0 : i32, i32
  }
  func.func @transform_7(%arg0: i32) -> (i32, i32) {
    %c0_i32 = arith.constant 0 : i32
    %c0_i32_0 = arith.constant 0 : i32
    %c0_i32_1 = arith.constant 0 : i32
    return %c0_i32, %c0_i32_0 : i32, i32
  }
  func.func @transform_8(%arg0: i32) -> (i32, i32) {
    %c0_i32 = arith.constant 0 : i32
    %c0_i32_0 = arith.constant 0 : i32
    %c0_i32_1 = arith.constant 0 : i32
    return %c0_i32, %c0_i32_0 : i32, i32
  }
  func.func @transform_9(%arg0: i32) -> (i32, i32) {
    %c0_i32 = arith.constant 0 : i32
    %c0_i32_0 = arith.constant 0 : i32
    %c0_i32_1 = arith.constant 0 : i32
    return %c0_i32, %c0_i32_0 : i32, i32
  }
  func.func @transform_10(%arg0: i32) -> (i32, i32, i32) {
    %c0_i32 = arith.constant 0 : i32
    %c0_i32_0 = arith.constant 0 : i32
    %c0_i32_1 = arith.constant 0 : i32
    return %arg0, %c0_i32, %c0_i32_0 : i32, i32, i32
  }
  func.func @transform_11(%arg0: i32) -> (i32, i32, i32) {
    %c0_i32 = arith.constant 0 : i32
    %c0_i32_0 = arith.constant 0 : i32
    %c0_i32_1 = arith.constant 0 : i32
    return %arg0, %c0_i32, %c0_i32_0 : i32, i32, i32
  }
}

</mosaic_0001>

<llo_original>
// kernel: neuro_forward.1
$region0: #{neuro_forward.1}
  #allocation0 [shape = 'u32[]', space=smem, size = 0x4, offset = 0x4, fixed_abs, tag = 'smem constant byte address 0x4 - core index']
  #allocation1 [shape = 'u32[144,128]{1,0:T(1,128)}', space=vmem, size = 0x12000, scoped, tag = 'internal scratch']
  %s0 = inlined_call_operand.vmem [shape: f32[2,48,256], index: 0, kind: input, shape index: {}]
  %s1 = inlined_call_operand.vmem [shape: f32[2,48,256], index: 1, kind: input, shape index: {}]
  %s2 = inlined_call_operand.vmem [shape: bf16[16,432], index: 2, kind: input, shape index: {}]
  %s3 = inlined_call_operand.vmem [shape: f32[16,1], index: 3, kind: input, shape index: {}]
  %s4 = inlined_call_operand.vmem [shape: bf16[10,16,144], index: 4, kind: input, shape index: {}]
  %s5 = inlined_call_operand.vmem [shape: f32[10,16,1], index: 5, kind: input, shape index: {}]
  %s6 = inlined_call_operand.vmem [shape: bf16[48,144], index: 6, kind: input, shape index: {}]
  %s7 = inlined_call_operand.vmem [shape: f32[48,1], index: 7, kind: input, shape index: {}]
  %s8 = inlined_call_operand.vmem [shape: bf16[144,432], index: 8, kind: input, shape index: {}]
  %s9 = inlined_call_operand.vmem [shape: f32[144,1], index: 9, kind: input, shape index: {}]
  %s10 = inlined_call_operand.vmem [shape: f32[2,144,256], index: 10, kind: output, shape index: {0}]
  %s11 = inlined_call_operand.vmem [shape: f32[2,16,256], index: 11, kind: output, shape index: {1}]
  %12 = xla_tuple %s10, %s11
  %s13 = sld [smem:[#allocation0]]
  $region81: #{neuro_forward.1} parent=0
    _
  %s15 = ssub.s32 1, %s13
  %s16 = scalar_select 0, %s15, %s13
  loop: start=0, step=1, limit=4
  $region2: #{neuro_forward.1} parent=0 // loop_pre_header
    _
  $region3: #{neuro_forward.1} parent=0 // loop_header
    %s18 = sphi 0, %s22
    %p19 = scmp.ge.s32.totalorder %s18, 4
    %s28 = sphi 0, %s30
    %s31 = sphi 0, %s28
    %s32 = sphi 0, %s31
    %s48 = sphi 0, %s32
    %s54 = sphi 0, %s56
    %s57 = sphi 0, %s54
    %s58 = sphi 0, %s57
    %s74 = sphi 0, %s58
    %s78 = sphi 0, %s78
    %s80 = sphi 0, %s78
    %s81 = sphi 0, %s80
    %s95 = sphi 0, %s81
    %s99 = sphi 0, %s99
    %s101 = sphi 0, %s99
    %s102 = sphi 0, %s101
    %s116 = sphi 0, %s102
    %s120 = sphi 0, %s120
    %s122 = sphi 0, %s120
    %s123 = sphi 0, %s122
    %s137 = sphi 0, %s123
    %s141 = sphi 0, %s141
    %s143 = sphi 0, %s141
    %s144 = sphi 0, %s143
    %s158 = sphi 0, %s144
    %s162 = sphi 0, %s162
    %s164 = sphi 0, %s162
    %s165 = sphi 0, %s164
    %s179 = sphi 0, %s165
    %s183 = sphi 0, %s183
    %s185 = sphi 0, %s183
    %s186 = sphi 0, %s185
    %s200 = sphi 0, %s186
    %s204 = sphi 0, %s204
    %s206 = sphi 0, %s204
    %s207 = sphi 0, %s206
    %s221 = sphi 0, %s207
    %s225 = sphi 0, %s225
    %s227 = sphi 0, %s225
    %s228 = sphi 0, %s227
    %s242 = sphi 0, %s228
    %s248 = sphi 0, %s250
    %s251 = sphi 0, %s248
    %s252 = sphi 0, %s251
    %s268 = sphi 0, %s252
    %s274 = sphi 0, %s276
    %s277 = sphi 0, %s274
    %s278 = sphi 0, %s277
    %s294 = sphi 0, %s278
  $region4: #{neuro_forward.1} parent=0 // loop_header_branch
    %21 = sbr.rel (%p19) target = $region8
  $region5: #{neuro_forward.1} parent=0 // loop_body
    %s23 = ssub.s32 %s18, 1
    %s24 = ssub.s32 %s18, 2
    %s25 = sadd.s32 %s18, 1
    %s26 = ssub.s32 %s18, %s25
    %p27 = scmp.eq.s32.totalorder %s26, 0
    %s29 = sadd.s32 %s28, 1
    %s30 = scalar_select %p27, %s28, %s29
    %p33 = pneg %p27
    %p34 = scmp.eq.s32.totalorder %s18, 1
    %p35 = por %p33, %p34
    %p36 = scmp.ne.s32.totalorder %s28, %s31
    %p37 = scmp.eq.s32.totalorder %s18, 0
    %p38 = por %p36, %p37
    %p39 = scmp.ne.s32.totalorder %s28, %s31
    %p40 = scmp.eq.s32.totalorder %s23, 1
    %p41 = por %p39, %p40
    %p42 = scmp.ne.s32.totalorder %s31, %s32
    %p43 = scmp.eq.s32.totalorder %s23, 0
    %p44 = por %p42, %p43
    %p45 = scmp.ne.s32.totalorder %s31, %s32
    %p46 = scmp.eq.s32.totalorder %s24, 1
    %p47 = por %p45, %p46
    %p49 = scmp.ne.s32.totalorder %s32, %s48
    %p50 = scmp.eq.s32.totalorder %s24, 0
    %p51 = por %p49, %p50
    %s52 = ssub.s32 %s18, %s25
    %p53 = scmp.eq.s32.totalorder %s52, 0
    %s55 = sadd.s32 %s54, 1
    %s56 = scalar_select %p53, %s54, %s55
    %p59 = pneg %p53
    %p60 = scmp.eq.s32.totalorder %s18, 1
    %p61 = por %p59, %p60
    %p62 = scmp.ne.s32.totalorder %s54, %s57
    %p63 = scmp.eq.s32.totalorder %s18, 0
    %p64 = por %p62, %p63
    %p65 = scmp.ne.s32.totalorder %s54, %s57
    %p66 = scmp.eq.s32.totalorder %s23, 1
    %p67 = por %p65, %p66
    %p68 = scmp.ne.s32.totalorder %s57, %s58
    %p69 = scmp.eq.s32.totalorder %s23, 0
    %p70 = por %p68, %p69
    %p71 = scmp.ne.s32.totalorder %s57, %s58
    %p72 = scmp.eq.s32.totalorder %s24, 1
    %p73 = por %p71, %p72
    %p75 = scmp.ne.s32.totalorder %s58, %s74
    %p76 = scmp.eq.s32.totalorder %s24, 0
    %p77 = por %p75, %p76
    %s79 = sadd.s32 %s78, 1
    %p82 = scmp.eq.s32.totalorder %s18, 1
    %p83 = scmp.ne.s32.totalorder %s78, %s80
    %p84 = scmp.eq.s32.totalorder %s18, 0
    %p85 = por %p83, %p84
    %p86 = scmp.ne.s32.totalorder %s78, %s80
    %p87 = scmp.eq.s32.totalorder %s23, 1
    %p88 = por %p86, %p87
    %p89 = scmp.ne.s32.totalorder %s80, %s81
    %p90 = scmp.eq.s32.totalorder %s23, 0
    %p91 = por %p89, %p90
    %p92 = scmp.ne.s32.totalorder %s80, %s81
    %p93 = scmp.eq.s32.totalorder %s24, 1
    %p94 = por %p92, %p93
    %p96 = scmp.ne.s32.totalorder %s81, %s95
    %p97 = scmp.eq.s32.totalorder %s24, 0
    %p98 = por %p96, %p97
    %s100 = sadd.s32 %s99, 1
    %p103 = scmp.eq.s32.totalorder %s18, 1
    %p104 = scmp.ne.s32.totalorder %s99, %s101
    %p105 = scmp.eq.s32.totalorder %s18, 0
    %p106 = por %p104, %p105
    %p107 = scmp.ne.s32.totalorder %s99, %s101
    %p108 = scmp.eq.s32.totalorder %s23, 1
    %p109 = por %p107, %p108
    %p110 = scmp.ne.s32.totalorder %s101, %s102
    %p111 = scmp.eq.s32.totalorder %s23, 0
    %p112 = por %p110, %p111
    %p113 = scmp.ne.s32.totalorder %s101, %s102
    %p114 = scmp.eq.s32.totalorder %s24, 1
    %p115 = por %p113, %p114
    %p117 = scmp.ne.s32.totalorder %s102, %s116
    %p118 = scmp.eq.s32.totalorder %s24, 0
    %p119 = por %p117, %p118
    %s121 = sadd.s32 %s120, 1
    %p124 = scmp.eq.s32.totalorder %s18, 1
    %p125 = scmp.ne.s32.totalorder %s120, %s122
    %p126 = scmp.eq.s32.totalorder %s18, 0
    %p127 = por %p125, %p126
    %p128 = scmp.ne.s32.totalorder %s120, %s122
    %p129 = scmp.eq.s32.totalorder %s23, 1
    %p130 = por %p128, %p129
    %p131 = scmp.ne.s32.totalorder %s122, %s123
    %p132 = scmp.eq.s32.totalorder %s23, 0
    %p133 = por %p131, %p132
    %p134 = scmp.ne.s32.totalorder %s122, %s123
    %p135 = scmp.eq.s32.totalorder %s24, 1
    %p136 = por %p134, %p135
    %p138 = scmp.ne.s32.totalorder %s123, %s137
    %p139 = scmp.eq.s32.totalorder %s24, 0
    %p140 = por %p138, %p139
    %s142 = sadd.s32 %s141, 1
    %p145 = scmp.eq.s32.totalorder %s18, 1
    %p146 = scmp.ne.s32.totalorder %s141, %s143
    %p147 = scmp.eq.s32.totalorder %s18, 0
    %p148 = por %p146, %p147
    %p149 = scmp.ne.s32.totalorder %s141, %s143
    %p150 = scmp.eq.s32.totalorder %s23, 1
    %p151 = por %p149, %p150
    %p152 = scmp.ne.s32.totalorder %s143, %s144
    %p153 = scmp.eq.s32.totalorder %s23, 0
    %p154 = por %p152, %p153
    %p155 = scmp.ne.s32.totalorder %s143, %s144
    %p156 = scmp.eq.s32.totalorder %s24, 1
    %p157 = por %p155, %p156
    %p159 = scmp.ne.s32.totalorder %s144, %s158
    %p160 = scmp.eq.s32.totalorder %s24, 0
    %p161 = por %p159, %p160
    %s163 = sadd.s32 %s162, 1
    %p166 = scmp.eq.s32.totalorder %s18, 1
    %p167 = scmp.ne.s32.totalorder %s162, %s164
    %p168 = scmp.eq.s32.totalorder %s18, 0
    %p169 = por %p167, %p168
    %p170 = scmp.ne.s32.totalorder %s162, %s164
    %p171 = scmp.eq.s32.totalorder %s23, 1
    %p172 = por %p170, %p171
    %p173 = scmp.ne.s32.totalorder %s164, %s165
    %p174 = scmp.eq.s32.totalorder %s23, 0
    %p175 = por %p173, %p174
    %p176 = scmp.ne.s32.totalorder %s164, %s165
    %p177 = scmp.eq.s32.totalorder %s24, 1
    %p178 = por %p176, %p177
    %p180 = scmp.ne.s32.totalorder %s165, %s179
    %p181 = scmp.eq.s32.totalorder %s24, 0
    %p182 = por %p180, %p181
    %s184 = sadd.s32 %s183, 1
    %p187 = scmp.eq.s32.totalorder %s18, 1
    %p188 = scmp.ne.s32.totalorder %s183, %s185
    %p189 = scmp.eq.s32.totalorder %s18, 0
    %p190 = por %p188, %p189
    %p191 = scmp.ne.s32.totalorder %s183, %s185
    %p192 = scmp.eq.s32.totalorder %s23, 1
    %p193 = por %p191, %p192
    %p194 = scmp.ne.s32.totalorder %s185, %s186
    %p195 = scmp.eq.s32.totalorder %s23, 0
    %p196 = por %p194, %p195
    %p197 = scmp.ne.s32.totalorder %s185, %s186
    %p198 = scmp.eq.s32.totalorder %s24, 1
    %p199 = por %p197, %p198
    %p201 = scmp.ne.s32.totalorder %s186, %s200
    %p202 = scmp.eq.s32.totalorder %s24, 0
    %p203 = por %p201, %p202
    %s205 = sadd.s32 %s204, 1
    %p208 = scmp.eq.s32.totalorder %s18, 1
    %p209 = scmp.ne.s32.totalorder %s204, %s206
    %p210 = scmp.eq.s32.totalorder %s18, 0
    %p211 = por %p209, %p210
    %p212 = scmp.ne.s32.totalorder %s204, %s206
    %p213 = scmp.eq.s32.totalorder %s23, 1
    %p214 = por %p212, %p213
    %p215 = scmp.ne.s32.totalorder %s206, %s207
    %p216 = scmp.eq.s32.totalorder %s23, 0
    %p217 = por %p215, %p216
    %p218 = scmp.ne.s32.totalorder %s206, %s207
    %p219 = scmp.eq.s32.totalorder %s24, 1
    %p220 = por %p218, %p219
    %p222 = scmp.ne.s32.totalorder %s207, %s221
    %p223 = scmp.eq.s32.totalorder %s24, 0
    %p224 = por %p222, %p223
    %s226 = sadd.s32 %s225, 1
    %p229 = scmp.eq.s32.totalorder %s18, 1
    %p230 = scmp.ne.s32.totalorder %s225, %s227
    %p231 = scmp.eq.s32.totalorder %s18, 0
    %p232 = por %p230, %p231
    %p233 = scmp.ne.s32.totalorder %s225, %s227
    %p234 = scmp.eq.s32.totalorder %s23, 1
    %p235 = por %p233, %p234
    %p236 = scmp.ne.s32.totalorder %s227, %s228
    %p237 = scmp.eq.s32.totalorder %s23, 0
    %p238 = por %p236, %p237
    %p239 = scmp.ne.s32.totalorder %s227, %s228
    %p240 = scmp.eq.s32.totalorder %s24, 1
    %p241 = por %p239, %p240
    %p243 = scmp.ne.s32.totalorder %s228, %s242
    %p244 = scmp.eq.s32.totalorder %s24, 0
    %p245 = por %p243, %p244
    %s246 = ssub.s32 %s18, %s25
    %p247 = scmp.eq.s32.totalorder %s246, 0
    %s249 = sadd.s32 %s248, 1
    %s250 = scalar_select %p247, %s248, %s249
    %p253 = pneg %p247
    %p254 = scmp.eq.s32.totalorder %s18, 1
    %p255 = por %p253, %p254
    %p256 = scmp.ne.s32.totalorder %s248, %s251
    %p257 = scmp.eq.s32.totalorder %s18, 0
    %p258 = por %p256, %p257
    %p259 = scmp.ne.s32.totalorder %s248, %s251
    %p260 = scmp.eq.s32.totalorder %s23, 1
    %p261 = por %p259, %p260
    %p262 = scmp.ne.s32.totalorder %s251, %s252
    %p263 = scmp.eq.s32.totalorder %s23, 0
    %p264 = por %p262, %p263
    %p265 = scmp.ne.s32.totalorder %s251, %s252
    %p266 = scmp.eq.s32.totalorder %s24, 1
    %p267 = por %p265, %p266
    %p269 = scmp.ne.s32.totalorder %s252, %s268
    %p270 = scmp.eq.s32.totalorder %s24, 0
    %p271 = por %p269, %p270
    %s272 = ssub.s32 %s18, %s25
    %p273 = scmp.eq.s32.totalorder %s272, 0
    %s275 = sadd.s32 %s274, 1
    %s276 = scalar_select %p273, %s274, %s275
    %p279 = pneg %p273
    %p280 = scmp.eq.s32.totalorder %s18, 1
    %p281 = por %p279, %p280
    %p282 = scmp.ne.s32.totalorder %s274, %s277
    %p283 = scmp.eq.s32.totalorder %s18, 0
    %p284 = por %p282, %p283
    %p285 = scmp.ne.s32.totalorder %s274, %s277
    %p286 = scmp.eq.s32.totalorder %s23, 1
    %p287 = por %p285, %p286
    %p288 = scmp.ne.s32.totalorder %s277, %s278
    %p289 = scmp.eq.s32.totalorder %s23, 0
    %p290 = por %p288, %p289
    %p291 = scmp.ne.s32.totalorder %s277, %s278
    %p292 = scmp.eq.s32.totalorder %s24, 1
    %p293 = por %p291, %p292
    %p295 = scmp.ne.s32.totalorder %s278, %s294
    %p296 = scmp.eq.s32.totalorder %s24, 0
    %p297 = por %p295, %p296
    %p298 = scmp.le.s32.totalorder 1, %s18
    %p299 = scmp.lt.s32.totalorder %s18, 3
    %p300 = pnand %p298, %p299
    %p301 = pneg %p300
    // Predicated region
    $region9: #{neuro_forward.1} parent=5 // pred_check
      _
    $region10: #{neuro_forward.1} parent=5 // pred_check_branch
      %303 = sbr.rel (%p300) target = $region12
    $region11: #{neuro_forward.1} parent=5 // pred_region
      %s304 = ssub.s32 %s18, 1
      // Predicated region
      $region13: #{neuro_forward.1} parent=11 // pred_check
        %p305 = pneg %p91
      $region14: #{neuro_forward.1} parent=11 // pred_check_branch
        %307 = sbr.rel (%p305) target = $region16
      $region15: #{neuro_forward.1} parent=11 // pred_region
        _
      $region16: #{neuro_forward.1} parent=11 // pred_fallthru
        _
      // Predicated region
      $region17: #{neuro_forward.1} parent=11 // pred_check
        %p308 = pneg %p112
      $region18: #{neuro_forward.1} parent=11 // pred_check_branch
        %310 = sbr.rel (%p308) target = $region20
      $region19: #{neuro_forward.1} parent=11 // pred_region
        _
      $region20: #{neuro_forward.1} parent=11 // pred_fallthru
        _
      // Predicated region
      $region21: #{neuro_forward.1} parent=11 // pred_check
        %p311 = pneg %p133
      $region22: #{neuro_forward.1} parent=11 // pred_check_branch
        %313 = sbr.rel (%p311) target = $region24
      $region23: #{neuro_forward.1} parent=11 // pred_region
        _
      $region24: #{neuro_forward.1} parent=11 // pred_fallthru
        _
      // Predicated region
      $region25: #{neuro_forward.1} parent=11 // pred_check
        %p314 = pneg %p154
      $region26: #{neuro_forward.1} parent=11 // pred_check_branch
        %316 = sbr.rel (%p314) target = $region28
      $region27: #{neuro_forward.1} parent=11 // pred_region
        _
      $region28: #{neuro_forward.1} parent=11 // pred_fallthru
        _
      // Predicated region
      $region29: #{neuro_forward.1} parent=11 // pred_check
        %p317 = pneg %p175
      $region30: #{neuro_forward.1} parent=11 // pred_check_branch
        %319 = sbr.rel (%p317) target = $region32
      $region31: #{neuro_forward.1} parent=11 // pred_region
        _
      $region32: #{neuro_forward.1} parent=11 // pred_fallthru
        _
      // Predicated region
      $region33: #{neuro_forward.1} parent=11 // pred_check
        %p320 = pneg %p196
      $region34: #{neuro_forward.1} parent=11 // pred_check_branch
        %322 = sbr.rel (%p320) target = $region36
      $region35: #{neuro_forward.1} parent=11 // pred_region
        _
      $region36: #{neuro_forward.1} parent=11 // pred_fallthru
        _
      // Predicated region
      $region37: #{neuro_forward.1} parent=11 // pred_check
        %p323 = pneg %p217
      $region38: #{neuro_forward.1} parent=11 // pred_check_branch
        %325 = sbr.rel (%p323) target = $region40
      $region39: #{neuro_forward.1} parent=11 // pred_region
        _
      $region40: #{neuro_forward.1} parent=11 // pred_fallthru
        _
      // Predicated region
      $region41: #{neuro_forward.1} parent=11 // pred_check
        %p326 = pneg %p238
      $region42: #{neuro_forward.1} parent=11 // pred_check_branch
        %328 = sbr.rel (%p326) target = $region44
      $region43: #{neuro_forward.1} parent=11 // pred_region
        _
      $region44: #{neuro_forward.1} parent=11 // pred_fallthru
        _
    $region12: #{neuro_forward.1} parent=5 // pred_fallthru
      _
    %p329 = scmp.lt.s32.totalorder %s18, 2
    // Predicated region
    $region45: #{neuro_forward.1} parent=5 // pred_check
      %p330 = pneg %p329
    $region46: #{neuro_forward.1} parent=5 // pred_check_branch
      %332 = sbr.rel (%p330) target = $region48
    $region47: #{neuro_forward.1} parent=5 // pred_region
      // Predicated region
      $region49: #{neuro_forward.1} parent=47 // pred_check
        %p333 = pneg %p38
      $region50: #{neuro_forward.1} parent=47 // pred_check_branch
        %335 = sbr.rel (%p333) target = $region52
      $region51: #{neuro_forward.1} parent=47 // pred_region
        %p336 = scmp.lt.s32.totalorder %s18, 1
        %s337 = scalar_select %p336, %s18, 1
        %s338 = smul.addr %s337, 12
        %s339 = smul.addr %s338, 8
        %s340 = scalar_lea.vmem %s0, %s339
      $region52: #{neuro_forward.1} parent=47 // pred_fallthru
        _
      // Predicated region
      $region53: #{neuro_forward.1} parent=47 // pred_check
        %p341 = pneg %p64
      $region54: #{neuro_forward.1} parent=47 // pred_check_branch
        %343 = sbr.rel (%p341) target = $region56
      $region55: #{neuro_forward.1} parent=47 // pred_region
        %p344 = scmp.lt.s32.totalorder %s18, 1
        %s345 = scalar_select %p344, %s18, 1
        %s346 = smul.addr %s345, 12
        %s347 = smul.addr %s346, 8
        %s348 = scalar_lea.vmem %s1, %s347
      $region56: #{neuro_forward.1} parent=47 // pred_fallthru
        _
    $region48: #{neuro_forward.1} parent=5 // pred_fallthru
      _
    %p349 = scmp.le.s32.totalorder 1, %s18
    %p350 = scmp.lt.s32.totalorder %s18, 3
    %p351 = pnand %p349, %p350
    %p352 = pneg %p351
    // Predicated region
    $region57: #{neuro_forward.1} parent=5 // pred_check
      _
    $region58: #{neuro_forward.1} parent=5 // pred_check_branch
      %354 = sbr.rel (%p351) target = $region60
    $region59: #{neuro_forward.1} parent=5 // pred_region
      %s355 = ssub.s32 %s18, 1
      %p356 = scmp.lt.s32.totalorder %s23, 1
      %s357 = scalar_select %p356, %s23, 1
      %s358 = smul.addr %s357, 12
      %s359 = smul.addr %s358, 8
      %s360 = scalar_lea.vmem %s0, %s359
      %p361 = pneg %p44
      %p362 = pneg %p41
      %p363 = scmp.lt.s32.totalorder %s23, 1
      %s364 = scalar_select %p363, %s23, 1
      %s365 = smul.addr %s364, 12
      %s366 = smul.addr %s365, 8
      %s367 = scalar_lea.vmem %s1, %s366
      %p368 = pneg %p70
      %p369 = pneg %p67
      %p370 = pneg %p91
      %p371 = pneg %p88
      %p372 = pneg %p112
      %p373 = pneg %p109
      %p374 = pneg %p133
      %p375 = pneg %p130
      %p376 = pneg %p154
      %p377 = pneg %p151
      %p378 = pneg %p175
      %p379 = pneg %p172
      %p380 = pneg %p196
      %p381 = pneg %p193
      %p382 = pneg %p217
      %p383 = pneg %p214
      %p384 = pneg %p238
      %p385 = pneg %p235
      %p386 = pneg %p264
      %p387 = pneg %p261
      %p388 = scmp.lt.s32.totalorder %s23, 1
      %s389 = scalar_select %p388, %s23, 1
      %s390 = smul.addr %s389, 36
      %s391 = smul.addr %s390, 8
      %s392 = scalar_lea.vmem %s10, %s391
      %p393 = pneg %p290
      %p394 = pneg %p287
      %p395 = scmp.lt.s32.totalorder %s23, 1
      %s396 = scalar_select %p395, %s23, 1
      %s397 = smul.addr %s396, 4
      %s398 = smul.addr %s397, 8
      %s399 = scalar_lea.vmem %s11, %s398
      %p400 = scmp.lt.s32.totalorder %s23, 1
      %s401 = scalar_select %p400, %s23, 1
      %s402 = smul.addr %s401, 12
      %s403 = smul.addr %s402, 8
      %s404 = scalar_lea.vmem %s0, %s403
      %p405 = scmp.lt.s32.totalorder %s23, 1
      %s406 = scalar_select %p405, %s23, 1
      %s407 = smul.addr %s406, 12
      %s408 = smul.addr %s407, 8
      %s409 = scalar_lea.vmem %s1, %s408
      %p410 = scmp.lt.s32.totalorder %s23, 1
      %s411 = scalar_select %p410, %s23, 1
      %s412 = smul.addr %s411, 36
      %s413 = smul.addr %s412, 8
      %s414 = scalar_lea.vmem %s10, %s413
      %p415 = scmp.lt.s32.totalorder %s23, 1
      %s416 = scalar_select %p415, %s23, 1
      %s417 = smul.addr %s416, 4
      %s418 = smul.addr %s417, 8
      %s419 = scalar_lea.vmem %s11, %s418
      %v421 = vlaneseq
      %v422 = vand.u32 %v421, 127
      %v423 = vadd.s32 %v422, 128
      %v424 = vand.u32 %v422, 15
      %v425 = vand.u32 %v423, 15
      %vm426 = vcmp.lt.s32.totalorder %v424, 15
      %vm427 = vcmp.lt.s32.totalorder %v425, 15
      %v428 = vsel %vm426, 1, 0
      %v429 = vsel %vm427, 1, 0
      %v430 = vcvt.s32.f32 %v428
      %v431 = vcvt.s32.f32 %v429
      %v432 = vpack.c.bf16 %v430, %v430
      %v433 = vpack.c.bf16 %v431, %v431
      %vm434 = vcmp.ge.s32.totalorder %v424, 1
      %vm435 = vcmp.ge.s32.totalorder %v425, 1
      %v436 = vsel %vm434, 1, 0
      %v437 = vsel %vm435, 1, 0
      %v438 = vcvt.s32.f32 %v436
      %v439 = vcvt.s32.f32 %v437
      %v440 = vpack.c.bf16 %v438, %v438
      %v441 = vpack.c.bf16 %v439, %v439
      %vm442 = vcmp.lt.s32.totalorder %v424, 14
      %vm443 = vcmp.lt.s32.totalorder %v425, 14
      %v444 = vsel %vm442, 1, 0
      %v445 = vsel %vm443, 1, 0
      %v446 = vcvt.s32.f32 %v444
      %v447 = vcvt.s32.f32 %v445
      %v448 = vpack.c.bf16 %v446, %v446
      %v449 = vpack.c.bf16 %v447, %v447
      %vm450 = vcmp.ge.s32.totalorder %v424, 2
      %vm451 = vcmp.ge.s32.totalorder %v425, 2
      %v452 = vsel %vm450, 1, 0
      %v453 = vsel %vm451, 1, 0
      %v454 = vcvt.s32.f32 %v452
      %v455 = vcvt.s32.f32 %v453
      %v456 = vpack.c.bf16 %v454, %v454
      %v457 = vpack.c.bf16 %v455, %v455
      %v458 = vld [vmem:[%s404] sm:$0xff]
      %v459 = vld [vmem:[%s404 + $0x8] sm:$0xff]
      %v460 = vld [vmem:[%s404 + $0x10] sm:$0xff]
      %v461 = vld [vmem:[%s404 + $0x18] sm:$0xff]
      %v462 = vld [vmem:[%s404 + $0x20] sm:$0xff]
      %v463 = vld [vmem:[%s404 + $0x28] sm:$0xff]
      %v464 = vld [vmem:[%s404 + $0x30] sm:$0xff]
      %v465 = vld [vmem:[%s404 + $0x38] sm:$0xff]
      %v466 = vld [vmem:[%s404 + $0x40] sm:$0xff]
      %v467 = vld [vmem:[%s404 + $0x48] sm:$0xff]
      %v468 = vld [vmem:[%s404 + $0x50] sm:$0xff]
      %v469 = vld [vmem:[%s404 + $0x58] sm:$0xff]
      %v470 = vpack.c.bf16 %v460, %v458
      %v471 = vpack.c.bf16 %v461, %v459
      %v472 = vpack.c.bf16 %v464, %v462
      %v473 = vpack.c.bf16 %v465, %v463
      %v474 = vpack.c.bf16 %v468, %v466
      %v475 = vpack.c.bf16 %v469, %v467
      %482 = vrot.lane.b32.xlu0 %v470, 17
      %v483 = vpop.permute.xlu0 %482
      %484 = vrot.lane.b32.xlu0 %v471, 17
      %v485 = vpop.permute.xlu0 %484
      %486 = vrot.lane.b32.xlu0 %v472, 17
      %v487 = vpop.permute.xlu0 %486
      %488 = vrot.lane.b32.xlu0 %v473, 17
      %v489 = vpop.permute.xlu0 %488
      %490 = vrot.lane.b32.xlu0 %v474, 17
      %v491 = vpop.permute.xlu0 %490
      %492 = vrot.lane.b32.xlu0 %v475, 17
      %v493 = vpop.permute.xlu0 %492
      %vm494 = vcmask 138240
      %v495 = vsel %vm494, %v483, %v485
      %v496 = vsel %vm494, %v487, %v489
      %v497 = vsel %vm494, %v491, %v493
      %vm501 = vcmask 138240
      %v504 = vsel %vm501, 0, %v483
      %v507 = vsel %vm501, 0, %v487
      %v510 = vsel %vm501, 0, %v491
      %v513 = vsel %vm501, %v485, 0
      %v516 = vsel %vm501, %v489, 0
      %v519 = vsel %vm501, %v493, 0
      %v521 = vmul.bf16 %v504, %v440
      %v522 = vmul.bf16 %v495, %v441
      %v523 = vmul.bf16 %v507, %v440
      %v524 = vmul.bf16 %v496, %v441
      %v525 = vmul.bf16 %v510, %v440
      %v526 = vmul.bf16 %v497, %v441
      %529 = vrot.lane.b32.xlu0 %v432, 2
      %v530 = vpop.permute.xlu0 %529
      %531 = vrot.lane.b32.xlu0 %v433, 2
      %v532 = vpop.permute.xlu0 %531
      %vm533 = vcmask 15360
      %v534 = vsel %vm533, %v530, %v532
      %v538 = vmul.bf16 %v504, %v530
      %v539 = vmul.bf16 %v495, %v534
      %v540 = vmul.bf16 %v513, %v532
      %v541 = vmul.bf16 %v507, %v530
      %v542 = vmul.bf16 %v496, %v534
      %v543 = vmul.bf16 %v516, %v532
      %v544 = vmul.bf16 %v510, %v530
      %v545 = vmul.bf16 %v497, %v534
      %v546 = vmul.bf16 %v519, %v532
      %549 = vrot.lane.b32.xlu0 %v440, 16
      %v550 = vpop.permute.xlu0 %549
      %551 = vrot.lane.b32.xlu0 %v441, 16
      %v552 = vpop.permute.xlu0 %551
      %vm553 = vcmask 130048
      %v554 = vsel %vm553, %v550, %v552
      %v558 = vmul.bf16 %v504, %v550
      %v559 = vmul.bf16 %v495, %v554
      %v560 = vmul.bf16 %v513, %v552
      %v561 = vmul.bf16 %v507, %v550
      %v562 = vmul.bf16 %v496, %v554
      %v563 = vmul.bf16 %v516, %v552
      %v564 = vmul.bf16 %v510, %v550
      %v565 = vmul.bf16 %v497, %v554
      %v566 = vmul.bf16 %v519, %v552
      %567 = vrot.lane.b32.xlu0 %v432, 18
      %v568 = vpop.permute.xlu0 %567
      %569 = vrot.lane.b32.xlu0 %v433, 18
      %v570 = vpop.permute.xlu0 %569
      %vm571 = vcmask 146432
      %v572 = vsel %vm571, %v568, %v570
      %v576 = vmul.bf16 %v504, %v568
      %v577 = vmul.bf16 %v495, %v572
      %v578 = vmul.bf16 %v513, %v570
      %v579 = vmul.bf16 %v507, %v568
      %v580 = vmul.bf16 %v496, %v572
      %v581 = vmul.bf16 %v516, %v570
      %v582 = vmul.bf16 %v510, %v568
      %v583 = vmul.bf16 %v497, %v572
      %v584 = vmul.bf16 %v519, %v570
      %585 = vrot.lane.b32.xlu0 %v440, 32
      %v586 = vpop.permute.xlu0 %585
      %587 = vrot.lane.b32.xlu0 %v441, 32
      %v588 = vpop.permute.xlu0 %587
      %vm589 = vcmask 261120
      %v590 = vsel %vm589, %v586, %v588
      %v594 = vmul.bf16 %v504, %v586
      %v595 = vmul.bf16 %v495, %v590
      %v596 = vmul.bf16 %v513, %v588
      %v597 = vmul.bf16 %v507, %v586
      %v598 = vmul.bf16 %v496, %v590
      %v599 = vmul.bf16 %v516, %v588
      %v600 = vmul.bf16 %v510, %v586
      %v601 = vmul.bf16 %v497, %v590
      %v602 = vmul.bf16 %v519, %v588
      %603 = vrot.lane.b32.xlu0 %v432, 34
      %v604 = vpop.permute.xlu0 %603
      %605 = vrot.lane.b32.xlu0 %v433, 34
      %v606 = vpop.permute.xlu0 %605
      %vm607 = vcmask 277504
      %v608 = vsel %vm607, %v604, %v606
      %v612 = vmul.bf16 %v504, %v604
      %v613 = vmul.bf16 %v495, %v608
      %v614 = vmul.bf16 %v513, %v606
      %v615 = vmul.bf16 %v507, %v604
      %v616 = vmul.bf16 %v496, %v608
      %v617 = vmul.bf16 %v516, %v606
      %v618 = vmul.bf16 %v510, %v604
      %v619 = vmul.bf16 %v497, %v608
      %v620 = vmul.bf16 %v519, %v606
      %627 = vrot.lane.b32.xlu0 %v504, 127
      %v628 = vpop.permute.xlu0 %627
      %629 = vrot.lane.b32.xlu0 %v495, 127
      %v630 = vpop.permute.xlu0 %629
      %631 = vrot.lane.b32.xlu0 %v513, 127
      %v632 = vpop.permute.xlu0 %631
      %633 = vrot.lane.b32.xlu0 %v507, 127
      %v634 = vpop.permute.xlu0 %633
      %635 = vrot.lane.b32.xlu0 %v496, 127
      %v636 = vpop.permute.xlu0 %635
      %637 = vrot.lane.b32.xlu0 %v516, 127
      %v638 = vpop.permute.xlu0 %637
      %639 = vrot.lane.b32.xlu0 %v510, 127
      %v640 = vpop.permute.xlu0 %639
      %641 = vrot.lane.b32.xlu0 %v497, 127
      %v642 = vpop.permute.xlu0 %641
      %643 = vrot.lane.b32.xlu0 %v519, 127
      %v644 = vpop.permute.xlu0 %643
      %vm645 = vcmask 1039360
      %v646 = vsel %vm645, %v628, %v630
      %v647 = vsel %vm645, %v630, %v632
      %v648 = vsel %vm645, %v634, %v636
      %v649 = vsel %vm645, %v636, %v638
      %v650 = vsel %vm645, %v640, %v642
      %v651 = vsel %vm645, %v642, %v644
      %667 = vrot.lane.b32.xlu0 %v538, 126
      %v668 = vpop.permute.xlu0 %667
      %669 = vrot.lane.b32.xlu0 %v539, 126
      %v670 = vpop.permute.xlu0 %669
      %671 = vrot.lane.b32.xlu0 %v540, 126
      %v672 = vpop.permute.xlu0 %671
      %673 = vrot.lane.b32.xlu0 %v541, 126
      %v674 = vpop.permute.xlu0 %673
      %675 = vrot.lane.b32.xlu0 %v542, 126
      %v676 = vpop.permute.xlu0 %675
      %677 = vrot.lane.b32.xlu0 %v543, 126
      %v678 = vpop.permute.xlu0 %677
      %679 = vrot.lane.b32.xlu0 %v544, 126
      %v680 = vpop.permute.xlu0 %679
      %681 = vrot.lane.b32.xlu0 %v545, 126
      %v682 = vpop.permute.xlu0 %681
      %683 = vrot.lane.b32.xlu0 %v546, 126
      %v684 = vpop.permute.xlu0 %683
      %vm685 = vcmask 1031168
      %v686 = vsel %vm685, %v668, %v670
      %v687 = vsel %vm685, %v670, %v672
      %v688 = vsel %vm685, %v674, %v676
      %v689 = vsel %vm685, %v676, %v678
      %v690 = vsel %vm685, %v680, %v682
      %v691 = vsel %vm685, %v682, %v684
      %707 = vrot.lane.b32.xlu0 %v558, 112
      %v708 = vpop.permute.xlu0 %707
      %709 = vrot.lane.b32.xlu0 %v559, 112
      %v710 = vpop.permute.xlu0 %709
      %711 = vrot.lane.b32.xlu0 %v560, 112
      %v712 = vpop.permute.xlu0 %711
      %713 = vrot.lane.b32.xlu0 %v561, 112
      %v714 = vpop.permute.xlu0 %713
      %715 = vrot.lane.b32.xlu0 %v562, 112
      %v716 = vpop.permute.xlu0 %715
      %717 = vrot.lane.b32.xlu0 %v563, 112
      %v718 = vpop.permute.xlu0 %717
      %719 = vrot.lane.b32.xlu0 %v564, 112
      %v720 = vpop.permute.xlu0 %719
      %721 = vrot.lane.b32.xlu0 %v565, 112
      %v722 = vpop.permute.xlu0 %721
      %723 = vrot.lane.b32.xlu0 %v566, 112
      %v724 = vpop.permute.xlu0 %723
      %vm725 = vcmask 916480
      %v726 = vsel %vm725, %v708, %v710
      %v727 = vsel %vm725, %v710, %v712
      %v728 = vsel %vm725, %v714, %v716
      %v729 = vsel %vm725, %v716, %v718
      %v730 = vsel %vm725, %v720, %v722
      %v731 = vsel %vm725, %v722, %v724
      %738 = vrot.lane.b32.xlu0 %v504, 111
      %v739 = vpop.permute.xlu0 %738
      %740 = vrot.lane.b32.xlu0 %v495, 111
      %v741 = vpop.permute.xlu0 %740
      %742 = vrot.lane.b32.xlu0 %v513, 111
      %v743 = vpop.permute.xlu0 %742
      %744 = vrot.lane.b32.xlu0 %v507, 111
      %v745 = vpop.permute.xlu0 %744
      %746 = vrot.lane.b32.xlu0 %v496, 111
      %v747 = vpop.permute.xlu0 %746
      %748 = vrot.lane.b32.xlu0 %v516, 111
      %v749 = vpop.permute.xlu0 %748
      %750 = vrot.lane.b32.xlu0 %v510, 111
      %v751 = vpop.permute.xlu0 %750
      %752 = vrot.lane.b32.xlu0 %v497, 111
      %v753 = vpop.permute.xlu0 %752
      %754 = vrot.lane.b32.xlu0 %v519, 111
      %v755 = vpop.permute.xlu0 %754
      %vm756 = vcmask 908288
      %v757 = vsel %vm756, %v739, %v741
      %v758 = vsel %vm756, %v741, %v743
      %v759 = vsel %vm756, %v745, %v747
      %v760 = vsel %vm756, %v747, %v749
      %v761 = vsel %vm756, %v751, %v753
      %v762 = vsel %vm756, %v753, %v755
      %778 = vrot.lane.b32.xlu0 %v576, 110
      %v779 = vpop.permute.xlu0 %778
      %780 = vrot.lane.b32.xlu0 %v577, 110
      %v781 = vpop.permute.xlu0 %780
      %782 = vrot.lane.b32.xlu0 %v578, 110
      %v783 = vpop.permute.xlu0 %782
      %784 = vrot.lane.b32.xlu0 %v579, 110
      %v785 = vpop.permute.xlu0 %784
      %786 = vrot.lane.b32.xlu0 %v580, 110
      %v787 = vpop.permute.xlu0 %786
      %788 = vrot.lane.b32.xlu0 %v581, 110
      %v789 = vpop.permute.xlu0 %788
      %790 = vrot.lane.b32.xlu0 %v582, 110
      %v791 = vpop.permute.xlu0 %790
      %792 = vrot.lane.b32.xlu0 %v583, 110
      %v793 = vpop.permute.xlu0 %792
      %794 = vrot.lane.b32.xlu0 %v584, 110
      %v795 = vpop.permute.xlu0 %794
      %vm796 = vcmask 900096
      %v797 = vsel %vm796, %v779, %v781
      %v798 = vsel %vm796, %v781, %v783
      %v799 = vsel %vm796, %v785, %v787
      %v800 = vsel %vm796, %v787, %v789
      %v801 = vsel %vm796, %v791, %v793
      %v802 = vsel %vm796, %v793, %v795
      %818 = vrot.lane.b32.xlu0 %v594, 96
      %v819 = vpop.permute.xlu0 %818
      %820 = vrot.lane.b32.xlu0 %v595, 96
      %v821 = vpop.permute.xlu0 %820
      %822 = vrot.lane.b32.xlu0 %v596, 96
      %v823 = vpop.permute.xlu0 %822
      %824 = vrot.lane.b32.xlu0 %v597, 96
      %v825 = vpop.permute.xlu0 %824
      %826 = vrot.lane.b32.xlu0 %v598, 96
      %v827 = vpop.permute.xlu0 %826
      %828 = vrot.lane.b32.xlu0 %v599, 96
      %v829 = vpop.permute.xlu0 %828
      %830 = vrot.lane.b32.xlu0 %v600, 96
      %v831 = vpop.permute.xlu0 %830
      %832 = vrot.lane.b32.xlu0 %v601, 96
      %v833 = vpop.permute.xlu0 %832
      %834 = vrot.lane.b32.xlu0 %v602, 96
      %v835 = vpop.permute.xlu0 %834
      %vm836 = vcmask 785408
      %v837 = vsel %vm836, %v819, %v821
      %v838 = vsel %vm836, %v821, %v823
      %v839 = vsel %vm836, %v825, %v827
      %v840 = vsel %vm836, %v827, %v829
      %v841 = vsel %vm836, %v831, %v833
      %v842 = vsel %vm836, %v833, %v835
      %849 = vrot.lane.b32.xlu0 %v504, 95
      %v850 = vpop.permute.xlu0 %849
      %851 = vrot.lane.b32.xlu0 %v495, 95
      %v852 = vpop.permute.xlu0 %851
      %853 = vrot.lane.b32.xlu0 %v513, 95
      %v854 = vpop.permute.xlu0 %853
      %855 = vrot.lane.b32.xlu0 %v507, 95
      %v856 = vpop.permute.xlu0 %855
      %857 = vrot.lane.b32.xlu0 %v496, 95
      %v858 = vpop.permute.xlu0 %857
      %859 = vrot.lane.b32.xlu0 %v516, 95
      %v860 = vpop.permute.xlu0 %859
      %861 = vrot.lane.b32.xlu0 %v510, 95
      %v862 = vpop.permute.xlu0 %861
      %863 = vrot.lane.b32.xlu0 %v497, 95
      %v864 = vpop.permute.xlu0 %863
      %865 = vrot.lane.b32.xlu0 %v519, 95
      %v866 = vpop.permute.xlu0 %865
      %vm867 = vcmask 777216
      %v868 = vsel %vm867, %v850, %v852
      %v869 = vsel %vm867, %v852, %v854
      %v870 = vsel %vm867, %v856, %v858
      %v871 = vsel %vm867, %v858, %v860
      %v872 = vsel %vm867, %v862, %v864
      %v873 = vsel %vm867, %v864, %v866
      %889 = vrot.lane.b32.xlu0 %v612, 94
      %v890 = vpop.permute.xlu0 %889
      %891 = vrot.lane.b32.xlu0 %v613, 94
      %v892 = vpop.permute.xlu0 %891
      %893 = vrot.lane.b32.xlu0 %v614, 94
      %v894 = vpop.permute.xlu0 %893
      %895 = vrot.lane.b32.xlu0 %v615, 94
      %v896 = vpop.permute.xlu0 %895
      %897 = vrot.lane.b32.xlu0 %v616, 94
      %v898 = vpop.permute.xlu0 %897
      %899 = vrot.lane.b32.xlu0 %v617, 94
      %v900 = vpop.permute.xlu0 %899
      %901 = vrot.lane.b32.xlu0 %v618, 94
      %v902 = vpop.permute.xlu0 %901
      %903 = vrot.lane.b32.xlu0 %v619, 94
      %v904 = vpop.permute.xlu0 %903
      %905 = vrot.lane.b32.xlu0 %v620, 94
      %v906 = vpop.permute.xlu0 %905
      %vm907 = vcmask 769024
      %v908 = vsel %vm907, %v890, %v892
      %v909 = vsel %vm907, %v892, %v894
      %v910 = vsel %vm907, %v896, %v898
      %v911 = vsel %vm907, %v898, %v900
      %v912 = vsel %vm907, %v902, %v904
      %v913 = vsel %vm907, %v904, %v906
      %v920 = vld [vmem:[%s409] sm:$0xff]
      %v921 = vld [vmem:[%s409 + $0x8] sm:$0xff]
      %v922 = vld [vmem:[%s409 + $0x10] sm:$0xff]
      %v923 = vld [vmem:[%s409 + $0x18] sm:$0xff]
      %v924 = vld [vmem:[%s409 + $0x20] sm:$0xff]
      %v925 = vld [vmem:[%s409 + $0x28] sm:$0xff]
      %v926 = vld [vmem:[%s409 + $0x30] sm:$0xff]
      %v927 = vld [vmem:[%s409 + $0x38] sm:$0xff]
      %v928 = vld [vmem:[%s409 + $0x40] sm:$0xff]
      %v929 = vld [vmem:[%s409 + $0x48] sm:$0xff]
      %v930 = vld [vmem:[%s409 + $0x50] sm:$0xff]
      %v931 = vld [vmem:[%s409 + $0x58] sm:$0xff]
      %v932 = vpack.c.bf16 %v922, %v920
      %v933 = vpack.c.bf16 %v923, %v921
      %v934 = vpack.c.bf16 %v926, %v924
      %v935 = vpack.c.bf16 %v927, %v925
      %v936 = vpack.c.bf16 %v930, %v928
      %v937 = vpack.c.bf16 %v931, %v929
      %944 = vrot.lane.b32.xlu0 %v932, 34
      %v945 = vpop.permute.xlu0 %944
      %946 = vrot.lane.b32.xlu0 %v933, 34
      %v947 = vpop.permute.xlu0 %946
      %948 = vrot.lane.b32.xlu0 %v934, 34
      %v949 = vpop.permute.xlu0 %948
      %950 = vrot.lane.b32.xlu0 %v935, 34
      %v951 = vpop.permute.xlu0 %950
      %952 = vrot.lane.b32.xlu0 %v936, 34
      %v953 = vpop.permute.xlu0 %952
      %954 = vrot.lane.b32.xlu0 %v937, 34
      %v955 = vpop.permute.xlu0 %954
      %v956 = vsel %vm607, %v945, %v947
      %v957 = vsel %vm607, %v949, %v951
      %v958 = vsel %vm607, %v953, %v955
      %vm962 = vcmask 277504
      %v964 = vsel %vm962, 0, %v945
      %v967 = vsel %vm962, 0, %v949
      %v970 = vsel %vm962, 0, %v953
      %v973 = vsel %vm962, %v947, 0
      %v976 = vsel %vm962, %v951, 0
      %v979 = vsel %vm962, %v955, 0
      %v981 = vmul.bf16 %v964, %v456
      %v982 = vmul.bf16 %v956, %v457
      %v983 = vmul.bf16 %v967, %v456
      %v984 = vmul.bf16 %v957, %v457
      %v985 = vmul.bf16 %v970, %v456
      %v986 = vmul.bf16 %v958, %v457
      %989 = vrot.lane.b32.xlu0 %v448, 4
      %v990 = vpop.permute.xlu0 %989
      %991 = vrot.lane.b32.xlu0 %v449, 4
      %v992 = vpop.permute.xlu0 %991
      %vm993 = vcmask 31744
      %v994 = vsel %vm993, %v990, %v992
      %v998 = vmul.bf16 %v964, %v990
      %v999 = vmul.bf16 %v956, %v994
      %v1000 = vmul.bf16 %v973, %v992
      %v1001 = vmul.bf16 %v967, %v990
      %v1002 = vmul.bf16 %v957, %v994
      %v1003 = vmul.bf16 %v976, %v992
      %v1004 = vmul.bf16 %v970, %v990
      %v1005 = vmul.bf16 %v958, %v994
      %v1006 = vmul.bf16 %v979, %v992
      %1009 = vrot.lane.b32.xlu0 %v456, 32
      %v1010 = vpop.permute.xlu0 %1009
      %1011 = vrot.lane.b32.xlu0 %v457, 32
      %v1012 = vpop.permute.xlu0 %1011
      %v1013 = vsel %vm589, %v1010, %v1012
      %v1017 = vmul.bf16 %v964, %v1010
      %v1018 = vmul.bf16 %v956, %v1013
      %v1019 = vmul.bf16 %v973, %v1012
      %v1020 = vmul.bf16 %v967, %v1010
      %v1021 = vmul.bf16 %v957, %v1013
      %v1022 = vmul.bf16 %v976, %v1012
      %v1023 = vmul.bf16 %v970, %v1010
      %v1024 = vmul.bf16 %v958, %v1013
      %v1025 = vmul.bf16 %v979, %v1012
      %1026 = vrot.lane.b32.xlu0 %v448, 36
      %v1027 = vpop.permute.xlu0 %1026
      %1028 = vrot.lane.b32.xlu0 %v449, 36
      %v1029 = vpop.permute.xlu0 %1028
      %vm1030 = vcmask 293888
      %v1031 = vsel %vm1030, %v1027, %v1029
      %v1035 = vmul.bf16 %v964, %v1027
      %v1036 = vmul.bf16 %v956, %v1031
      %v1037 = vmul.bf16 %v973, %v1029
      %v1038 = vmul.bf16 %v967, %v1027
      %v1039 = vmul.bf16 %v957, %v1031
      %v1040 = vmul.bf16 %v976, %v1029
      %v1041 = vmul.bf16 %v970, %v1027
      %v1042 = vmul.bf16 %v958, %v1031
      %v1043 = vmul.bf16 %v979, %v1029
      %1044 = vrot.lane.b32.xlu0 %v456, 64
      %v1045 = vpop.permute.xlu0 %1044
      %1046 = vrot.lane.b32.xlu0 %v457, 64
      %v1047 = vpop.permute.xlu0 %1046
      %vm1048 = vcmask 523264
      %v1049 = vsel %vm1048, %v1045, %v1047
      %v1053 = vmul.bf16 %v964, %v1045
      %v1054 = vmul.bf16 %v956, %v1049
      %v1055 = vmul.bf16 %v973, %v1047
      %v1056 = vmul.bf16 %v967, %v1045
      %v1057 = vmul.bf16 %v957, %v1049
      %v1058 = vmul.bf16 %v976, %v1047
      %v1059 = vmul.bf16 %v970, %v1045
      %v1060 = vmul.bf16 %v958, %v1049
      %v1061 = vmul.bf16 %v979, %v1047
      %1062 = vrot.lane.b32.xlu0 %v448, 68
      %v1063 = vpop.permute.xlu0 %1062
      %1064 = vrot.lane.b32.xlu0 %v449, 68
      %v1065 = vpop.permute.xlu0 %1064
      %vm1066 = vcmask 556032
      %v1067 = vsel %vm1066, %v1063, %v1065
      %v1071 = vmul.bf16 %v964, %v1063
      %v1072 = vmul.bf16 %v956, %v1067
      %v1073 = vmul.bf16 %v973, %v1065
      %v1074 = vmul.bf16 %v967, %v1063
      %v1075 = vmul.bf16 %v957, %v1067
      %v1076 = vmul.bf16 %v976, %v1065
      %v1077 = vmul.bf16 %v970, %v1063
      %v1078 = vmul.bf16 %v958, %v1067
      %v1079 = vmul.bf16 %v979, %v1065
      %1086 = vrot.lane.b32.xlu0 %v964, 126
      %v1087 = vpop.permute.xlu0 %1086
      %1088 = vrot.lane.b32.xlu0 %v956, 126
      %v1089 = vpop.permute.xlu0 %1088
      %1090 = vrot.lane.b32.xlu0 %v973, 126
      %v1091 = vpop.permute.xlu0 %1090
      %1092 = vrot.lane.b32.xlu0 %v967, 126
      %v1093 = vpop.permute.xlu0 %1092
      %1094 = vrot.lane.b32.xlu0 %v957, 126
      %v1095 = vpop.permute.xlu0 %1094
      %1096 = vrot.lane.b32.xlu0 %v976, 126
      %v1097 = vpop.permute.xlu0 %1096
      %1098 = vrot.lane.b32.xlu0 %v970, 126
      %v1099 = vpop.permute.xlu0 %1098
      %1100 = vrot.lane.b32.xlu0 %v958, 126
      %v1101 = vpop.permute.xlu0 %1100
      %1102 = vrot.lane.b32.xlu0 %v979, 126
      %v1103 = vpop.permute.xlu0 %1102
      %v1104 = vsel %vm685, %v1087, %v1089
      %v1105 = vsel %vm685, %v1089, %v1091
      %v1106 = vsel %vm685, %v1093, %v1095
      %v1107 = vsel %vm685, %v1095, %v1097
      %v1108 = vsel %vm685, %v1099, %v1101
      %v1109 = vsel %vm685, %v1101, %v1103
      %1125 = vrot.lane.b32.xlu0 %v998, 124
      %v1126 = vpop.permute.xlu0 %1125
      %1127 = vrot.lane.b32.xlu0 %v999, 124
      %v1128 = vpop.permute.xlu0 %1127
      %1129 = vrot.lane.b32.xlu0 %v1000, 124
      %v1130 = vpop.permute.xlu0 %1129
      %1131 = vrot.lane.b32.xlu0 %v1001, 124
      %v1132 = vpop.permute.xlu0 %1131
      %1133 = vrot.lane.b32.xlu0 %v1002, 124
      %v1134 = vpop.permute.xlu0 %1133
      %1135 = vrot.lane.b32.xlu0 %v1003, 124
      %v1136 = vpop.permute.xlu0 %1135
      %1137 = vrot.lane.b32.xlu0 %v1004, 124
      %v1138 = vpop.permute.xlu0 %1137
      %1139 = vrot.lane.b32.xlu0 %v1005, 124
      %v1140 = vpop.permute.xlu0 %1139
      %1141 = vrot.lane.b32.xlu0 %v1006, 124
      %v1142 = vpop.permute.xlu0 %1141
      %vm1143 = vcmask 1014784
      %v1144 = vsel %vm1143, %v1126, %v1128
      %v1145 = vsel %vm1143, %v1128, %v1130
      %v1146 = vsel %vm1143, %v1132, %v1134
      %v1147 = vsel %vm1143, %v1134, %v1136
      %v1148 = vsel %vm1143, %v1138, %v1140
      %v1149 = vsel %vm1143, %v1140, %v1142
      %1165 = vrot.lane.b32.xlu0 %v1017, 96
      %v1166 = vpop.permute.xlu0 %1165
      %1167 = vrot.lane.b32.xlu0 %v1018, 96
      %v1168 = vpop.permute.xlu0 %1167
      %1169 = vrot.lane.b32.xlu0 %v1019, 96
      %v1170 = vpop.permute.xlu0 %1169
      %1171 = vrot.lane.b32.xlu0 %v1020, 96
      %v1172 = vpop.permute.xlu0 %1171
      %1173 = vrot.lane.b32.xlu0 %v1021, 96
      %v1174 = vpop.permute.xlu0 %1173
      %1175 = vrot.lane.b32.xlu0 %v1022, 96
      %v1176 = vpop.permute.xlu0 %1175
      %1177 = vrot.lane.b32.xlu0 %v1023, 96
      %v1178 = vpop.permute.xlu0 %1177
      %1179 = vrot.lane.b32.xlu0 %v1024, 96
      %v1180 = vpop.permute.xlu0 %1179
      %1181 = vrot.lane.b32.xlu0 %v1025, 96
      %v1182 = vpop.permute.xlu0 %1181
      %v1183 = vsel %vm836, %v1166, %v1168
      %v1184 = vsel %vm836, %v1168, %v1170
      %v1185 = vsel %vm836, %v1172, %v1174
      %v1186 = vsel %vm836, %v1174, %v1176
      %v1187 = vsel %vm836, %v1178, %v1180
      %v1188 = vsel %vm836, %v1180, %v1182
      %1195 = vrot.lane.b32.xlu0 %v964, 94
      %v1196 = vpop.permute.xlu0 %1195
      %1197 = vrot.lane.b32.xlu0 %v956, 94
      %v1198 = vpop.permute.xlu0 %1197
      %1199 = vrot.lane.b32.xlu0 %v973, 94
      %v1200 = vpop.permute.xlu0 %1199
      %1201 = vrot.lane.b32.xlu0 %v967, 94
      %v1202 = vpop.permute.xlu0 %1201
      %1203 = vrot.lane.b32.xlu0 %v957, 94
      %v1204 = vpop.permute.xlu0 %1203
      %1205 = vrot.lane.b32.xlu0 %v976, 94
      %v1206 = vpop.permute.xlu0 %1205
      %1207 = vrot.lane.b32.xlu0 %v970, 94
      %v1208 = vpop.permute.xlu0 %1207
      %1209 = vrot.lane.b32.xlu0 %v958, 94
      %v1210 = vpop.permute.xlu0 %1209
      %1211 = vrot.lane.b32.xlu0 %v979, 94
      %v1212 = vpop.permute.xlu0 %1211
      %v1213 = vsel %vm907, %v1196, %v1198
      %v1214 = vsel %vm907, %v1198, %v1200
      %v1215 = vsel %vm907, %v1202, %v1204
      %v1216 = vsel %vm907, %v1204, %v1206
      %v1217 = vsel %vm907, %v1208, %v1210
      %v1218 = vsel %vm907, %v1210, %v1212
      %1234 = vrot.lane.b32.xlu0 %v1035, 92
      %v1235 = vpop.permute.xlu0 %1234
      %1236 = vrot.lane.b32.xlu0 %v1036, 92
      %v1237 = vpop.permute.xlu0 %1236
      %1238 = vrot.lane.b32.xlu0 %v1037, 92
      %v1239 = vpop.permute.xlu0 %1238
      %1240 = vrot.lane.b32.xlu0 %v1038, 92
      %v1241 = vpop.permute.xlu0 %1240
      %1242 = vrot.lane.b32.xlu0 %v1039, 92
      %v1243 = vpop.permute.xlu0 %1242
      %1244 = vrot.lane.b32.xlu0 %v1040, 92
      %v1245 = vpop.permute.xlu0 %1244
      %1246 = vrot.lane.b32.xlu0 %v1041, 92
      %v1247 = vpop.permute.xlu0 %1246
      %1248 = vrot.lane.b32.xlu0 %v1042, 92
      %v1249 = vpop.permute.xlu0 %1248
      %1250 = vrot.lane.b32.xlu0 %v1043, 92
      %v1251 = vpop.permute.xlu0 %1250
      %vm1252 = vcmask 752640
      %v1253 = vsel %vm1252, %v1235, %v1237
      %v1254 = vsel %vm1252, %v1237, %v1239
      %v1255 = vsel %vm1252, %v1241, %v1243
      %v1256 = vsel %vm1252, %v1243, %v1245
      %v1257 = vsel %vm1252, %v1247, %v1249
      %v1258 = vsel %vm1252, %v1249, %v1251
      %1274 = vrot.lane.b32.xlu0 %v1053, 64
      %v1275 = vpop.permute.xlu0 %1274
      %1276 = vrot.lane.b32.xlu0 %v1054, 64
      %v1277 = vpop.permute.xlu0 %1276
      %1278 = vrot.lane.b32.xlu0 %v1055, 64
      %v1279 = vpop.permute.xlu0 %1278
      %1280 = vrot.lane.b32.xlu0 %v1056, 64
      %v1281 = vpop.permute.xlu0 %1280
      %1282 = vrot.lane.b32.xlu0 %v1057, 64
      %v1283 = vpop.permute.xlu0 %1282
      %1284 = vrot.lane.b32.xlu0 %v1058, 64
      %v1285 = vpop.permute.xlu0 %1284
      %1286 = vrot.lane.b32.xlu0 %v1059, 64
      %v1287 = vpop.permute.xlu0 %1286
      %1288 = vrot.lane.b32.xlu0 %v1060, 64
      %v1289 = vpop.permute.xlu0 %1288
      %1290 = vrot.lane.b32.xlu0 %v1061, 64
      %v1291 = vpop.permute.xlu0 %1290
      %v1292 = vsel %vm1048, %v1275, %v1277
      %v1293 = vsel %vm1048, %v1277, %v1279
      %v1294 = vsel %vm1048, %v1281, %v1283
      %v1295 = vsel %vm1048, %v1283, %v1285
      %v1296 = vsel %vm1048, %v1287, %v1289
      %v1297 = vsel %vm1048, %v1289, %v1291
      %1304 = vrot.lane.b32.xlu0 %v964, 62
      %v1305 = vpop.permute.xlu0 %1304
      %1306 = vrot.lane.b32.xlu0 %v956, 62
      %v1307 = vpop.permute.xlu0 %1306
      %1308 = vrot.lane.b32.xlu0 %v973, 62
      %v1309 = vpop.permute.xlu0 %1308
      %1310 = vrot.lane.b32.xlu0 %v967, 62
      %v1311 = vpop.permute.xlu0 %1310
      %1312 = vrot.lane.b32.xlu0 %v957, 62
      %v1313 = vpop.permute.xlu0 %1312
      %1314 = vrot.lane.b32.xlu0 %v976, 62
      %v1315 = vpop.permute.xlu0 %1314
      %1316 = vrot.lane.b32.xlu0 %v970, 62
      %v1317 = vpop.permute.xlu0 %1316
      %1318 = vrot.lane.b32.xlu0 %v958, 62
      %v1319 = vpop.permute.xlu0 %1318
      %1320 = vrot.lane.b32.xlu0 %v979, 62
      %v1321 = vpop.permute.xlu0 %1320
      %vm1322 = vcmask 506880
      %v1323 = vsel %vm1322, %v1305, %v1307
      %v1324 = vsel %vm1322, %v1307, %v1309
      %v1325 = vsel %vm1322, %v1311, %v1313
      %v1326 = vsel %vm1322, %v1313, %v1315
      %v1327 = vsel %vm1322, %v1317, %v1319
      %v1328 = vsel %vm1322, %v1319, %v1321
      %1344 = vrot.lane.b32.xlu0 %v1071, 60
      %v1345 = vpop.permute.xlu0 %1344
      %1346 = vrot.lane.b32.xlu0 %v1072, 60
      %v1347 = vpop.permute.xlu0 %1346
      %1348 = vrot.lane.b32.xlu0 %v1073, 60
      %v1349 = vpop.permute.xlu0 %1348
      %1350 = vrot.lane.b32.xlu0 %v1074, 60
      %v1351 = vpop.permute.xlu0 %1350
      %1352 = vrot.lane.b32.xlu0 %v1075, 60
      %v1353 = vpop.permute.xlu0 %1352
      %1354 = vrot.lane.b32.xlu0 %v1076, 60
      %v1355 = vpop.permute.xlu0 %1354
      %1356 = vrot.lane.b32.xlu0 %v1077, 60
      %v1357 = vpop.permute.xlu0 %1356
      %1358 = vrot.lane.b32.xlu0 %v1078, 60
      %v1359 = vpop.permute.xlu0 %1358
      %1360 = vrot.lane.b32.xlu0 %v1079, 60
      %v1361 = vpop.permute.xlu0 %1360
      %vm1362 = vcmask 490496
      %v1363 = vsel %vm1362, %v1345, %v1347
      %v1364 = vsel %vm1362, %v1347, %v1349
      %v1365 = vsel %vm1362, %v1351, %v1353
      %v1366 = vsel %vm1362, %v1353, %v1355
      %v1367 = vsel %vm1362, %v1357, %v1359
      %v1368 = vsel %vm1362, %v1359, %v1361
      %v1375 = vld [vmem:[%s2] sm:$0xff]
      %v1376 = vld [vmem:[%s2 + $0x8] sm:$0xff]
      %v1377 = vld [vmem:[%s2 + $0x10] sm:$0xff]
      %v1378 = vld [vmem:[%s2 + $0x18] sm:$0xff]
      %v1379 = vld [vmem:[%s3] sm:$0xff]
      %v1380 = vld [vmem:[%s3 + $0x8] sm:$0xff]
      %1382 = vset.pattern.permute.xlu0 0
      %1383 = vperm.xlu0 %1382, %v1379
      %v1384 = vpop.permute.xlu0 %1383
      %1387 = vset.pattern.permute.xlu0 0
      %1388 = vperm.xlu0 %1387, %v1380
      %v1389 = vpop.permute.xlu0 %1388
      %v1395 = vunpack.c.l.b16 %v1375
      %v1396 = vunpack.c.h.b16 %v1375
      %v1397 = vunpack.c.l.b16 %v1376
      %v1398 = vunpack.c.h.b16 %v1376
      %v1399 = vunpack.c.l.b16 %v1377
      %v1400 = vunpack.c.h.b16 %v1377
      %v1401 = vunpack.c.l.b16 %v1378
      %v1402 = vunpack.c.h.b16 %v1378
      %v1403 = vpack.c.b16 %v1399, %v1395
      %v1404 = vpack.c.b16 %v1400, %v1396
      %v1405 = vpack.c.b16 %v1401, %v1397
      %v1406 = vpack.c.b16 %v1402, %v1398
      %vm1410 = vcmask 392192
      %v1412 = vsel %vm1410, %v1406, 0
      %1414 = vmatprep.subr.bf16.mxu0 %v522
      %1415 = vmatpush1.bf16.msra.mxu0 %v521
      %1416 = vmatprep.subr.bf16.mxu0 %v524
      %1417 = vmatpush1.bf16.msra.mxu0 %v523
      %1418 = vmatprep.subr.bf16.mxu0 %v526
      %1419 = vmatpush1.bf16.msra.mxu0 %v525
      %1420 = vmatprep.subr.bf16.mxu0 %v647
      %1421 = vmatpush1.bf16.msra.mxu0 %v646
      %1422 = vmatprep.subr.bf16.mxu0 %v649
      %1423 = vmatpush1.bf16.msra.mxu0 %v648
      %1424 = vmatprep.subr.bf16.mxu0 %v651
      %1425 = vmatpush1.bf16.msra.mxu0 %v650
      %1426 = vmatprep.subr.bf16.mxu0 %v687
      %1427 = vmatpush1.bf16.msra.mxu0 %v686
      %1428 = vmatprep.subr.bf16.mxu0 %v689
      %1429 = vmatpush1.bf16.msra.mxu0 %v688
      %1430 = vmatprep.subr.bf16.mxu0 %v691
      %1431 = vmatpush1.bf16.msra.mxu0 %v690
      %1432 = vmatprep.subr.bf16.mxu0 %v727
      %1433 = vmatpush1.bf16.msra.mxu0 %v726
      %1434 = vmatprep.subr.bf16.mxu0 %v729
      %1435 = vmatpush1.bf16.msra.mxu0 %v728
      %1436 = vmatprep.subr.bf16.mxu0 %v731
      %1437 = vmatpush1.bf16.msra.mxu0 %v730
      %1438 = vmatprep.subr.bf16.mxu0 %v758
      %1439 = vmatpush1.bf16.msra.mxu0 %v757
      %1440 = vmatprep.subr.bf16.mxu0 %v760
      %1441 = vmatpush1.bf16.msra.mxu0 %v759
      %1442 = vmatprep.subr.bf16.mxu0 %v762
      %1443 = vmatpush1.bf16.msra.mxu0 %v761
      %1444 = vmatprep.subr.bf16.mxu0 %v798
      %1445 = vmatpush1.bf16.msra.mxu0 %v797
      %1446 = vmatprep.mubr.bf16.mxu0 %v1404
      %1447 = vmatmul.mubr.bf16.gmra.mrb[0].mxu0 %v1403
      %v1448 = vpop.f32.mrb[0].mxu0
      %v1449 = vadd.f32 %v1384, %v1448
      %v1450 = vpop.f32.mrb[0].mxu0
      %v1451 = vadd.f32 %v1384, %v1450
      %v1452 = vpop.f32.mrb[0].mxu0
      %v1453 = vadd.f32 %v1389, %v1452
      %v1454 = vpop.f32.mrb[0].mxu0
      %v1455 = vadd.f32 %v1389, %v1454
      %1456 = vdwg.mxu0
      %1457 = vmatprep.subr.bf16.mxu0 %v800
      %1458 = vmatpush1.bf16.msra.mxu0 %v799
      %1459 = vmatprep.subr.bf16.mxu0 %v802
      %1460 = vmatpush1.bf16.msra.mxu0 %v801
      %1461 = vmatprep.subr.bf16.mxu0 %v838
      %1462 = vmatpush1.bf16.msra.mxu0 %v837
      %1463 = vmatprep.subr.bf16.mxu0 %v840
      %1464 = vmatpush1.bf16.msra.mxu0 %v839
      %1465 = vmatprep.subr.bf16.mxu0 %v842
      %1466 = vmatpush1.bf16.msra.mxu0 %v841
      %1467 = vmatprep.subr.bf16.mxu0 %v869
      %1468 = vmatpush1.bf16.msra.mxu0 %v868
      %1469 = vmatprep.subr.bf16.mxu0 %v871
      %1470 = vmatpush1.bf16.msra.mxu0 %v870
      %1471 = vmatprep.subr.bf16.mxu0 %v873
      %1472 = vmatpush1.bf16.msra.mxu0 %v872
      %1473 = vmatprep.subr.bf16.mxu0 %v909
      %1474 = vmatpush1.bf16.msra.mxu0 %v908
      %1475 = vmatprep.subr.bf16.mxu0 %v911
      %1476 = vmatpush1.bf16.msra.mxu0 %v910
      %1477 = vmatprep.subr.bf16.mxu0 %v913
      %1478 = vmatpush1.bf16.msra.mxu0 %v912
      %1479 = vmatprep.subr.bf16.mxu0 0
      %1480 = vmatpush1.bf16.msra.mxu0 0
      %1481 = vmatprep.subr.bf16.mxu0 0
      %1482 = vmatpush1.bf16.msra.mxu0 0
      %1483 = vmatprep.subr.bf16.mxu0 0
      %1484 = vmatpush1.bf16.msra.mxu0 0
      %1485 = vmatprep.subr.bf16.mxu0 0
      %1486 = vmatpush1.bf16.msra.mxu0 0
      %1487 = vmatprep.subr.bf16.mxu0 0
      %1488 = vmatpush1.bf16.msra.mxu0 0
      %1489 = vmatprep.mubr.bf16.mxu0 %v1412
      %1490 = vmatmul.mubr.bf16.gmra.mrb[0].mxu0 %v1405
      %v1491 = vpop.f32.mrb[0].mxu0
      %v1492 = vadd.f32 %v1449, %v1491
      %v1493 = vpop.f32.mrb[0].mxu0
      %v1494 = vadd.f32 %v1451, %v1493
      %v1495 = vpop.f32.mrb[0].mxu0
      %v1496 = vadd.f32 %v1453, %v1495
      %v1497 = vpop.f32.mrb[0].mxu0
      %v1498 = vadd.f32 %v1455, %v1497
      %1499 = vdwg.mxu0
      %1500 = vmatprep.subr.bf16.mxu0 %v982
      %1501 = vmatpush1.bf16.msra.mxu0 %v981
      %1502 = vmatprep.subr.bf16.mxu0 %v984
      %1503 = vmatpush1.bf16.msra.mxu0 %v983
      %1504 = vmatprep.subr.bf16.mxu0 %v986
      %1505 = vmatpush1.bf16.msra.mxu0 %v985
      %1506 = vmatprep.subr.bf16.mxu0 %v1105
      %1507 = vmatpush1.bf16.msra.mxu0 %v1104
      %1508 = vmatprep.subr.bf16.mxu0 %v1107
      %1509 = vmatpush1.bf16.msra.mxu0 %v1106
      %1510 = vmatprep.subr.bf16.mxu0 %v1109
      %1511 = vmatpush1.bf16.msra.mxu0 %v1108
      %1512 = vmatprep.subr.bf16.mxu0 %v1145
      %1513 = vmatpush1.bf16.msra.mxu0 %v1144
      %1514 = vmatprep.subr.bf16.mxu0 %v1147
      %1515 = vmatpush1.bf16.msra.mxu0 %v1146
      %1516 = vmatprep.subr.bf16.mxu0 %v1149
      %1517 = vmatpush1.bf16.msra.mxu0 %v1148
      %1518 = vmatprep.subr.bf16.mxu0 %v1184
      %1519 = vmatpush1.bf16.msra.mxu0 %v1183
      %1520 = vmatprep.subr.bf16.mxu0 %v1186
      %1521 = vmatpush1.bf16.msra.mxu0 %v1185
      %1522 = vmatprep.subr.bf16.mxu0 %v1188
      %1523 = vmatpush1.bf16.msra.mxu0 %v1187
      %1524 = vmatprep.subr.bf16.mxu0 %v1214
      %1525 = vmatpush1.bf16.msra.mxu0 %v1213
      %1526 = vmatprep.subr.bf16.mxu0 %v1216
      %1527 = vmatpush1.bf16.msra.mxu0 %v1215
      %1528 = vmatprep.subr.bf16.mxu0 %v1218
      %1529 = vmatpush1.bf16.msra.mxu0 %v1217
      %1530 = vmatprep.subr.bf16.mxu0 %v1254
      %1531 = vmatpush1.bf16.msra.mxu0 %v1253
      %1532 = vmatprep.mubr.bf16.mxu0 %v1404
      %1533 = vmatmul.mubr.bf16.gmra.mrb[0].mxu0 %v1403
      %v1534 = vpop.f32.mrb[0].mxu0
      %v1535 = vadd.f32 %v1384, %v1534
      %v1536 = vpop.f32.mrb[0].mxu0
      %v1537 = vadd.f32 %v1384, %v1536
      %v1538 = vpop.f32.mrb[0].mxu0
      %v1539 = vadd.f32 %v1389, %v1538
      %v1540 = vpop.f32.mrb[0].mxu0
      %v1541 = vadd.f32 %v1389, %v1540
      %1542 = vdwg.mxu0
      %1543 = vmatprep.subr.bf16.mxu0 %v1256
      %1544 = vmatpush1.bf16.msra.mxu0 %v1255
      %1545 = vmatprep.subr.bf16.mxu0 %v1258
      %1546 = vmatpush1.bf16.msra.mxu0 %v1257
      %1547 = vmatprep.subr.bf16.mxu0 %v1293
      %1548 = vmatpush1.bf16.msra.mxu0 %v1292
      %1549 = vmatprep.subr.bf16.mxu0 %v1295
      %1550 = vmatpush1.bf16.msra.mxu0 %v1294
      %1551 = vmatprep.subr.bf16.mxu0 %v1297
      %1552 = vmatpush1.bf16.msra.mxu0 %v1296
      %1553 = vmatprep.subr.bf16.mxu0 %v1324
      %1554 = vmatpush1.bf16.msra.mxu0 %v1323
      %1555 = vmatprep.subr.bf16.mxu0 %v1326
      %1556 = vmatpush1.bf16.msra.mxu0 %v1325
      %1557 = vmatprep.subr.bf16.mxu0 %v1328
      %1558 = vmatpush1.bf16.msra.mxu0 %v1327
      %1559 = vmatprep.subr.bf16.mxu0 %v1364
      %1560 = vmatpush1.bf16.msra.mxu0 %v1363
      %1561 = vmatprep.subr.bf16.mxu0 %v1366
      %1562 = vmatpush1.bf16.msra.mxu0 %v1365
      %1563 = vmatprep.subr.bf16.mxu0 %v1368
      %1564 = vmatpush1.bf16.msra.mxu0 %v1367
      %1565 = vmatprep.subr.bf16.mxu0 0
      %1566 = vmatpush1.bf16.msra.mxu0 0
      %1567 = vmatprep.subr.bf16.mxu0 0
      %1568 = vmatpush1.bf16.msra.mxu0 0
      %1569 = vmatprep.subr.bf16.mxu0 0
      %1570 = vmatpush1.bf16.msra.mxu0 0
      %1571 = vmatprep.subr.bf16.mxu0 0
      %1572 = vmatpush1.bf16.msra.mxu0 0
      %1573 = vmatprep.subr.bf16.mxu0 0
      %1574 = vmatpush1.bf16.msra.mxu0 0
      %1575 = vmatprep.mubr.bf16.mxu0 %v1412
      %1576 = vmatmul.mubr.bf16.gmra.mrb[0].mxu0 %v1405
      %v1577 = vpop.f32.mrb[0].mxu0
      %v1578 = vadd.f32 %v1535, %v1577
      %v1579 = vpop.f32.mrb[0].mxu0
      %v1580 = vadd.f32 %v1537, %v1579
      %v1581 = vpop.f32.mrb[0].mxu0
      %v1582 = vadd.f32 %v1539, %v1581
      %v1583 = vpop.f32.mrb[0].mxu0
      %v1584 = vadd.f32 %v1541, %v1583
      %1585 = vdwg.mxu0
      %v1586 = vmax.f32 %v1492, 0.0
      %v1587 = vmax.f32 %v1494, 0.0
      %v1588 = vmax.f32 %v1578, 0.0
      %v1589 = vmax.f32 %v1580, 0.0
      %v1590 = vmax.f32 %v1496, 0.0
      %v1591 = vmax.f32 %v1498, 0.0
      %v1592 = vmax.f32 %v1582, 0.0
      %v1593 = vmax.f32 %v1584, 0.0
      %v1594 = vld [vmem:[%s4] sm:$0xff]
      %v1595 = vld [vmem:[%s4 + $0x8] sm:$0xff]
      %v1596 = vld [vmem:[%s5] sm:$0xff]
      %v1597 = vld [vmem:[%s5 + $0x8] sm:$0xff]
      %v1598 = vpack.c.bf16 %v1590, %v1586
      %v1599 = vpack.c.bf16 %v1591, %v1587
      %1602 = vrot.lane.b32.xlu0 %v1598, 17
      %v1603 = vpop.permute.xlu0 %1602
      %1604 = vrot.lane.b32.xlu0 %v1599, 17
      %v1605 = vpop.permute.xlu0 %1604
      %v1606 = vsel %vm494, %v1603, %v1605
      %v1609 = vsel %vm501, 0, %v1603
      %v1612 = vsel %vm501, %v1605, 0
      %v1614 = vmul.bf16 %v1609, %v440
      %v1615 = vmul.bf16 %v1606, %v441
      %v1616 = vmul.bf16 %v1609, %v530
      %v1617 = vmul.bf16 %v1606, %v534
      %v1618 = vmul.bf16 %v1612, %v532
      %v1619 = vmul.bf16 %v1609, %v550
      %v1620 = vmul.bf16 %v1606, %v554
      %v1621 = vmul.bf16 %v1612, %v552
      %v1622 = vmul.bf16 %v1609, %v568
      %v1623 = vmul.bf16 %v1606, %v572
      %v1624 = vmul.bf16 %v1612, %v570
      %v1625 = vmul.bf16 %v1609, %v586
      %v1626 = vmul.bf16 %v1606, %v590
      %v1627 = vmul.bf16 %v1612, %v588
      %v1628 = vmul.bf16 %v1609, %v604
      %v1629 = vmul.bf16 %v1606, %v608
      %v1630 = vmul.bf16 %v1612, %v606
      %1633 = vrot.lane.b32.xlu0 %v1609, 127
      %v1634 = vpop.permute.xlu0 %1633
      %1635 = vrot.lane.b32.xlu0 %v1606, 127
      %v1636 = vpop.permute.xlu0 %1635
      %1637 = vrot.lane.b32.xlu0 %v1612, 127
      %v1638 = vpop.permute.xlu0 %1637
      %v1639 = vsel %vm645, %v1634, %v1636
      %v1640 = vsel %vm645, %v1636, %v1638
      %1646 = vrot.lane.b32.xlu0 %v1616, 126
      %v1647 = vpop.permute.xlu0 %1646
      %1648 = vrot.lane.b32.xlu0 %v1617, 126
      %v1649 = vpop.permute.xlu0 %1648
      %1650 = vrot.lane.b32.xlu0 %v1618, 126
      %v1651 = vpop.permute.xlu0 %1650
      %v1652 = vsel %vm685, %v1647, %v1649
      %v1653 = vsel %vm685, %v1649, %v1651
      %1659 = vrot.lane.b32.xlu0 %v1619, 112
      %v1660 = vpop.permute.xlu0 %1659
      %1661 = vrot.lane.b32.xlu0 %v1620, 112
      %v1662 = vpop.permute.xlu0 %1661
      %1663 = vrot.lane.b32.xlu0 %v1621, 112
      %v1664 = vpop.permute.xlu0 %1663
      %v1665 = vsel %vm725, %v1660, %v1662
      %v1666 = vsel %vm725, %v1662, %v1664
      %1669 = vrot.lane.b32.xlu0 %v1609, 111
      %v1670 = vpop.permute.xlu0 %1669
      %1671 = vrot.lane.b32.xlu0 %v1606, 111
      %v1672 = vpop.permute.xlu0 %1671
      %1673 = vrot.lane.b32.xlu0 %v1612, 111
      %v1674 = vpop.permute.xlu0 %1673
      %v1675 = vsel %vm756, %v1670, %v1672
      %v1676 = vsel %vm756, %v1672, %v1674
      %1682 = vrot.lane.b32.xlu0 %v1622, 110
      %v1683 = vpop.permute.xlu0 %1682
      %1684 = vrot.lane.b32.xlu0 %v1623, 110
      %v1685 = vpop.permute.xlu0 %1684
      %1686 = vrot.lane.b32.xlu0 %v1624, 110
      %v1687 = vpop.permute.xlu0 %1686
      %v1688 = vsel %vm796, %v1683, %v1685
      %v1689 = vsel %vm796, %v1685, %v1687
      %1695 = vrot.lane.b32.xlu0 %v1625, 96
      %v1696 = vpop.permute.xlu0 %1695
      %1697 = vrot.lane.b32.xlu0 %v1626, 96
      %v1698 = vpop.permute.xlu0 %1697
      %1699 = vrot.lane.b32.xlu0 %v1627, 96
      %v1700 = vpop.permute.xlu0 %1699
      %v1701 = vsel %vm836, %v1696, %v1698
      %v1702 = vsel %vm836, %v1698, %v1700
      %1705 = vrot.lane.b32.xlu0 %v1609, 95
      %v1706 = vpop.permute.xlu0 %1705
      %1707 = vrot.lane.b32.xlu0 %v1606, 95
      %v1708 = vpop.permute.xlu0 %1707
      %1709 = vrot.lane.b32.xlu0 %v1612, 95
      %v1710 = vpop.permute.xlu0 %1709
      %v1711 = vsel %vm867, %v1706, %v1708
      %v1712 = vsel %vm867, %v1708, %v1710
      %1718 = vrot.lane.b32.xlu0 %v1628, 94
      %v1719 = vpop.permute.xlu0 %1718
      %1720 = vrot.lane.b32.xlu0 %v1629, 94
      %v1721 = vpop.permute.xlu0 %1720
      %1722 = vrot.lane.b32.xlu0 %v1630, 94
      %v1723 = vpop.permute.xlu0 %1722
      %v1724 = vsel %vm907, %v1719, %v1721
      %v1725 = vsel %vm907, %v1721, %v1723
      %v1728 = vpack.c.bf16 %v1592, %v1588
      %v1729 = vpack.c.bf16 %v1593, %v1589
      %1732 = vrot.lane.b32.xlu0 %v1728, 34
      %v1733 = vpop.permute.xlu0 %1732
      %1734 = vrot.lane.b32.xlu0 %v1729, 34
      %v1735 = vpop.permute.xlu0 %1734
      %v1736 = vsel %vm607, %v1733, %v1735
      %v1739 = vsel %vm962, 0, %v1733
      %v1742 = vsel %vm962, %v1735, 0
      %v1744 = vmul.bf16 %v1739, %v456
      %v1745 = vmul.bf16 %v1736, %v457
      %v1746 = vmul.bf16 %v1739, %v990
      %v1747 = vmul.bf16 %v1736, %v994
      %v1748 = vmul.bf16 %v1742, %v992
      %v1749 = vmul.bf16 %v1739, %v1010
      %v1750 = vmul.bf16 %v1736, %v1013
      %v1751 = vmul.bf16 %v1742, %v1012
      %v1752 = vmul.bf16 %v1739, %v1027
      %v1753 = vmul.bf16 %v1736, %v1031
      %v1754 = vmul.bf16 %v1742, %v1029
      %v1755 = vmul.bf16 %v1739, %v1045
      %v1756 = vmul.bf16 %v1736, %v1049
      %v1757 = vmul.bf16 %v1742, %v1047
      %v1758 = vmul.bf16 %v1739, %v1063
      %v1759 = vmul.bf16 %v1736, %v1067
      %v1760 = vmul.bf16 %v1742, %v1065
      %1763 = vrot.lane.b32.xlu0 %v1739, 126
      %v1764 = vpop.permute.xlu0 %1763
      %1765 = vrot.lane.b32.xlu0 %v1736, 126
      %v1766 = vpop.permute.xlu0 %1765
      %1767 = vrot.lane.b32.xlu0 %v1742, 126
      %v1768 = vpop.permute.xlu0 %1767
      %v1769 = vsel %vm685, %v1764, %v1766
      %v1770 = vsel %vm685, %v1766, %v1768
      %1776 = vrot.lane.b32.xlu0 %v1746, 124
      %v1777 = vpop.permute.xlu0 %1776
      %1778 = vrot.lane.b32.xlu0 %v1747, 124
      %v1779 = vpop.permute.xlu0 %1778
      %1780 = vrot.lane.b32.xlu0 %v1748, 124
      %v1781 = vpop.permute.xlu0 %1780
      %v1782 = vsel %vm1143, %v1777, %v1779
      %v1783 = vsel %vm1143, %v1779, %v1781
      %1789 = vrot.lane.b32.xlu0 %v1749, 96
      %v1790 = vpop.permute.xlu0 %1789
      %1791 = vrot.lane.b32.xlu0 %v1750, 96
      %v1792 = vpop.permute.xlu0 %1791
      %1793 = vrot.lane.b32.xlu0 %v1751, 96
      %v1794 = vpop.permute.xlu0 %1793
      %v1795 = vsel %vm836, %v1790, %v1792
      %v1796 = vsel %vm836, %v1792, %v1794
      %1799 = vrot.lane.b32.xlu0 %v1739, 94
      %v1800 = vpop.permute.xlu0 %1799
      %1801 = vrot.lane.b32.xlu0 %v1736, 94
      %v1802 = vpop.permute.xlu0 %1801
      %1803 = vrot.lane.b32.xlu0 %v1742, 94
      %v1804 = vpop.permute.xlu0 %1803
      %v1805 = vsel %vm907, %v1800, %v1802
      %v1806 = vsel %vm907, %v1802, %v1804
      %1812 = vrot.lane.b32.xlu0 %v1752, 92
      %v1813 = vpop.permute.xlu0 %1812
      %1814 = vrot.lane.b32.xlu0 %v1753, 92
      %v1815 = vpop.permute.xlu0 %1814
      %1816 = vrot.lane.b32.xlu0 %v1754, 92
      %v1817 = vpop.permute.xlu0 %1816
      %v1818 = vsel %vm1252, %v1813, %v1815
      %v1819 = vsel %vm1252, %v1815, %v1817
      %1825 = vrot.lane.b32.xlu0 %v1755, 64
      %v1826 = vpop.permute.xlu0 %1825
      %1827 = vrot.lane.b32.xlu0 %v1756, 64
      %v1828 = vpop.permute.xlu0 %1827
      %1829 = vrot.lane.b32.xlu0 %v1757, 64
      %v1830 = vpop.permute.xlu0 %1829
      %v1831 = vsel %vm1048, %v1826, %v1828
      %v1832 = vsel %vm1048, %v1828, %v1830
      %1835 = vrot.lane.b32.xlu0 %v1739, 62
      %v1836 = vpop.permute.xlu0 %1835
      %1837 = vrot.lane.b32.xlu0 %v1736, 62
      %v1838 = vpop.permute.xlu0 %1837
      %1839 = vrot.lane.b32.xlu0 %v1742, 62
      %v1840 = vpop.permute.xlu0 %1839
      %v1841 = vsel %vm1322, %v1836, %v1838
      %v1842 = vsel %vm1322, %v1838, %v1840
      %1848 = vrot.lane.b32.xlu0 %v1758, 60
      %v1849 = vpop.permute.xlu0 %1848
      %1850 = vrot.lane.b32.xlu0 %v1759, 60
      %v1851 = vpop.permute.xlu0 %1850
      %1852 = vrot.lane.b32.xlu0 %v1760, 60
      %v1853 = vpop.permute.xlu0 %1852
      %v1854 = vsel %vm1362, %v1849, %v1851
      %v1855 = vsel %vm1362, %v1851, %v1853
      %1859 = vset.pattern.permute.xlu0 0
      %1860 = vperm.xlu0 %1859, %v1596
      %v1861 = vpop.permute.xlu0 %1860
      %1864 = vset.pattern.permute.xlu0 0
      %1865 = vperm.xlu0 %1864, %v1597
      %v1866 = vpop.permute.xlu0 %1865
      %v1870 = vunpack.c.l.b16 %v1594
      %v1871 = vunpack.c.h.b16 %v1594
      %v1872 = vunpack.c.l.b16 %v1595
      %v1873 = vunpack.c.h.b16 %v1595
      %v1874 = vpack.c.b16 %v1872, %v1870
      %v1875 = vpack.c.b16 %v1873, %v1871
      %vm1877 = vcmask 130048
      %v1879 = vsel %vm1877, %v1875, 0
      %1881 = vmatprep.subr.bf16.mxu0 %v1615
      %1882 = vmatpush1.bf16.msra.mxu0 %v1614
      %1883 = vmatprep.subr.bf16.mxu0 %v1640
      %1884 = vmatpush1.bf16.msra.mxu0 %v1639
      %1885 = vmatprep.subr.bf16.mxu0 %v1653
      %1886 = vmatpush1.bf16.msra.mxu0 %v1652
      %1887 = vmatprep.subr.bf16.mxu0 %v1666
      %1888 = vmatpush1.bf16.msra.mxu0 %v1665
      %1889 = vmatprep.subr.bf16.mxu0 %v1676
      %1890 = vmatpush1.bf16.msra.mxu0 %v1675
      %1891 = vmatprep.subr.bf16.mxu0 %v1689
      %1892 = vmatpush1.bf16.msra.mxu0 %v1688
      %1893 = vmatprep.subr.bf16.mxu0 %v1702
      %1894 = vmatpush1.bf16.msra.mxu0 %v1701
      %1895 = vmatprep.subr.bf16.mxu0 %v1712
      %1896 = vmatpush1.bf16.msra.mxu0 %v1711
      %1897 = vmatprep.subr.bf16.mxu0 %v1725
      %1898 = vmatpush1.bf16.msra.mxu0 %v1724
      %1899 = vmatprep.subr.bf16.mxu0 0
      %1900 = vmatpush1.bf16.msra.mxu0 0
      %1901 = vmatprep.subr.bf16.mxu0 0
      %1902 = vmatpush1.bf16.msra.mxu0 0
      %1903 = vmatprep.subr.bf16.mxu0 0
      %1904 = vmatpush1.bf16.msra.mxu0 0
      %1905 = vmatprep.subr.bf16.mxu0 0
      %1906 = vmatpush1.bf16.msra.mxu0 0
      %1907 = vmatprep.subr.bf16.mxu0 0
      %1908 = vmatpush1.bf16.msra.mxu0 0
      %1909 = vmatprep.subr.bf16.mxu0 0
      %1910 = vmatpush1.bf16.msra.mxu0 0
      %1911 = vmatprep.subr.bf16.mxu0 0
      %1912 = vmatpush1.bf16.msra.mxu0 0
      %1913 = vmatprep.mubr.bf16.mxu0 %v1879
      %1914 = vmatmul.mubr.bf16.gmra.mrb[0].mxu0 %v1874
      %v1915 = vpop.f32.mrb[0].mxu0
      %v1916 = vadd.f32 %v1861, %v1915
      %v1917 = vpop.f32.mrb[0].mxu0
      %v1918 = vadd.f32 %v1861, %v1917
      %v1919 = vpop.f32.mrb[0].mxu0
      %v1920 = vadd.f32 %v1866, %v1919
      %v1921 = vpop.f32.mrb[0].mxu0
      %v1922 = vadd.f32 %v1866, %v1921
      %1923 = vdwg.mxu0
      %1924 = vmatprep.subr.bf16.mxu0 %v1745
      %1925 = vmatpush1.bf16.msra.mxu0 %v1744
      %1926 = vmatprep.subr.bf16.mxu0 %v1770
      %1927 = vmatpush1.bf16.msra.mxu0 %v1769
      %1928 = vmatprep.subr.bf16.mxu0 %v1783
      %1929 = vmatpush1.bf16.msra.mxu0 %v1782
      %1930 = vmatprep.subr.bf16.mxu0 %v1796
      %1931 = vmatpush1.bf16.msra.mxu0 %v1795
      %1932 = vmatprep.subr.bf16.mxu0 %v1806
      %1933 = vmatpush1.bf16.msra.mxu0 %v1805
      %1934 = vmatprep.subr.bf16.mxu0 %v1819
      %1935 = vmatpush1.bf16.msra.mxu0 %v1818
      %1936 = vmatprep.subr.bf16.mxu0 %v1832
      %1937 = vmatpush1.bf16.msra.mxu0 %v1831
      %1938 = vmatprep.subr.bf16.mxu0 %v1842
      %1939 = vmatpush1.bf16.msra.mxu0 %v1841
      %1940 = vmatprep.subr.bf16.mxu0 %v1855
      %1941 = vmatpush1.bf16.msra.mxu0 %v1854
      %1942 = vmatprep.subr.bf16.mxu0 0
      %1943 = vmatpush1.bf16.msra.mxu0 0
      %1944 = vmatprep.subr.bf16.mxu0 0
      %1945 = vmatpush1.bf16.msra.mxu0 0
      %1946 = vmatprep.subr.bf16.mxu0 0
      %1947 = vmatpush1.bf16.msra.mxu0 0
      %1948 = vmatprep.subr.bf16.mxu0 0
      %1949 = vmatpush1.bf16.msra.mxu0 0
      %1950 = vmatprep.subr.bf16.mxu0 0
      %1951 = vmatpush1.bf16.msra.mxu0 0
      %1952 = vmatprep.subr.bf16.mxu0 0
      %1953 = vmatpush1.bf16.msra.mxu0 0
      %1954 = vmatprep.subr.bf16.mxu0 0
      %1955 = vmatpush1.bf16.msra.mxu0 0
      %1956 = vmatprep.mubr.bf16.mxu0 %v1879
      %1957 = vmatmul.mubr.bf16.gmra.mrb[0].mxu0 %v1874
      %v1958 = vpop.f32.mrb[0].mxu0
      %v1959 = vadd.f32 %v1861, %v1958
      %v1960 = vpop.f32.mrb[0].mxu0
      %v1961 = vadd.f32 %v1861, %v1960
      %v1962 = vpop.f32.mrb[0].mxu0
      %v1963 = vadd.f32 %v1866, %v1962
      %v1964 = vpop.f32.mrb[0].mxu0
      %v1965 = vadd.f32 %v1866, %v1964
      %1966 = vdwg.mxu0
      %v1967 = vmax.f32 %v1916, 0.0
      %v1968 = vmax.f32 %v1918, 0.0
      %v1969 = vmax.f32 %v1959, 0.0
      %v1970 = vmax.f32 %v1961, 0.0
      %v1971 = vmax.f32 %v1920, 0.0
      %v1972 = vmax.f32 %v1922, 0.0
      %v1973 = vmax.f32 %v1963, 0.0
      %v1974 = vmax.f32 %v1965, 0.0
      %s1975 = scalar_lea.vmem %s4, 16
      %v1976 = vld [vmem:[%s1975] sm:$0xff]
      %v1977 = vld [vmem:[%s1975 + $0x8] sm:$0xff]
      %s1978 = scalar_lea.vmem %s5, 16
      %v1979 = vld [vmem:[%s1978] sm:$0xff]
      %v1980 = vld [vmem:[%s1978 + $0x8] sm:$0xff]
      %v1981 = vpack.c.bf16 %v1971, %v1967
      %v1982 = vpack.c.bf16 %v1972, %v1968
      %1985 = vrot.lane.b32.xlu0 %v1981, 17
      %v1986 = vpop.permute.xlu0 %1985
      %1987 = vrot.lane.b32.xlu0 %v1982, 17
      %v1988 = vpop.permute.xlu0 %1987
      %v1989 = vsel %vm494, %v1986, %v1988
      %v1992 = vsel %vm501, 0, %v1986
      %v1995 = vsel %vm501, %v1988, 0
      %v1997 = vmul.bf16 %v1992, %v440
      %v1998 = vmul.bf16 %v1989, %v441
      %v1999 = vmul.bf16 %v1992, %v530
      %v2000 = vmul.bf16 %v1989, %v534
      %v2001 = vmul.bf16 %v1995, %v532
      %v2002 = vmul.bf16 %v1992, %v550
      %v2003 = vmul.bf16 %v1989, %v554
      %v2004 = vmul.bf16 %v1995, %v552
      %v2005 = vmul.bf16 %v1992, %v568
      %v2006 = vmul.bf16 %v1989, %v572
      %v2007 = vmul.bf16 %v1995, %v570
      %v2008 = vmul.bf16 %v1992, %v586
      %v2009 = vmul.bf16 %v1989, %v590
      %v2010 = vmul.bf16 %v1995, %v588
      %v2011 = vmul.bf16 %v1992, %v604
      %v2012 = vmul.bf16 %v1989, %v608
      %v2013 = vmul.bf16 %v1995, %v606
      %2016 = vrot.lane.b32.xlu0 %v1992, 127
      %v2017 = vpop.permute.xlu0 %2016
      %2018 = vrot.lane.b32.xlu0 %v1989, 127
      %v2019 = vpop.permute.xlu0 %2018
      %2020 = vrot.lane.b32.xlu0 %v1995, 127
      %v2021 = vpop.permute.xlu0 %2020
      %v2022 = vsel %vm645, %v2017, %v2019
      %v2023 = vsel %vm645, %v2019, %v2021
      %2029 = vrot.lane.b32.xlu0 %v1999, 126
      %v2030 = vpop.permute.xlu0 %2029
      %2031 = vrot.lane.b32.xlu0 %v2000, 126
      %v2032 = vpop.permute.xlu0 %2031
      %2033 = vrot.lane.b32.xlu0 %v2001, 126
      %v2034 = vpop.permute.xlu0 %2033
      %v2035 = vsel %vm685, %v2030, %v2032
      %v2036 = vsel %vm685, %v2032, %v2034
      %2042 = vrot.lane.b32.xlu0 %v2002, 112
      %v2043 = vpop.permute.xlu0 %2042
      %2044 = vrot.lane.b32.xlu0 %v2003, 112
      %v2045 = vpop.permute.xlu0 %2044
      %2046 = vrot.lane.b32.xlu0 %v2004, 112
      %v2047 = vpop.permute.xlu0 %2046
      %v2048 = vsel %vm725, %v2043, %v2045
      %v2049 = vsel %vm725, %v2045, %v2047
      %2052 = vrot.lane.b32.xlu0 %v1992, 111
      %v2053 = vpop.permute.xlu0 %2052
      %2054 = vrot.lane.b32.xlu0 %v1989, 111
      %v2055 = vpop.permute.xlu0 %2054
      %2056 = vrot.lane.b32.xlu0 %v1995, 111
      %v2057 = vpop.permute.xlu0 %2056
      %v2058 = vsel %vm756, %v2053, %v2055
      %v2059 = vsel %vm756, %v2055, %v2057
      %2065 = vrot.lane.b32.xlu0 %v2005, 110
      %v2066 = vpop.permute.xlu0 %2065
      %2067 = vrot.lane.b32.xlu0 %v2006, 110
      %v2068 = vpop.permute.xlu0 %2067
      %2069 = vrot.lane.b32.xlu0 %v2007, 110
      %v2070 = vpop.permute.xlu0 %2069
      %v2071 = vsel %vm796, %v2066, %v2068
      %v2072 = vsel %vm796, %v2068, %v2070
      %2078 = vrot.lane.b32.xlu0 %v2008, 96
      %v2079 = vpop.permute.xlu0 %2078
      %2080 = vrot.lane.b32.xlu0 %v2009, 96
      %v2081 = vpop.permute.xlu0 %2080
      %2082 = vrot.lane.b32.xlu0 %v2010, 96
      %v2083 = vpop.permute.xlu0 %2082
      %v2084 = vsel %vm836, %v2079, %v2081
      %v2085 = vsel %vm836, %v2081, %v2083
      %2088 = vrot.lane.b32.xlu0 %v1992, 95
      %v2089 = vpop.permute.xlu0 %2088
      %2090 = vrot.lane.b32.xlu0 %v1989, 95
      %v2091 = vpop.permute.xlu0 %2090
      %2092 = vrot.lane.b32.xlu0 %v1995, 95
      %v2093 = vpop.permute.xlu0 %2092
      %v2094 = vsel %vm867, %v2089, %v2091
      %v2095 = vsel %vm867, %v2091, %v2093
      %2101 = vrot.lane.b32.xlu0 %v2011, 94
      %v2102 = vpop.permute.xlu0 %2101
      %2103 = vrot.lane.b32.xlu0 %v2012, 94
      %v2104 = vpop.permute.xlu0 %2103
      %2105 = vrot.lane.b32.xlu0 %v2013, 94
      %v2106 = vpop.permute.xlu0 %2105
      %v2107 = vsel %vm907, %v2102, %v2104
      %v2108 = vsel %vm907, %v2104, %v2106
      %v2111 = vpack.c.bf16 %v1973, %v1969
      %v2112 = vpack.c.bf16 %v1974, %v1970
      %2115 = vrot.lane.b32.xlu0 %v2111, 34
      %v2116 = vpop.permute.xlu0 %2115
      %2117 = vrot.lane.b32.xlu0 %v2112, 34
      %v2118 = vpop.permute.xlu0 %2117
      %v2119 = vsel %vm607, %v2116, %v2118
      %v2122 = vsel %vm962, 0, %v2116
      %v2125 = vsel %vm962, %v2118, 0
      %v2127 = vmul.bf16 %v2122, %v456
      %v2128 = vmul.bf16 %v2119, %v457
      %v2129 = vmul.bf16 %v2122, %v990
      %v2130 = vmul.bf16 %v2119, %v994
      %v2131 = vmul.bf16 %v2125, %v992
      %v2132 = vmul.bf16 %v2122, %v1010
      %v2133 = vmul.bf16 %v2119, %v1013
      %v2134 = vmul.bf16 %v2125, %v1012
      %v2135 = vmul.bf16 %v2122, %v1027
      %v2136 = vmul.bf16 %v2119, %v1031
      %v2137 = vmul.bf16 %v2125, %v1029
      %v2138 = vmul.bf16 %v2122, %v1045
      %v2139 = vmul.bf16 %v2119, %v1049
      %v2140 = vmul.bf16 %v2125, %v1047
      %v2141 = vmul.bf16 %v2122, %v1063
      %v2142 = vmul.bf16 %v2119, %v1067
      %v2143 = vmul.bf16 %v2125, %v1065
      %2146 = vrot.lane.b32.xlu0 %v2122, 126
      %v2147 = vpop.permute.xlu0 %2146
      %2148 = vrot.lane.b32.xlu0 %v2119, 126
      %v2149 = vpop.permute.xlu0 %2148
      %2150 = vrot.lane.b32.xlu0 %v2125, 126
      %v2151 = vpop.permute.xlu0 %2150
      %v2152 = vsel %vm685, %v2147, %v2149
      %v2153 = vsel %vm685, %v2149, %v2151
      %2159 = vrot.lane.b32.xlu0 %v2129, 124
      %v2160 = vpop.permute.xlu0 %2159
      %2161 = vrot.lane.b32.xlu0 %v2130, 124
      %v2162 = vpop.permute.xlu0 %2161
      %2163 = vrot.lane.b32.xlu0 %v2131, 124
      %v2164 = vpop.permute.xlu0 %2163
      %v2165 = vsel %vm1143, %v2160, %v2162
      %v2166 = vsel %vm1143, %v2162, %v2164
      %2172 = vrot.lane.b32.xlu0 %v2132, 96
      %v2173 = vpop.permute.xlu0 %2172
      %2174 = vrot.lane.b32.xlu0 %v2133, 96
      %v2175 = vpop.permute.xlu0 %2174
      %2176 = vrot.lane.b32.xlu0 %v2134, 96
      %v2177 = vpop.permute.xlu0 %2176
      %v2178 = vsel %vm836, %v2173, %v2175
      %v2179 = vsel %vm836, %v2175, %v2177
      %2182 = vrot.lane.b32.xlu0 %v2122, 94
      %v2183 = vpop.permute.xlu0 %2182
      %2184 = vrot.lane.b32.xlu0 %v2119, 94
      %v2185 = vpop.permute.xlu0 %2184
      %2186 = vrot.lane.b32.xlu0 %v2125, 94
      %v2187 = vpop.permute.xlu0 %2186
      %v2188 = vsel %vm907, %v2183, %v2185
      %v2189 = vsel %vm907, %v2185, %v2187
      %2195 = vrot.lane.b32.xlu0 %v2135, 92
      %v2196 = vpop.permute.xlu0 %2195
      %2197 = vrot.lane.b32.xlu0 %v2136, 92
      %v2198 = vpop.permute.xlu0 %2197
      %2199 = vrot.lane.b32.xlu0 %v2137, 92
      %v2200 = vpop.permute.xlu0 %2199
      %v2201 = vsel %vm1252, %v2196, %v2198
      %v2202 = vsel %vm1252, %v2198, %v2200
      %2208 = vrot.lane.b32.xlu0 %v2138, 64
      %v2209 = vpop.permute.xlu0 %2208
      %2210 = vrot.lane.b32.xlu0 %v2139, 64
      %v2211 = vpop.permute.xlu0 %2210
      %2212 = vrot.lane.b32.xlu0 %v2140, 64
      %v2213 = vpop.permute.xlu0 %2212
      %v2214 = vsel %vm1048, %v2209, %v2211
      %v2215 = vsel %vm1048, %v2211, %v2213
      %2218 = vrot.lane.b32.xlu0 %v2122, 62
      %v2219 = vpop.permute.xlu0 %2218
      %2220 = vrot.lane.b32.xlu0 %v2119, 62
      %v2221 = vpop.permute.xlu0 %2220
      %2222 = vrot.lane.b32.xlu0 %v2125, 62
      %v2223 = vpop.permute.xlu0 %2222
      %v2224 = vsel %vm1322, %v2219, %v2221
      %v2225 = vsel %vm1322, %v2221, %v2223
      %2231 = vrot.lane.b32.xlu0 %v2141, 60
      %v2232 = vpop.permute.xlu0 %2231
      %2233 = vrot.lane.b32.xlu0 %v2142, 60
      %v2234 = vpop.permute.xlu0 %2233
      %2235 = vrot.lane.b32.xlu0 %v2143, 60
      %v2236 = vpop.permute.xlu0 %2235
      %v2237 = vsel %vm1362, %v2232, %v2234
      %v2238 = vsel %vm1362, %v2234, %v2236
      %2242 = vset.pattern.permute.xlu0 0
      %2243 = vperm.xlu0 %2242, %v1979
      %v2244 = vpop.permute.xlu0 %2243
      %2247 = vset.pattern.permute.xlu0 0
      %2248 = vperm.xlu0 %2247, %v1980
      %v2249 = vpop.permute.xlu0 %2248
      %v2253 = vunpack.c.l.b16 %v1976
      %v2254 = vunpack.c.h.b16 %v1976
      %v2255 = vunpack.c.l.b16 %v1977
      %v2256 = vunpack.c.h.b16 %v1977
      %v2257 = vpack.c.b16 %v2255, %v2253
      %v2258 = vpack.c.b16 %v2256, %v2254
      %v2261 = vsel %vm1877, %v2258, 0
      %2263 = vmatprep.subr.bf16.mxu0 %v1998
      %2264 = vmatpush1.bf16.msra.mxu0 %v1997
      %2265 = vmatprep.subr.bf16.mxu0 %v2023
      %2266 = vmatpush1.bf16.msra.mxu0 %v2022
      %2267 = vmatprep.subr.bf16.mxu0 %v2036
      %2268 = vmatpush1.bf16.msra.mxu0 %v2035
      %2269 = vmatprep.subr.bf16.mxu0 %v2049
      %2270 = vmatpush1.bf16.msra.mxu0 %v2048
      %2271 = vmatprep.subr.bf16.mxu0 %v2059
      %2272 = vmatpush1.bf16.msra.mxu0 %v2058
      %2273 = vmatprep.subr.bf16.mxu0 %v2072
      %2274 = vmatpush1.bf16.msra.mxu0 %v2071
      %2275 = vmatprep.subr.bf16.mxu0 %v2085
      %2276 = vmatpush1.bf16.msra.mxu0 %v2084
      %2277 = vmatprep.subr.bf16.mxu0 %v2095
      %2278 = vmatpush1.bf16.msra.mxu0 %v2094
      %2279 = vmatprep.subr.bf16.mxu0 %v2108
      %2280 = vmatpush1.bf16.msra.mxu0 %v2107
      %2281 = vmatprep.subr.bf16.mxu0 0
      %2282 = vmatpush1.bf16.msra.mxu0 0
      %2283 = vmatprep.subr.bf16.mxu0 0
      %2284 = vmatpush1.bf16.msra.mxu0 0
      %2285 = vmatprep.subr.bf16.mxu0 0
      %2286 = vmatpush1.bf16.msra.mxu0 0
      %2287 = vmatprep.subr.bf16.mxu0 0
      %2288 = vmatpush1.bf16.msra.mxu0 0
      %2289 = vmatprep.subr.bf16.mxu0 0
      %2290 = vmatpush1.bf16.msra.mxu0 0
      %2291 = vmatprep.subr.bf16.mxu0 0
      %2292 = vmatpush1.bf16.msra.mxu0 0
      %2293 = vmatprep.subr.bf16.mxu0 0
      %2294 = vmatpush1.bf16.msra.mxu0 0
      %2295 = vmatprep.mubr.bf16.mxu0 %v2261
      %2296 = vmatmul.mubr.bf16.gmra.mrb[0].mxu0 %v2257
      %v2297 = vpop.f32.mrb[0].mxu0
      %v2298 = vadd.f32 %v2244, %v2297
      %v2299 = vpop.f32.mrb[0].mxu0
      %v2300 = vadd.f32 %v2244, %v2299
      %v2301 = vpop.f32.mrb[0].mxu0
      %v2302 = vadd.f32 %v2249, %v2301
      %v2303 = vpop.f32.mrb[0].mxu0
      %v2304 = vadd.f32 %v2249, %v2303
      %2305 = vdwg.mxu0
      %2306 = vmatprep.subr.bf16.mxu0 %v2128
      %2307 = vmatpush1.bf16.msra.mxu0 %v2127
      %2308 = vmatprep.subr.bf16.mxu0 %v2153
      %2309 = vmatpush1.bf16.msra.mxu0 %v2152
      %2310 = vmatprep.subr.bf16.mxu0 %v2166
      %2311 = vmatpush1.bf16.msra.mxu0 %v2165
      %2312 = vmatprep.subr.bf16.mxu0 %v2179
      %2313 = vmatpush1.bf16.msra.mxu0 %v2178
      %2314 = vmatprep.subr.bf16.mxu0 %v2189
      %2315 = vmatpush1.bf16.msra.mxu0 %v2188
      %2316 = vmatprep.subr.bf16.mxu0 %v2202
      %2317 = vmatpush1.bf16.msra.mxu0 %v2201
      %2318 = vmatprep.subr.bf16.mxu0 %v2215
      %2319 = vmatpush1.bf16.msra.mxu0 %v2214
      %2320 = vmatprep.subr.bf16.mxu0 %v2225
      %2321 = vmatpush1.bf16.msra.mxu0 %v2224
      %2322 = vmatprep.subr.bf16.mxu0 %v2238
      %2323 = vmatpush1.bf16.msra.mxu0 %v2237
      %2324 = vmatprep.subr.bf16.mxu0 0
      %2325 = vmatpush1.bf16.msra.mxu0 0
      %2326 = vmatprep.subr.bf16.mxu0 0
      %2327 = vmatpush1.bf16.msra.mxu0 0
      %2328 = vmatprep.subr.bf16.mxu0 0
      %2329 = vmatpush1.bf16.msra.mxu0 0
      %2330 = vmatprep.subr.bf16.mxu0 0
      %2331 = vmatpush1.bf16.msra.mxu0 0
      %2332 = vmatprep.subr.bf16.mxu0 0
      %2333 = vmatpush1.bf16.msra.mxu0 0
      %2334 = vmatprep.subr.bf16.mxu0 0
      %2335 = vmatpush1.bf16.msra.mxu0 0
      %2336 = vmatprep.subr.bf16.mxu0 0
      %2337 = vmatpush1.bf16.msra.mxu0 0
      %2338 = vmatprep.mubr.bf16.mxu0 %v2261
      %2339 = vmatmul.mubr.bf16.gmra.mrb[0].mxu0 %v2257
      %v2340 = vpop.f32.mrb[0].mxu0
      %v2341 = vadd.f32 %v2244, %v2340
      %v2342 = vpop.f32.mrb[0].mxu0
      %v2343 = vadd.f32 %v2244, %v2342
      %v2344 = vpop.f32.mrb[0].mxu0
      %v2345 = vadd.f32 %v2249, %v2344
      %v2346 = vpop.f32.mrb[0].mxu0
      %v2347 = vadd.f32 %v2249, %v2346
      %2348 = vdwg.mxu0
      %v2349 = vadd.f32 %v2298, %v1586
      %v2350 = vadd.f32 %v2300, %v1587
      %v2351 = vadd.f32 %v2341, %v1588
      %v2352 = vadd.f32 %v2343, %v1589
      %v2353 = vadd.f32 %v2302, %v1590
      %v2354 = vadd.f32 %v2304, %v1591
      %v2355 = vadd.f32 %v2345, %v1592
      %v2356 = vadd.f32 %v2347, %v1593
      %s2357 = scalar_lea.vmem %s4, 32
      %v2358 = vld [vmem:[%s2357] sm:$0xff]
      %v2359 = vld [vmem:[%s2357 + $0x8] sm:$0xff]
      %s2360 = scalar_lea.vmem %s5, 32
      %v2361 = vld [vmem:[%s2360] sm:$0xff]
      %v2362 = vld [vmem:[%s2360 + $0x8] sm:$0xff]
      %v2363 = vpack.c.bf16 %v2353, %v2349
      %v2364 = vpack.c.bf16 %v2354, %v2350
      %2367 = vrot.lane.b32.xlu0 %v2363, 17
      %v2368 = vpop.permute.xlu0 %2367
      %2369 = vrot.lane.b32.xlu0 %v2364, 17
      %v2370 = vpop.permute.xlu0 %2369
      %v2371 = vsel %vm494, %v2368, %v2370
      %v2374 = vsel %vm501, 0, %v2368
      %v2377 = vsel %vm501, %v2370, 0
      %v2379 = vmul.bf16 %v2374, %v440
      %v2380 = vmul.bf16 %v2371, %v441
      %v2381 = vmul.bf16 %v2374, %v530
      %v2382 = vmul.bf16 %v2371, %v534
      %v2383 = vmul.bf16 %v2377, %v532
      %v2384 = vmul.bf16 %v2374, %v550
      %v2385 = vmul.bf16 %v2371, %v554
      %v2386 = vmul.bf16 %v2377, %v552
      %v2387 = vmul.bf16 %v2374, %v568
      %v2388 = vmul.bf16 %v2371, %v572
      %v2389 = vmul.bf16 %v2377, %v570
      %v2390 = vmul.bf16 %v2374, %v586
      %v2391 = vmul.bf16 %v2371, %v590
      %v2392 = vmul.bf16 %v2377, %v588
      %v2393 = vmul.bf16 %v2374, %v604
      %v2394 = vmul.bf16 %v2371, %v608
      %v2395 = vmul.bf16 %v2377, %v606
      %2398 = vrot.lane.b32.xlu0 %v2374, 127
      %v2399 = vpop.permute.xlu0 %2398
      %2400 = vrot.lane.b32.xlu0 %v2371, 127
      %v2401 = vpop.permute.xlu0 %2400
      %2402 = vrot.lane.b32.xlu0 %v2377, 127
      %v2403 = vpop.permute.xlu0 %2402
      %v2404 = vsel %vm645, %v2399, %v2401
      %v2405 = vsel %vm645, %v2401, %v2403
      %2411 = vrot.lane.b32.xlu0 %v2381, 126
      %v2412 = vpop.permute.xlu0 %2411
      %2413 = vrot.lane.b32.xlu0 %v2382, 126
      %v2414 = vpop.permute.xlu0 %2413
      %2415 = vrot.lane.b32.xlu0 %v2383, 126
      %v2416 = vpop.permute.xlu0 %2415
      %v2417 = vsel %vm685, %v2412, %v2414
      %v2418 = vsel %vm685, %v2414, %v2416
      %2424 = vrot.lane.b32.xlu0 %v2384, 112
      %v2425 = vpop.permute.xlu0 %2424
      %2426 = vrot.lane.b32.xlu0 %v2385, 112
      %v2427 = vpop.permute.xlu0 %2426
      %2428 = vrot.lane.b32.xlu0 %v2386, 112
      %v2429 = vpop.permute.xlu0 %2428
      %v2430 = vsel %vm725, %v2425, %v2427
      %v2431 = vsel %vm725, %v2427, %v2429
      %2434 = vrot.lane.b32.xlu0 %v2374, 111
      %v2435 = vpop.permute.xlu0 %2434
      %2436 = vrot.lane.b32.xlu0 %v2371, 111
      %v2437 = vpop.permute.xlu0 %2436
      %2438 = vrot.lane.b32.xlu0 %v2377, 111
      %v2439 = vpop.permute.xlu0 %2438
      %v2440 = vsel %vm756, %v2435, %v2437
      %v2441 = vsel %vm756, %v2437, %v2439
      %2447 = vrot.lane.b32.xlu0 %v2387, 110
      %v2448 = vpop.permute.xlu0 %2447
      %2449 = vrot.lane.b32.xlu0 %v2388, 110
      %v2450 = vpop.permute.xlu0 %2449
      %2451 = vrot.lane.b32.xlu0 %v2389, 110
      %v2452 = vpop.permute.xlu0 %2451
      %v2453 = vsel %vm796, %v2448, %v2450
      %v2454 = vsel %vm796, %v2450, %v2452
      %2460 = vrot.lane.b32.xlu0 %v2390, 96
      %v2461 = vpop.permute.xlu0 %2460
      %2462 = vrot.lane.b32.xlu0 %v2391, 96
      %v2463 = vpop.permute.xlu0 %2462
      %2464 = vrot.lane.b32.xlu0 %v2392, 96
      %v2465 = vpop.permute.xlu0 %2464
      %v2466 = vsel %vm836, %v2461, %v2463
      %v2467 = vsel %vm836, %v2463, %v2465
      %2470 = vrot.lane.b32.xlu0 %v2374, 95
      %v2471 = vpop.permute.xlu0 %2470
      %2472 = vrot.lane.b32.xlu0 %v2371, 95
      %v2473 = vpop.permute.xlu0 %2472
      %2474 = vrot.lane.b32.xlu0 %v2377, 95
      %v2475 = vpop.permute.xlu0 %2474
      %v2476 = vsel %vm867, %v2471, %v2473
      %v2477 = vsel %vm867, %v2473, %v2475
      %2483 = vrot.lane.b32.xlu0 %v2393, 94
      %v2484 = vpop.permute.xlu0 %2483
      %2485 = vrot.lane.b32.xlu0 %v2394, 94
      %v2486 = vpop.permute.xlu0 %2485
      %2487 = vrot.lane.b32.xlu0 %v2395, 94
      %v2488 = vpop.permute.xlu0 %2487
      %v2489 = vsel %vm907, %v2484, %v2486
      %v2490 = vsel %vm907, %v2486, %v2488
      %v2493 = vpack.c.bf16 %v2355, %v2351
      %v2494 = vpack.c.bf16 %v2356, %v2352
      %2497 = vrot.lane.b32.xlu0 %v2493, 34
      %v2498 = vpop.permute.xlu0 %2497
      %2499 = vrot.lane.b32.xlu0 %v2494, 34
      %v2500 = vpop.permute.xlu0 %2499
      %v2501 = vsel %vm607, %v2498, %v2500
      %v2504 = vsel %vm962, 0, %v2498
      %v2507 = vsel %vm962, %v2500, 0
      %v2509 = vmul.bf16 %v2504, %v456
      %v2510 = vmul.bf16 %v2501, %v457
      %v2511 = vmul.bf16 %v2504, %v990
      %v2512 = vmul.bf16 %v2501, %v994
      %v2513 = vmul.bf16 %v2507, %v992
      %v2514 = vmul.bf16 %v2504, %v1010
      %v2515 = vmul.bf16 %v2501, %v1013
      %v2516 = vmul.bf16 %v2507, %v1012
      %v2517 = vmul.bf16 %v2504, %v1027
      %v2518 = vmul.bf16 %v2501, %v1031
      %v2519 = vmul.bf16 %v2507, %v1029
      %v2520 = vmul.bf16 %v2504, %v1045
      %v2521 = vmul.bf16 %v2501, %v1049
      %v2522 = vmul.bf16 %v2507, %v1047
      %v2523 = vmul.bf16 %v2504, %v1063
      %v2524 = vmul.bf16 %v2501, %v1067
      %v2525 = vmul.bf16 %v2507, %v1065
      %2528 = vrot.lane.b32.xlu0 %v2504, 126
      %v2529 = vpop.permute.xlu0 %2528
      %2530 = vrot.lane.b32.xlu0 %v2501, 126
      %v2531 = vpop.permute.xlu0 %2530
      %2532 = vrot.lane.b32.xlu0 %v2507, 126
      %v2533 = vpop.permute.xlu0 %2532
      %v2534 = vsel %vm685, %v2529, %v2531
      %v2535 = vsel %vm685, %v2531, %v2533
      %2541 = vrot.lane.b32.xlu0 %v2511, 124
      %v2542 = vpop.permute.xlu0 %2541
      %2543 = vrot.lane.b32.xlu0 %v2512, 124
      %v2544 = vpop.permute.xlu0 %2543
      %2545 = vrot.lane.b32.xlu0 %v2513, 124
      %v2546 = vpop.permute.xlu0 %2545
      %v2547 = vsel %vm1143, %v2542, %v2544
      %v2548 = vsel %vm1143, %v2544, %v2546
      %2554 = vrot.lane.b32.xlu0 %v2514, 96
      %v2555 = vpop.permute.xlu0 %2554
      %2556 = vrot.lane.b32.xlu0 %v2515, 96
      %v2557 = vpop.permute.xlu0 %2556
      %2558 = vrot.lane.b32.xlu0 %v2516, 96
      %v2559 = vpop.permute.xlu0 %2558
      %v2560 = vsel %vm836, %v2555, %v2557
      %v2561 = vsel %vm836, %v2557, %v2559
      %2564 = vrot.lane.b32.xlu0 %v2504, 94
      %v2565 = vpop.permute.xlu0 %2564
      %2566 = vrot.lane.b32.xlu0 %v2501, 94
      %v2567 = vpop.permute.xlu0 %2566
      %2568 = vrot.lane.b32.xlu0 %v2507, 94
      %v2569 = vpop.permute.xlu0 %2568
      %v2570 = vsel %vm907, %v2565, %v2567
      %v2571 = vsel %vm907, %v2567, %v2569
      %2577 = vrot.lane.b32.xlu0 %v2517, 92
      %v2578 = vpop.permute.xlu0 %2577
      %2579 = vrot.lane.b32.xlu0 %v2518, 92
      %v2580 = vpop.permute.xlu0 %2579
      %2581 = vrot.lane.b32.xlu0 %v2519, 92
      %v2582 = vpop.permute.xlu0 %2581
      %v2583 = vsel %vm1252, %v2578, %v2580
      %v2584 = vsel %vm1252, %v2580, %v2582
      %2590 = vrot.lane.b32.xlu0 %v2520, 64
      %v2591 = vpop.permute.xlu0 %2590
      %2592 = vrot.lane.b32.xlu0 %v2521, 64
      %v2593 = vpop.permute.xlu0 %2592
      %2594 = vrot.lane.b32.xlu0 %v2522, 64
      %v2595 = vpop.permute.xlu0 %2594
      %v2596 = vsel %vm1048, %v2591, %v2593
      %v2597 = vsel %vm1048, %v2593, %v2595
      %2600 = vrot.lane.b32.xlu0 %v2504, 62
      %v2601 = vpop.permute.xlu0 %2600
      %2602 = vrot.lane.b32.xlu0 %v2501, 62
      %v2603 = vpop.permute.xlu0 %2602
      %2604 = vrot.lane.b32.xlu0 %v2507, 62
      %v2605 = vpop.permute.xlu0 %2604
      %v2606 = vsel %vm1322, %v2601, %v2603
      %v2607 = vsel %vm1322, %v2603, %v2605
      %2613 = vrot.lane.b32.xlu0 %v2523, 60
      %v2614 = vpop.permute.xlu0 %2613
      %2615 = vrot.lane.b32.xlu0 %v2524, 60
      %v2616 = vpop.permute.xlu0 %2615
      %2617 = vrot.lane.b32.xlu0 %v2525, 60
      %v2618 = vpop.permute.xlu0 %2617
      %v2619 = vsel %vm1362, %v2614, %v2616
      %v2620 = vsel %vm1362, %v2616, %v2618
      %2624 = vset.pattern.permute.xlu0 0
      %2625 = vperm.xlu0 %2624, %v2361
      %v2626 = vpop.permute.xlu0 %2625
      %2629 = vset.pattern.permute.xlu0 0
      %2630 = vperm.xlu0 %2629, %v2362
      %v2631 = vpop.permute.xlu0 %2630
      %v2635 = vunpack.c.l.b16 %v2358
      %v2636 = vunpack.c.h.b16 %v2358
      %v2637 = vunpack.c.l.b16 %v2359
      %v2638 = vunpack.c.h.b16 %v2359
      %v2639 = vpack.c.b16 %v2637, %v2635
      %v2640 = vpack.c.b16 %v2638, %v2636
      %v2643 = vsel %vm1877, %v2640, 0
      %2645 = vmatprep.subr.bf16.mxu0 %v2380
      %2646 = vmatpush1.bf16.msra.mxu0 %v2379
      %2647 = vmatprep.subr.bf16.mxu0 %v2405
      %2648 = vmatpush1.bf16.msra.mxu0 %v2404
      %2649 = vmatprep.subr.bf16.mxu0 %v2418
      %2650 = vmatpush1.bf16.msra.mxu0 %v2417
      %2651 = vmatprep.subr.bf16.mxu0 %v2431
      %2652 = vmatpush1.bf16.msra.mxu0 %v2430
      %2653 = vmatprep.subr.bf16.mxu0 %v2441
      %2654 = vmatpush1.bf16.msra.mxu0 %v2440
      %2655 = vmatprep.subr.bf16.mxu0 %v2454
      %2656 = vmatpush1.bf16.msra.mxu0 %v2453
      %2657 = vmatprep.subr.bf16.mxu0 %v2467
      %2658 = vmatpush1.bf16.msra.mxu0 %v2466
      %2659 = vmatprep.subr.bf16.mxu0 %v2477
      %2660 = vmatpush1.bf16.msra.mxu0 %v2476
      %2661 = vmatprep.subr.bf16.mxu0 %v2490
      %2662 = vmatpush1.bf16.msra.mxu0 %v2489
      %2663 = vmatprep.subr.bf16.mxu0 0
      %2664 = vmatpush1.bf16.msra.mxu0 0
      %2665 = vmatprep.subr.bf16.mxu0 0
      %2666 = vmatpush1.bf16.msra.mxu0 0
      %2667 = vmatprep.subr.bf16.mxu0 0
      %2668 = vmatpush1.bf16.msra.mxu0 0
      %2669 = vmatprep.subr.bf16.mxu0 0
      %2670 = vmatpush1.bf16.msra.mxu0 0
      %2671 = vmatprep.subr.bf16.mxu0 0
      %2672 = vmatpush1.bf16.msra.mxu0 0
      %2673 = vmatprep.subr.bf16.mxu0 0
      %2674 = vmatpush1.bf16.msra.mxu0 0
      %2675 = vmatprep.subr.bf16.mxu0 0
      %2676 = vmatpush1.bf16.msra.mxu0 0
      %2677 = vmatprep.mubr.bf16.mxu0 %v2643
      %2678 = vmatmul.mubr.bf16.gmra.mrb[0].mxu0 %v2639
      %v2679 = vpop.f32.mrb[0].mxu0
      %v2680 = vadd.f32 %v2626, %v2679
      %v2681 = vpop.f32.mrb[0].mxu0
      %v2682 = vadd.f32 %v2626, %v2681
      %v2683 = vpop.f32.mrb[0].mxu0
      %v2684 = vadd.f32 %v2631, %v2683
      %v2685 = vpop.f32.mrb[0].mxu0
      %v2686 = vadd.f32 %v2631, %v2685
      %2687 = vdwg.mxu0
      %2688 = vmatprep.subr.bf16.mxu0 %v2510
      %2689 = vmatpush1.bf16.msra.mxu0 %v2509
      %2690 = vmatprep.subr.bf16.mxu0 %v2535
      %2691 = vmatpush1.bf16.msra.mxu0 %v2534
      %2692 = vmatprep.subr.bf16.mxu0 %v2548
      %2693 = vmatpush1.bf16.msra.mxu0 %v2547
      %2694 = vmatprep.subr.bf16.mxu0 %v2561
      %2695 = vmatpush1.bf16.msra.mxu0 %v2560
      %2696 = vmatprep.subr.bf16.mxu0 %v2571
      %2697 = vmatpush1.bf16.msra.mxu0 %v2570
      %2698 = vmatprep.subr.bf16.mxu0 %v2584
      %2699 = vmatpush1.bf16.msra.mxu0 %v2583
      %2700 = vmatprep.subr.bf16.mxu0 %v2597
      %2701 = vmatpush1.bf16.msra.mxu0 %v2596
      %2702 = vmatprep.subr.bf16.mxu0 %v2607
      %2703 = vmatpush1.bf16.msra.mxu0 %v2606
      %2704 = vmatprep.subr.bf16.mxu0 %v2620
      %2705 = vmatpush1.bf16.msra.mxu0 %v2619
      %2706 = vmatprep.subr.bf16.mxu0 0
      %2707 = vmatpush1.bf16.msra.mxu0 0
      %2708 = vmatprep.subr.bf16.mxu0 0
      %2709 = vmatpush1.bf16.msra.mxu0 0
      %2710 = vmatprep.subr.bf16.mxu0 0
      %2711 = vmatpush1.bf16.msra.mxu0 0
      %2712 = vmatprep.subr.bf16.mxu0 0
      %2713 = vmatpush1.bf16.msra.mxu0 0
      %2714 = vmatprep.subr.bf16.mxu0 0
      %2715 = vmatpush1.bf16.msra.mxu0 0
      %2716 = vmatprep.subr.bf16.mxu0 0
      %2717 = vmatpush1.bf16.msra.mxu0 0
      %2718 = vmatprep.subr.bf16.mxu0 0
      %2719 = vmatpush1.bf16.msra.mxu0 0
      %2720 = vmatprep.mubr.bf16.mxu0 %v2643
      %2721 = vmatmul.mubr.bf16.gmra.mrb[0].mxu0 %v2639
      %v2722 = vpop.f32.mrb[0].mxu0
      %v2723 = vadd.f32 %v2626, %v2722
      %v2724 = vpop.f32.mrb[0].mxu0
      %v2725 = vadd.f32 %v2626, %v2724
      %v2726 = vpop.f32.mrb[0].mxu0
      %v2727 = vadd.f32 %v2631, %v2726
      %v2728 = vpop.f32.mrb[0].mxu0
      %v2729 = vadd.f32 %v2631, %v2728
      %2730 = vdwg.mxu0
      %v2731 = vmax.f32 %v2680, 0.0
      %v2732 = vmax.f32 %v2682, 0.0
      %v2733 = vmax.f32 %v2723, 0.0
      %v2734 = vmax.f32 %v2725, 0.0
      %v2735 = vmax.f32 %v2684, 0.0
      %v2736 = vmax.f32 %v2686, 0.0
      %v2737 = vmax.f32 %v2727, 0.0
      %v2738 = vmax.f32 %v2729, 0.0
      %s2739 = scalar_lea.vmem %s4, 48
      %v2740 = vld [vmem:[%s2739] sm:$0xff]
      %v2741 = vld [vmem:[%s2739 + $0x8] sm:$0xff]
      %s2742 = scalar_lea.vmem %s5, 48
      %v2743 = vld [vmem:[%s2742] sm:$0xff]
      %v2744 = vld [vmem:[%s2742 + $0x8] sm:$0xff]
      %v2745 = vpack.c.bf16 %v2735, %v2731
      %v2746 = vpack.c.bf16 %v2736, %v2732
      %2749 = vrot.lane.b32.xlu0 %v2745, 17
      %v2750 = vpop.permute.xlu0 %2749
      %2751 = vrot.lane.b32.xlu0 %v2746, 17
      %v2752 = vpop.permute.xlu0 %2751
      %v2753 = vsel %vm494, %v2750, %v2752
      %v2756 = vsel %vm501, 0, %v2750
      %v2759 = vsel %vm501, %v2752, 0
      %v2761 = vmul.bf16 %v2756, %v440
      %v2762 = vmul.bf16 %v2753, %v441
      %v2763 = vmul.bf16 %v2756, %v530
      %v2764 = vmul.bf16 %v2753, %v534
      %v2765 = vmul.bf16 %v2759, %v532
      %v2766 = vmul.bf16 %v2756, %v550
      %v2767 = vmul.bf16 %v2753, %v554
      %v2768 = vmul.bf16 %v2759, %v552
      %v2769 = vmul.bf16 %v2756, %v568
      %v2770 = vmul.bf16 %v2753, %v572
      %v2771 = vmul.bf16 %v2759, %v570
      %v2772 = vmul.bf16 %v2756, %v586
      %v2773 = vmul.bf16 %v2753, %v590
      %v2774 = vmul.bf16 %v2759, %v588
      %v2775 = vmul.bf16 %v2756, %v604
      %v2776 = vmul.bf16 %v2753, %v608
      %v2777 = vmul.bf16 %v2759, %v606
      %2780 = vrot.lane.b32.xlu0 %v2756, 127
      %v2781 = vpop.permute.xlu0 %2780
      %2782 = vrot.lane.b32.xlu0 %v2753, 127
      %v2783 = vpop.permute.xlu0 %2782
      %2784 = vrot.lane.b32.xlu0 %v2759, 127
      %v2785 = vpop.permute.xlu0 %2784
      %v2786 = vsel %vm645, %v2781, %v2783
      %v2787 = vsel %vm645, %v2783, %v2785
      %2793 = vrot.lane.b32.xlu0 %v2763, 126
      %v2794 = vpop.permute.xlu0 %2793
      %2795 = vrot.lane.b32.xlu0 %v2764, 126
      %v2796 = vpop.permute.xlu0 %2795
      %2797 = vrot.lane.b32.xlu0 %v2765, 126
      %v2798 = vpop.permute.xlu0 %2797
      %v2799 = vsel %vm685, %v2794, %v2796
      %v2800 = vsel %vm685, %v2796, %v2798
      %2806 = vrot.lane.b32.xlu0 %v2766, 112
      %v2807 = vpop.permute.xlu0 %2806
      %2808 = vrot.lane.b32.xlu0 %v2767, 112
      %v2809 = vpop.permute.xlu0 %2808
      %2810 = vrot.lane.b32.xlu0 %v2768, 112
      %v2811 = vpop.permute.xlu0 %2810
      %v2812 = vsel %vm725, %v2807, %v2809
      %v2813 = vsel %vm725, %v2809, %v2811
      %2816 = vrot.lane.b32.xlu0 %v2756, 111
      %v2817 = vpop.permute.xlu0 %2816
      %2818 = vrot.lane.b32.xlu0 %v2753, 111
      %v2819 = vpop.permute.xlu0 %2818
      %2820 = vrot.lane.b32.xlu0 %v2759, 111
      %v2821 = vpop.permute.xlu0 %2820
      %v2822 = vsel %vm756, %v2817, %v2819
      %v2823 = vsel %vm756, %v2819, %v2821
      %2829 = vrot.lane.b32.xlu0 %v2769, 110
      %v2830 = vpop.permute.xlu0 %2829
      %2831 = vrot.lane.b32.xlu0 %v2770, 110
      %v2832 = vpop.permute.xlu0 %2831
      %2833 = vrot.lane.b32.xlu0 %v2771, 110
      %v2834 = vpop.permute.xlu0 %2833
      %v2835 = vsel %vm796, %v2830, %v2832
      %v2836 = vsel %vm796, %v2832, %v2834
      %2842 = vrot.lane.b32.xlu0 %v2772, 96
      %v2843 = vpop.permute.xlu0 %2842
      %2844 = vrot.lane.b32.xlu0 %v2773, 96
      %v2845 = vpop.permute.xlu0 %2844
      %2846 = vrot.lane.b32.xlu0 %v2774, 96
      %v2847 = vpop.permute.xlu0 %2846
      %v2848 = vsel %vm836, %v2843, %v2845
      %v2849 = vsel %vm836, %v2845, %v2847
      %2852 = vrot.lane.b32.xlu0 %v2756, 95
      %v2853 = vpop.permute.xlu0 %2852
      %2854 = vrot.lane.b32.xlu0 %v2753, 95
      %v2855 = vpop.permute.xlu0 %2854
      %2856 = vrot.lane.b32.xlu0 %v2759, 95
      %v2857 = vpop.permute.xlu0 %2856
      %v2858 = vsel %vm867, %v2853, %v2855
      %v2859 = vsel %vm867, %v2855, %v2857
      %2865 = vrot.lane.b32.xlu0 %v2775, 94
      %v2866 = vpop.permute.xlu0 %2865
      %2867 = vrot.lane.b32.xlu0 %v2776, 94
      %v2868 = vpop.permute.xlu0 %2867
      %2869 = vrot.lane.b32.xlu0 %v2777, 94
      %v2870 = vpop.permute.xlu0 %2869
      %v2871 = vsel %vm907, %v2866, %v2868
      %v2872 = vsel %vm907, %v2868, %v2870
      %v2875 = vpack.c.bf16 %v2737, %v2733
      %v2876 = vpack.c.bf16 %v2738, %v2734
      %2879 = vrot.lane.b32.xlu0 %v2875, 34
      %v2880 = vpop.permute.xlu0 %2879
      %2881 = vrot.lane.b32.xlu0 %v2876, 34
      %v2882 = vpop.permute.xlu0 %2881
      %v2883 = vsel %vm607, %v2880, %v2882
      %v2886 = vsel %vm962, 0, %v2880
      %v2889 = vsel %vm962, %v2882, 0
      %v2891 = vmul.bf16 %v2886, %v456
      %v2892 = vmul.bf16 %v2883, %v457
      %v2893 = vmul.bf16 %v2886, %v990
      %v2894 = vmul.bf16 %v2883, %v994
      %v2895 = vmul.bf16 %v2889, %v992
      %v2896 = vmul.bf16 %v2886, %v1010
      %v2897 = vmul.bf16 %v2883, %v1013
      %v2898 = vmul.bf16 %v2889, %v1012
      %v2899 = vmul.bf16 %v2886, %v1027
      %v2900 = vmul.bf16 %v2883, %v1031
      %v2901 = vmul.bf16 %v2889, %v1029
      %v2902 = vmul.bf16 %v2886, %v1045
      %v2903 = vmul.bf16 %v2883, %v1049
      %v2904 = vmul.bf16 %v2889, %v1047
      %v2905 = vmul.bf16 %v2886, %v1063
      %v2906 = vmul.bf16 %v2883, %v1067
      %v2907 = vmul.bf16 %v2889, %v1065
      %2910 = vrot.lane.b32.xlu0 %v2886, 126
      %v2911 = vpop.permute.xlu0 %2910
      %2912 = vrot.lane.b32.xlu0 %v2883, 126
      %v2913 = vpop.permute.xlu0 %2912
      %2914 = vrot.lane.b32.xlu0 %v2889, 126
      %v2915 = vpop.permute.xlu0 %2914
      %v2916 = vsel %vm685, %v2911, %v2913
      %v2917 = vsel %vm685, %v2913, %v2915
      %2923 = vrot.lane.b32.xlu0 %v2893, 124
      %v2924 = vpop.permute.xlu0 %2923
      %2925 = vrot.lane.b32.xlu0 %v2894, 124
      %v2926 = vpop.permute.xlu0 %2925
      %2927 = vrot.lane.b32.xlu0 %v2895, 124
      %v2928 = vpop.permute.xlu0 %2927
      %v2929 = vsel %vm1143, %v2924, %v2926
      %v2930 = vsel %vm1143, %v2926, %v2928
      %2936 = vrot.lane.b32.xlu0 %v2896, 96
      %v2937 = vpop.permute.xlu0 %2936
      %2938 = vrot.lane.b32.xlu0 %v2897, 96
      %v2939 = vpop.permute.xlu0 %2938
      %2940 = vrot.lane.b32.xlu0 %v2898, 96
      %v2941 = vpop.permute.xlu0 %2940
      %v2942 = vsel %vm836, %v2937, %v2939
      %v2943 = vsel %vm836, %v2939, %v2941
      %2946 = vrot.lane.b32.xlu0 %v2886, 94
      %v2947 = vpop.permute.xlu0 %2946
      %2948 = vrot.lane.b32.xlu0 %v2883, 94
      %v2949 = vpop.permute.xlu0 %2948
      %2950 = vrot.lane.b32.xlu0 %v2889, 94
      %v2951 = vpop.permute.xlu0 %2950
      %v2952 = vsel %vm907, %v2947, %v2949
      %v2953 = vsel %vm907, %v2949, %v2951
      %2959 = vrot.lane.b32.xlu0 %v2899, 92
      %v2960 = vpop.permute.xlu0 %2959
      %2961 = vrot.lane.b32.xlu0 %v2900, 92
      %v2962 = vpop.permute.xlu0 %2961
      %2963 = vrot.lane.b32.xlu0 %v2901, 92
      %v2964 = vpop.permute.xlu0 %2963
      %v2965 = vsel %vm1252, %v2960, %v2962
      %v2966 = vsel %vm1252, %v2962, %v2964
      %2972 = vrot.lane.b32.xlu0 %v2902, 64
      %v2973 = vpop.permute.xlu0 %2972
      %2974 = vrot.lane.b32.xlu0 %v2903, 64
      %v2975 = vpop.permute.xlu0 %2974
      %2976 = vrot.lane.b32.xlu0 %v2904, 64
      %v2977 = vpop.permute.xlu0 %2976
      %v2978 = vsel %vm1048, %v2973, %v2975
      %v2979 = vsel %vm1048, %v2975, %v2977
      %2982 = vrot.lane.b32.xlu0 %v2886, 62
      %v2983 = vpop.permute.xlu0 %2982
      %2984 = vrot.lane.b32.xlu0 %v2883, 62
      %v2985 = vpop.permute.xlu0 %2984
      %2986 = vrot.lane.b32.xlu0 %v2889, 62
      %v2987 = vpop.permute.xlu0 %2986
      %v2988 = vsel %vm1322, %v2983, %v2985
      %v2989 = vsel %vm1322, %v2985, %v2987
      %2995 = vrot.lane.b32.xlu0 %v2905, 60
      %v2996 = vpop.permute.xlu0 %2995
      %2997 = vrot.lane.b32.xlu0 %v2906, 60
      %v2998 = vpop.permute.xlu0 %2997
      %2999 = vrot.lane.b32.xlu0 %v2907, 60
      %v3000 = vpop.permute.xlu0 %2999
      %v3001 = vsel %vm1362, %v2996, %v2998
      %v3002 = vsel %vm1362, %v2998, %v3000
      %3006 = vset.pattern.permute.xlu0 0
      %3007 = vperm.xlu0 %3006, %v2743
      %v3008 = vpop.permute.xlu0 %3007
      %3011 = vset.pattern.permute.xlu0 0
      %3012 = vperm.xlu0 %3011, %v2744
      %v3013 = vpop.permute.xlu0 %3012
      %v3017 = vunpack.c.l.b16 %v2740
      %v3018 = vunpack.c.h.b16 %v2740
      %v3019 = vunpack.c.l.b16 %v2741
      %v3020 = vunpack.c.h.b16 %v2741
      %v3021 = vpack.c.b16 %v3019, %v3017
      %v3022 = vpack.c.b16 %v3020, %v3018
      %v3025 = vsel %vm1877, %v3022, 0
      %3027 = vmatprep.subr.bf16.mxu0 %v2762
      %3028 = vmatpush1.bf16.msra.mxu0 %v2761
      %3029 = vmatprep.subr.bf16.mxu0 %v2787
      %3030 = vmatpush1.bf16.msra.mxu0 %v2786
      %3031 = vmatprep.subr.bf16.mxu0 %v2800
      %3032 = vmatpush1.bf16.msra.mxu0 %v2799
      %3033 = vmatprep.subr.bf16.mxu0 %v2813
      %3034 = vmatpush1.bf16.msra.mxu0 %v2812
      %3035 = vmatprep.subr.bf16.mxu0 %v2823
      %3036 = vmatpush1.bf16.msra.mxu0 %v2822
      %3037 = vmatprep.subr.bf16.mxu0 %v2836
      %3038 = vmatpush1.bf16.msra.mxu0 %v2835
      %3039 = vmatprep.subr.bf16.mxu0 %v2849
      %3040 = vmatpush1.bf16.msra.mxu0 %v2848
      %3041 = vmatprep.subr.bf16.mxu0 %v2859
      %3042 = vmatpush1.bf16.msra.mxu0 %v2858
      %3043 = vmatprep.subr.bf16.mxu0 %v2872
      %3044 = vmatpush1.bf16.msra.mxu0 %v2871
      %3045 = vmatprep.subr.bf16.mxu0 0
      %3046 = vmatpush1.bf16.msra.mxu0 0
      %3047 = vmatprep.subr.bf16.mxu0 0
      %3048 = vmatpush1.bf16.msra.mxu0 0
      %3049 = vmatprep.subr.bf16.mxu0 0
      %3050 = vmatpush1.bf16.msra.mxu0 0
      %3051 = vmatprep.subr.bf16.mxu0 0
      %3052 = vmatpush1.bf16.msra.mxu0 0
      %3053 = vmatprep.subr.bf16.mxu0 0
      %3054 = vmatpush1.bf16.msra.mxu0 0
      %3055 = vmatprep.subr.bf16.mxu0 0
      %3056 = vmatpush1.bf16.msra.mxu0 0
      %3057 = vmatprep.subr.bf16.mxu0 0
      %3058 = vmatpush1.bf16.msra.mxu0 0
      %3059 = vmatprep.mubr.bf16.mxu0 %v3025
      %3060 = vmatmul.mubr.bf16.gmra.mrb[0].mxu0 %v3021
      %v3061 = vpop.f32.mrb[0].mxu0
      %v3062 = vadd.f32 %v3008, %v3061
      %v3063 = vpop.f32.mrb[0].mxu0
      %v3064 = vadd.f32 %v3008, %v3063
      %v3065 = vpop.f32.mrb[0].mxu0
      %v3066 = vadd.f32 %v3013, %v3065
      %v3067 = vpop.f32.mrb[0].mxu0
      %v3068 = vadd.f32 %v3013, %v3067
      %3069 = vdwg.mxu0
      %3070 = vmatprep.subr.bf16.mxu0 %v2892
      %3071 = vmatpush1.bf16.msra.mxu0 %v2891
      %3072 = vmatprep.subr.bf16.mxu0 %v2917
      %3073 = vmatpush1.bf16.msra.mxu0 %v2916
      %3074 = vmatprep.subr.bf16.mxu0 %v2930
      %3075 = vmatpush1.bf16.msra.mxu0 %v2929
      %3076 = vmatprep.subr.bf16.mxu0 %v2943
      %3077 = vmatpush1.bf16.msra.mxu0 %v2942
      %3078 = vmatprep.subr.bf16.mxu0 %v2953
      %3079 = vmatpush1.bf16.msra.mxu0 %v2952
      %3080 = vmatprep.subr.bf16.mxu0 %v2966
      %3081 = vmatpush1.bf16.msra.mxu0 %v2965
      %3082 = vmatprep.subr.bf16.mxu0 %v2979
      %3083 = vmatpush1.bf16.msra.mxu0 %v2978
      %3084 = vmatprep.subr.bf16.mxu0 %v2989
      %3085 = vmatpush1.bf16.msra.mxu0 %v2988
      %3086 = vmatprep.subr.bf16.mxu0 %v3002
      %3087 = vmatpush1.bf16.msra.mxu0 %v3001
      %3088 = vmatprep.subr.bf16.mxu0 0
      %3089 = vmatpush1.bf16.msra.mxu0 0
      %3090 = vmatprep.subr.bf16.mxu0 0
      %3091 = vmatpush1.bf16.msra.mxu0 0
      %3092 = vmatprep.subr.bf16.mxu0 0
      %3093 = vmatpush1.bf16.msra.mxu0 0
      %3094 = vmatprep.subr.bf16.mxu0 0
      %3095 = vmatpush1.bf16.msra.mxu0 0
      %3096 = vmatprep.subr.bf16.mxu0 0
      %3097 = vmatpush1.bf16.msra.mxu0 0
      %3098 = vmatprep.subr.bf16.mxu0 0
      %3099 = vmatpush1.bf16.msra.mxu0 0
      %3100 = vmatprep.subr.bf16.mxu0 0
      %3101 = vmatpush1.bf16.msra.mxu0 0
      %3102 = vmatprep.mubr.bf16.mxu0 %v3025
      %3103 = vmatmul.mubr.bf16.gmra.mrb[0].mxu0 %v3021
      %v3104 = vpop.f32.mrb[0].mxu0
      %v3105 = vadd.f32 %v3008, %v3104
      %v3106 = vpop.f32.mrb[0].mxu0
      %v3107 = vadd.f32 %v3008, %v3106
      %v3108 = vpop.f32.mrb[0].mxu0
      %v3109 = vadd.f32 %v3013, %v3108
      %v3110 = vpop.f32.mrb[0].mxu0
      %v3111 = vadd.f32 %v3013, %v3110
      %3112 = vdwg.mxu0
      %v3113 = vadd.f32 %v3062, %v2349
      %v3114 = vadd.f32 %v3064, %v2350
      %v3115 = vadd.f32 %v3105, %v2351
      %v3116 = vadd.f32 %v3107, %v2352
      %v3117 = vadd.f32 %v3066, %v2353
      %v3118 = vadd.f32 %v3068, %v2354
      %v3119 = vadd.f32 %v3109, %v2355
      %v3120 = vadd.f32 %v3111, %v2356
      %v3121 = vadd.f32 %v3113, %v3115
      %v3122 = vadd.f32 %v3114, %v3116
      %v3123 = vadd.f32 %v3117, %v3119
      %v3124 = vadd.f32 %v3118, %v3120
      %s3125 = scalar_lea.vmem %s4, 64
      %v3126 = vld [vmem:[%s3125] sm:$0xff]
      %v3127 = vld [vmem:[%s3125 + $0x8] sm:$0xff]
      %s3128 = scalar_lea.vmem %s5, 64
      %v3129 = vld [vmem:[%s3128] sm:$0xff]
      %v3130 = vld [vmem:[%s3128 + $0x8] sm:$0xff]
      %v3131 = vpack.c.bf16 %v3123, %v3121
      %v3132 = vpack.c.bf16 %v3124, %v3122
      %3135 = vrot.lane.b32.xlu0 %v3131, 17
      %v3136 = vpop.permute.xlu0 %3135
      %3137 = vrot.lane.b32.xlu0 %v3132, 17
      %v3138 = vpop.permute.xlu0 %3137
      %v3139 = vsel %vm494, %v3136, %v3138
      %v3142 = vsel %vm501, 0, %v3136
      %v3145 = vsel %vm501, %v3138, 0
      %v3147 = vmul.bf16 %v3142, %v440
      %v3148 = vmul.bf16 %v3139, %v441
      %v3149 = vmul.bf16 %v3142, %v530
      %v3150 = vmul.bf16 %v3139, %v534
      %v3151 = vmul.bf16 %v3145, %v532
      %v3152 = vmul.bf16 %v3142, %v550
      %v3153 = vmul.bf16 %v3139, %v554
      %v3154 = vmul.bf16 %v3145, %v552
      %v3155 = vmul.bf16 %v3142, %v568
      %v3156 = vmul.bf16 %v3139, %v572
      %v3157 = vmul.bf16 %v3145, %v570
      %v3158 = vmul.bf16 %v3142, %v586
      %v3159 = vmul.bf16 %v3139, %v590
      %v3160 = vmul.bf16 %v3145, %v588
      %v3161 = vmul.bf16 %v3142, %v604
      %v3162 = vmul.bf16 %v3139, %v608
      %v3163 = vmul.bf16 %v3145, %v606
      %3166 = vrot.lane.b32.xlu0 %v3142, 127
      %v3167 = vpop.permute.xlu0 %3166
      %3168 = vrot.lane.b32.xlu0 %v3139, 127
      %v3169 = vpop.permute.xlu0 %3168
      %3170 = vrot.lane.b32.xlu0 %v3145, 127
      %v3171 = vpop.permute.xlu0 %3170
      %v3172 = vsel %vm645, %v3167, %v3169
      %v3173 = vsel %vm645, %v3169, %v3171
      %3179 = vrot.lane.b32.xlu0 %v3149, 126
      %v3180 = vpop.permute.xlu0 %3179
      %3181 = vrot.lane.b32.xlu0 %v3150, 126
      %v3182 = vpop.permute.xlu0 %3181
      %3183 = vrot.lane.b32.xlu0 %v3151, 126
      %v3184 = vpop.permute.xlu0 %3183
      %v3185 = vsel %vm685, %v3180, %v3182
      %v3186 = vsel %vm685, %v3182, %v3184
      %3192 = vrot.lane.b32.xlu0 %v3152, 112
      %v3193 = vpop.permute.xlu0 %3192
      %3194 = vrot.lane.b32.xlu0 %v3153, 112
      %v3195 = vpop.permute.xlu0 %3194
      %3196 = vrot.lane.b32.xlu0 %v3154, 112
      %v3197 = vpop.permute.xlu0 %3196
      %v3198 = vsel %vm725, %v3193, %v3195
      %v3199 = vsel %vm725, %v3195, %v3197
      %3202 = vrot.lane.b32.xlu0 %v3142, 111
      %v3203 = vpop.permute.xlu0 %3202
      %3204 = vrot.lane.b32.xlu0 %v3139, 111
      %v3205 = vpop.permute.xlu0 %3204
      %3206 = vrot.lane.b32.xlu0 %v3145, 111
      %v3207 = vpop.permute.xlu0 %3206
      %v3208 = vsel %vm756, %v3203, %v3205
      %v3209 = vsel %vm756, %v3205, %v3207
      %3215 = vrot.lane.b32.xlu0 %v3155, 110
      %v3216 = vpop.permute.xlu0 %3215
      %3217 = vrot.lane.b32.xlu0 %v3156, 110
      %v3218 = vpop.permute.xlu0 %3217
      %3219 = vrot.lane.b32.xlu0 %v3157, 110
      %v3220 = vpop.permute.xlu0 %3219
      %v3221 = vsel %vm796, %v3216, %v3218
      %v3222 = vsel %vm796, %v3218, %v3220
      %3228 = vrot.lane.b32.xlu0 %v3158, 96
      %v3229 = vpop.permute.xlu0 %3228
      %3230 = vrot.lane.b32.xlu0 %v3159, 96
      %v3231 = vpop.permute.xlu0 %3230
      %3232 = vrot.lane.b32.xlu0 %v3160, 96
      %v3233 = vpop.permute.xlu0 %3232
      %v3234 = vsel %vm836, %v3229, %v3231
      %v3235 = vsel %vm836, %v3231, %v3233
      %3238 = vrot.lane.b32.xlu0 %v3142, 95
      %v3239 = vpop.permute.xlu0 %3238
      %3240 = vrot.lane.b32.xlu0 %v3139, 95
      %v3241 = vpop.permute.xlu0 %3240
      %3242 = vrot.lane.b32.xlu0 %v3145, 95
      %v3243 = vpop.permute.xlu0 %3242
      %v3244 = vsel %vm867, %v3239, %v3241
      %v3245 = vsel %vm867, %v3241, %v3243
      %3251 = vrot.lane.b32.xlu0 %v3161, 94
      %v3252 = vpop.permute.xlu0 %3251
      %3253 = vrot.lane.b32.xlu0 %v3162, 94
      %v3254 = vpop.permute.xlu0 %3253
      %3255 = vrot.lane.b32.xlu0 %v3163, 94
      %v3256 = vpop.permute.xlu0 %3255
      %v3257 = vsel %vm907, %v3252, %v3254
      %v3258 = vsel %vm907, %v3254, %v3256
      %3262 = vset.pattern.permute.xlu0 0
      %3263 = vperm.xlu0 %3262, %v3129
      %v3264 = vpop.permute.xlu0 %3263
      %3267 = vset.pattern.permute.xlu0 0
      %3268 = vperm.xlu0 %3267, %v3130
      %v3269 = vpop.permute.xlu0 %3268
      %v3273 = vunpack.c.l.b16 %v3126
      %v3274 = vunpack.c.h.b16 %v3126
      %v3275 = vunpack.c.l.b16 %v3127
      %v3276 = vunpack.c.h.b16 %v3127
      %v3277 = vpack.c.b16 %v3275, %v3273
      %v3278 = vpack.c.b16 %v3276, %v3274
      %v3281 = vsel %vm1877, %v3278, 0
      %3283 = vmatprep.subr.bf16.mxu0 %v3148
      %3284 = vmatpush1.bf16.msra.mxu0 %v3147
      %3285 = vmatprep.subr.bf16.mxu0 %v3173
      %3286 = vmatpush1.bf16.msra.mxu0 %v3172
      %3287 = vmatprep.subr.bf16.mxu0 %v3186
      %3288 = vmatpush1.bf16.msra.mxu0 %v3185
      %3289 = vmatprep.subr.bf16.mxu0 %v3199
      %3290 = vmatpush1.bf16.msra.mxu0 %v3198
      %3291 = vmatprep.subr.bf16.mxu0 %v3209
      %3292 = vmatpush1.bf16.msra.mxu0 %v3208
      %3293 = vmatprep.subr.bf16.mxu0 %v3222
      %3294 = vmatpush1.bf16.msra.mxu0 %v3221
      %3295 = vmatprep.subr.bf16.mxu0 %v3235
      %3296 = vmatpush1.bf16.msra.mxu0 %v3234
      %3297 = vmatprep.subr.bf16.mxu0 %v3245
      %3298 = vmatpush1.bf16.msra.mxu0 %v3244
      %3299 = vmatprep.subr.bf16.mxu0 %v3258
      %3300 = vmatpush1.bf16.msra.mxu0 %v3257
      %3301 = vmatprep.subr.bf16.mxu0 0
      %3302 = vmatpush1.bf16.msra.mxu0 0
      %3303 = vmatprep.subr.bf16.mxu0 0
      %3304 = vmatpush1.bf16.msra.mxu0 0
      %3305 = vmatprep.subr.bf16.mxu0 0
      %3306 = vmatpush1.bf16.msra.mxu0 0
      %3307 = vmatprep.subr.bf16.mxu0 0
      %3308 = vmatpush1.bf16.msra.mxu0 0
      %3309 = vmatprep.subr.bf16.mxu0 0
      %3310 = vmatpush1.bf16.msra.mxu0 0
      %3311 = vmatprep.subr.bf16.mxu0 0
      %3312 = vmatpush1.bf16.msra.mxu0 0
      %3313 = vmatprep.subr.bf16.mxu0 0
      %3314 = vmatpush1.bf16.msra.mxu0 0
      %3315 = vmatprep.mubr.bf16.mxu0 %v3281
      %3316 = vmatmul.mubr.bf16.gmra.mrb[0].mxu0 %v3277
      %v3317 = vpop.f32.mrb[0].mxu0
      %v3318 = vadd.f32 %v3264, %v3317
      %v3319 = vpop.f32.mrb[0].mxu0
      %v3320 = vadd.f32 %v3264, %v3319
      %v3321 = vpop.f32.mrb[0].mxu0
      %v3322 = vadd.f32 %v3269, %v3321
      %v3323 = vpop.f32.mrb[0].mxu0
      %v3324 = vadd.f32 %v3269, %v3323
      %3325 = vdwg.mxu0
      %v3326 = vmax.f32 %v3318, 0.0
      %v3327 = vmax.f32 %v3320, 0.0
      %v3328 = vmax.f32 %v3322, 0.0
      %v3329 = vmax.f32 %v3324, 0.0
      %s3330 = scalar_lea.vmem %s4, 80
      %v3331 = vld [vmem:[%s3330] sm:$0xff]
      %v3332 = vld [vmem:[%s3330 + $0x8] sm:$0xff]
      %s3333 = scalar_lea.vmem %s5, 80
      %v3334 = vld [vmem:[%s3333] sm:$0xff]
      %v3335 = vld [vmem:[%s3333 + $0x8] sm:$0xff]
      %v3336 = vpack.c.bf16 %v3328, %v3326
      %v3337 = vpack.c.bf16 %v3329, %v3327
      %3340 = vrot.lane.b32.xlu0 %v3336, 17
      %v3341 = vpop.permute.xlu0 %3340
      %3342 = vrot.lane.b32.xlu0 %v3337, 17
      %v3343 = vpop.permute.xlu0 %3342
      %v3344 = vsel %vm494, %v3341, %v3343
      %v3347 = vsel %vm501, 0, %v3341
      %v3350 = vsel %vm501, %v3343, 0
      %v3352 = vmul.bf16 %v3347, %v440
      %v3353 = vmul.bf16 %v3344, %v441
      %v3354 = vmul.bf16 %v3347, %v530
      %v3355 = vmul.bf16 %v3344, %v534
      %v3356 = vmul.bf16 %v3350, %v532
      %v3357 = vmul.bf16 %v3347, %v550
      %v3358 = vmul.bf16 %v3344, %v554
      %v3359 = vmul.bf16 %v3350, %v552
      %v3360 = vmul.bf16 %v3347, %v568
      %v3361 = vmul.bf16 %v3344, %v572
      %v3362 = vmul.bf16 %v3350, %v570
      %v3363 = vmul.bf16 %v3347, %v586
      %v3364 = vmul.bf16 %v3344, %v590
      %v3365 = vmul.bf16 %v3350, %v588
      %v3366 = vmul.bf16 %v3347, %v604
      %v3367 = vmul.bf16 %v3344, %v608
      %v3368 = vmul.bf16 %v3350, %v606
      %3371 = vrot.lane.b32.xlu0 %v3347, 127
      %v3372 = vpop.permute.xlu0 %3371
      %3373 = vrot.lane.b32.xlu0 %v3344, 127
      %v3374 = vpop.permute.xlu0 %3373
      %3375 = vrot.lane.b32.xlu0 %v3350, 127
      %v3376 = vpop.permute.xlu0 %3375
      %v3377 = vsel %vm645, %v3372, %v3374
      %v3378 = vsel %vm645, %v3374, %v3376
      %3384 = vrot.lane.b32.xlu0 %v3354, 126
      %v3385 = vpop.permute.xlu0 %3384
      %3386 = vrot.lane.b32.xlu0 %v3355, 126
      %v3387 = vpop.permute.xlu0 %3386
      %3388 = vrot.lane.b32.xlu0 %v3356, 126
      %v3389 = vpop.permute.xlu0 %3388
      %v3390 = vsel %vm685, %v3385, %v3387
      %v3391 = vsel %vm685, %v3387, %v3389
      %3397 = vrot.lane.b32.xlu0 %v3357, 112
      %v3398 = vpop.permute.xlu0 %3397
      %3399 = vrot.lane.b32.xlu0 %v3358, 112
      %v3400 = vpop.permute.xlu0 %3399
      %3401 = vrot.lane.b32.xlu0 %v3359, 112
      %v3402 = vpop.permute.xlu0 %3401
      %v3403 = vsel %vm725, %v3398, %v3400
      %v3404 = vsel %vm725, %v3400, %v3402
      %3407 = vrot.lane.b32.xlu0 %v3347, 111
      %v3408 = vpop.permute.xlu0 %3407
      %3409 = vrot.lane.b32.xlu0 %v3344, 111
      %v3410 = vpop.permute.xlu0 %3409
      %3411 = vrot.lane.b32.xlu0 %v3350, 111
      %v3412 = vpop.permute.xlu0 %3411
      %v3413 = vsel %vm756, %v3408, %v3410
      %v3414 = vsel %vm756, %v3410, %v3412
      %3420 = vrot.lane.b32.xlu0 %v3360, 110
      %v3421 = vpop.permute.xlu0 %3420
      %3422 = vrot.lane.b32.xlu0 %v3361, 110
      %v3423 = vpop.permute.xlu0 %3422
      %3424 = vrot.lane.b32.xlu0 %v3362, 110
      %v3425 = vpop.permute.xlu0 %3424
      %v3426 = vsel %vm796, %v3421, %v3423
      %v3427 = vsel %vm796, %v3423, %v3425
      %3433 = vrot.lane.b32.xlu0 %v3363, 96
      %v3434 = vpop.permute.xlu0 %3433
      %3435 = vrot.lane.b32.xlu0 %v3364, 96
      %v3436 = vpop.permute.xlu0 %3435
      %3437 = vrot.lane.b32.xlu0 %v3365, 96
      %v3438 = vpop.permute.xlu0 %3437
      %v3439 = vsel %vm836, %v3434, %v3436
      %v3440 = vsel %vm836, %v3436, %v3438
      %3443 = vrot.lane.b32.xlu0 %v3347, 95
      %v3444 = vpop.permute.xlu0 %3443
      %3445 = vrot.lane.b32.xlu0 %v3344, 95
      %v3446 = vpop.permute.xlu0 %3445
      %3447 = vrot.lane.b32.xlu0 %v3350, 95
      %v3448 = vpop.permute.xlu0 %3447
      %v3449 = vsel %vm867, %v3444, %v3446
      %v3450 = vsel %vm867, %v3446, %v3448
      %3456 = vrot.lane.b32.xlu0 %v3366, 94
      %v3457 = vpop.permute.xlu0 %3456
      %3458 = vrot.lane.b32.xlu0 %v3367, 94
      %v3459 = vpop.permute.xlu0 %3458
      %3460 = vrot.lane.b32.xlu0 %v3368, 94
      %v3461 = vpop.permute.xlu0 %3460
      %v3462 = vsel %vm907, %v3457, %v3459
      %v3463 = vsel %vm907, %v3459, %v3461
      %3467 = vset.pattern.permute.xlu0 0
      %3468 = vperm.xlu0 %3467, %v3334
      %v3469 = vpop.permute.xlu0 %3468
      %3472 = vset.pattern.permute.xlu0 0
      %3473 = vperm.xlu0 %3472, %v3335
      %v3474 = vpop.permute.xlu0 %3473
      %v3478 = vunpack.c.l.b16 %v3331
      %v3479 = vunpack.c.h.b16 %v3331
      %v3480 = vunpack.c.l.b16 %v3332
      %v3481 = vunpack.c.h.b16 %v3332
      %v3482 = vpack.c.b16 %v3480, %v3478
      %v3483 = vpack.c.b16 %v3481, %v3479
      %v3486 = vsel %vm1877, %v3483, 0
      %3488 = vmatprep.subr.bf16.mxu0 %v3353
      %3489 = vmatpush1.bf16.msra.mxu0 %v3352
      %3490 = vmatprep.subr.bf16.mxu0 %v3378
      %3491 = vmatpush1.bf16.msra.mxu0 %v3377
      %3492 = vmatprep.subr.bf16.mxu0 %v3391
      %3493 = vmatpush1.bf16.msra.mxu0 %v3390
      %3494 = vmatprep.subr.bf16.mxu0 %v3404
      %3495 = vmatpush1.bf16.msra.mxu0 %v3403
      %3496 = vmatprep.subr.bf16.mxu0 %v3414
      %3497 = vmatpush1.bf16.msra.mxu0 %v3413
      %3498 = vmatprep.subr.bf16.mxu0 %v3427
      %3499 = vmatpush1.bf16.msra.mxu0 %v3426
      %3500 = vmatprep.subr.bf16.mxu0 %v3440
      %3501 = vmatpush1.bf16.msra.mxu0 %v3439
      %3502 = vmatprep.subr.bf16.mxu0 %v3450
      %3503 = vmatpush1.bf16.msra.mxu0 %v3449
      %3504 = vmatprep.subr.bf16.mxu0 %v3463
      %3505 = vmatpush1.bf16.msra.mxu0 %v3462
      %3506 = vmatprep.subr.bf16.mxu0 0
      %3507 = vmatpush1.bf16.msra.mxu0 0
      %3508 = vmatprep.subr.bf16.mxu0 0
      %3509 = vmatpush1.bf16.msra.mxu0 0
      %3510 = vmatprep.subr.bf16.mxu0 0
      %3511 = vmatpush1.bf16.msra.mxu0 0
      %3512 = vmatprep.subr.bf16.mxu0 0
      %3513 = vmatpush1.bf16.msra.mxu0 0
      %3514 = vmatprep.subr.bf16.mxu0 0
      %3515 = vmatpush1.bf16.msra.mxu0 0
      %3516 = vmatprep.subr.bf16.mxu0 0
      %3517 = vmatpush1.bf16.msra.mxu0 0
      %3518 = vmatprep.subr.bf16.mxu0 0
      %3519 = vmatpush1.bf16.msra.mxu0 0
      %3520 = vmatprep.mubr.bf16.mxu0 %v3486
      %3521 = vmatmul.mubr.bf16.gmra.mrb[0].mxu0 %v3482
      %v3522 = vpop.f32.mrb[0].mxu0
      %v3523 = vadd.f32 %v3469, %v3522
      %v3524 = vpop.f32.mrb[0].mxu0
      %v3525 = vadd.f32 %v3469, %v3524
      %v3526 = vpop.f32.mrb[0].mxu0
      %v3527 = vadd.f32 %v3474, %v3526
      %v3528 = vpop.f32.mrb[0].mxu0
      %v3529 = vadd.f32 %v3474, %v3528
      %3530 = vdwg.mxu0
      %v3531 = vadd.f32 %v3523, %v3121
      %v3532 = vadd.f32 %v3525, %v3122
      %v3533 = vadd.f32 %v3527, %v3123
      %v3534 = vadd.f32 %v3529, %v3124
      %s3535 = scalar_lea.vmem %s4, 96
      %v3536 = vld [vmem:[%s3535] sm:$0xff]
      %v3537 = vld [vmem:[%s3535 + $0x8] sm:$0xff]
      %s3538 = scalar_lea.vmem %s5, 96
      %v3539 = vld [vmem:[%s3538] sm:$0xff]
      %v3540 = vld [vmem:[%s3538 + $0x8] sm:$0xff]
      %v3541 = vpack.c.bf16 %v3533, %v3531
      %v3542 = vpack.c.bf16 %v3534, %v3532
      %3545 = vrot.lane.b32.xlu0 %v3541, 17
      %v3546 = vpop.permute.xlu0 %3545
      %3547 = vrot.lane.b32.xlu0 %v3542, 17
      %v3548 = vpop.permute.xlu0 %3547
      %v3549 = vsel %vm494, %v3546, %v3548
      %v3552 = vsel %vm501, 0, %v3546
      %v3555 = vsel %vm501, %v3548, 0
      %v3557 = vmul.bf16 %v3552, %v440
      %v3558 = vmul.bf16 %v3549, %v441
      %v3559 = vmul.bf16 %v3552, %v530
      %v3560 = vmul.bf16 %v3549, %v534
      %v3561 = vmul.bf16 %v3555, %v532
      %v3562 = vmul.bf16 %v3552, %v550
      %v3563 = vmul.bf16 %v3549, %v554
      %v3564 = vmul.bf16 %v3555, %v552
      %v3565 = vmul.bf16 %v3552, %v568
      %v3566 = vmul.bf16 %v3549, %v572
      %v3567 = vmul.bf16 %v3555, %v570
      %v3568 = vmul.bf16 %v3552, %v586
      %v3569 = vmul.bf16 %v3549, %v590
      %v3570 = vmul.bf16 %v3555, %v588
      %v3571 = vmul.bf16 %v3552, %v604
      %v3572 = vmul.bf16 %v3549, %v608
      %v3573 = vmul.bf16 %v3555, %v606
      %3576 = vrot.lane.b32.xlu0 %v3552, 127
      %v3577 = vpop.permute.xlu0 %3576
      %3578 = vrot.lane.b32.xlu0 %v3549, 127
      %v3579 = vpop.permute.xlu0 %3578
      %3580 = vrot.lane.b32.xlu0 %v3555, 127
      %v3581 = vpop.permute.xlu0 %3580
      %v3582 = vsel %vm645, %v3577, %v3579
      %v3583 = vsel %vm645, %v3579, %v3581
      %3589 = vrot.lane.b32.xlu0 %v3559, 126
      %v3590 = vpop.permute.xlu0 %3589
      %3591 = vrot.lane.b32.xlu0 %v3560, 126
      %v3592 = vpop.permute.xlu0 %3591
      %3593 = vrot.lane.b32.xlu0 %v3561, 126
      %v3594 = vpop.permute.xlu0 %3593
      %v3595 = vsel %vm685, %v3590, %v3592
      %v3596 = vsel %vm685, %v3592, %v3594
      %3602 = vrot.lane.b32.xlu0 %v3562, 112
      %v3603 = vpop.permute.xlu0 %3602
      %3604 = vrot.lane.b32.xlu0 %v3563, 112
      %v3605 = vpop.permute.xlu0 %3604
      %3606 = vrot.lane.b32.xlu0 %v3564, 112
      %v3607 = vpop.permute.xlu0 %3606
      %v3608 = vsel %vm725, %v3603, %v3605
      %v3609 = vsel %vm725, %v3605, %v3607
      %3612 = vrot.lane.b32.xlu0 %v3552, 111
      %v3613 = vpop.permute.xlu0 %3612
      %3614 = vrot.lane.b32.xlu0 %v3549, 111
      %v3615 = vpop.permute.xlu0 %3614
      %3616 = vrot.lane.b32.xlu0 %v3555, 111
      %v3617 = vpop.permute.xlu0 %3616
      %v3618 = vsel %vm756, %v3613, %v3615
      %v3619 = vsel %vm756, %v3615, %v3617
      %3625 = vrot.lane.b32.xlu0 %v3565, 110
      %v3626 = vpop.permute.xlu0 %3625
      %3627 = vrot.lane.b32.xlu0 %v3566, 110
      %v3628 = vpop.permute.xlu0 %3627
      %3629 = vrot.lane.b32.xlu0 %v3567, 110
      %v3630 = vpop.permute.xlu0 %3629
      %v3631 = vsel %vm796, %v3626, %v3628
      %v3632 = vsel %vm796, %v3628, %v3630
      %3638 = vrot.lane.b32.xlu0 %v3568, 96
      %v3639 = vpop.permute.xlu0 %3638
      %3640 = vrot.lane.b32.xlu0 %v3569, 96
      %v3641 = vpop.permute.xlu0 %3640
      %3642 = vrot.lane.b32.xlu0 %v3570, 96
      %v3643 = vpop.permute.xlu0 %3642
      %v3644 = vsel %vm836, %v3639, %v3641
      %v3645 = vsel %vm836, %v3641, %v3643
      %3648 = vrot.lane.b32.xlu0 %v3552, 95
      %v3649 = vpop.permute.xlu0 %3648
      %3650 = vrot.lane.b32.xlu0 %v3549, 95
      %v3651 = vpop.permute.xlu0 %3650
      %3652 = vrot.lane.b32.xlu0 %v3555, 95
      %v3653 = vpop.permute.xlu0 %3652
      %v3654 = vsel %vm867, %v3649, %v3651
      %v3655 = vsel %vm867, %v3651, %v3653
      %3661 = vrot.lane.b32.xlu0 %v3571, 94
      %v3662 = vpop.permute.xlu0 %3661
      %3663 = vrot.lane.b32.xlu0 %v3572, 94
      %v3664 = vpop.permute.xlu0 %3663
      %3665 = vrot.lane.b32.xlu0 %v3573, 94
      %v3666 = vpop.permute.xlu0 %3665
      %v3667 = vsel %vm907, %v3662, %v3664
      %v3668 = vsel %vm907, %v3664, %v3666
      %3672 = vset.pattern.permute.xlu0 0
      %3673 = vperm.xlu0 %3672, %v3539
      %v3674 = vpop.permute.xlu0 %3673
      %3677 = vset.pattern.permute.xlu0 0
      %3678 = vperm.xlu0 %3677, %v3540
      %v3679 = vpop.permute.xlu0 %3678
      %v3683 = vunpack.c.l.b16 %v3536
      %v3684 = vunpack.c.h.b16 %v3536
      %v3685 = vunpack.c.l.b16 %v3537
      %v3686 = vunpack.c.h.b16 %v3537
      %v3687 = vpack.c.b16 %v3685, %v3683
      %v3688 = vpack.c.b16 %v3686, %v3684
      %v3691 = vsel %vm1877, %v3688, 0
      %3693 = vmatprep.subr.bf16.mxu0 %v3558
      %3694 = vmatpush1.bf16.msra.mxu0 %v3557
      %3695 = vmatprep.subr.bf16.mxu0 %v3583
      %3696 = vmatpush1.bf16.msra.mxu0 %v3582
      %3697 = vmatprep.subr.bf16.mxu0 %v3596
      %3698 = vmatpush1.bf16.msra.mxu0 %v3595
      %3699 = vmatprep.subr.bf16.mxu0 %v3609
      %3700 = vmatpush1.bf16.msra.mxu0 %v3608
      %3701 = vmatprep.subr.bf16.mxu0 %v3619
      %3702 = vmatpush1.bf16.msra.mxu0 %v3618
      %3703 = vmatprep.subr.bf16.mxu0 %v3632
      %3704 = vmatpush1.bf16.msra.mxu0 %v3631
      %3705 = vmatprep.subr.bf16.mxu0 %v3645
      %3706 = vmatpush1.bf16.msra.mxu0 %v3644
      %3707 = vmatprep.subr.bf16.mxu0 %v3655
      %3708 = vmatpush1.bf16.msra.mxu0 %v3654
      %3709 = vmatprep.subr.bf16.mxu0 %v3668
      %3710 = vmatpush1.bf16.msra.mxu0 %v3667
      %3711 = vmatprep.subr.bf16.mxu0 0
      %3712 = vmatpush1.bf16.msra.mxu0 0
      %3713 = vmatprep.subr.bf16.mxu0 0
      %3714 = vmatpush1.bf16.msra.mxu0 0
      %3715 = vmatprep.subr.bf16.mxu0 0
      %3716 = vmatpush1.bf16.msra.mxu0 0
      %3717 = vmatprep.subr.bf16.mxu0 0
      %3718 = vmatpush1.bf16.msra.mxu0 0
      %3719 = vmatprep.subr.bf16.mxu0 0
      %3720 = vmatpush1.bf16.msra.mxu0 0
      %3721 = vmatprep.subr.bf16.mxu0 0
      %3722 = vmatpush1.bf16.msra.mxu0 0
      %3723 = vmatprep.subr.bf16.mxu0 0
      %3724 = vmatpush1.bf16.msra.mxu0 0
      %3725 = vmatprep.mubr.bf16.mxu0 %v3691
      %3726 = vmatmul.mubr.bf16.gmra.mrb[0].mxu0 %v3687
      %v3727 = vpop.f32.mrb[0].mxu0
      %v3728 = vadd.f32 %v3674, %v3727
      %v3729 = vpop.f32.mrb[0].mxu0
      %v3730 = vadd.f32 %v3674, %v3729
      %v3731 = vpop.f32.mrb[0].mxu0
      %v3732 = vadd.f32 %v3679, %v3731
      %v3733 = vpop.f32.mrb[0].mxu0
      %v3734 = vadd.f32 %v3679, %v3733
      %3735 = vdwg.mxu0
      %v3736 = vmax.f32 %v3728, 0.0
      %v3737 = vmax.f32 %v3730, 0.0
      %v3738 = vmax.f32 %v3732, 0.0
      %v3739 = vmax.f32 %v3734, 0.0
      %s3740 = scalar_lea.vmem %s4, 112
      %v3741 = vld [vmem:[%s3740] sm:$0xff]
      %v3742 = vld [vmem:[%s3740 + $0x8] sm:$0xff]
      %s3743 = scalar_lea.vmem %s5, 112
      %v3744 = vld [vmem:[%s3743] sm:$0xff]
      %v3745 = vld [vmem:[%s3743 + $0x8] sm:$0xff]
      %v3746 = vpack.c.bf16 %v3738, %v3736
      %v3747 = vpack.c.bf16 %v3739, %v3737
      %3750 = vrot.lane.b32.xlu0 %v3746, 17
      %v3751 = vpop.permute.xlu0 %3750
      %3752 = vrot.lane.b32.xlu0 %v3747, 17
      %v3753 = vpop.permute.xlu0 %3752
      %v3754 = vsel %vm494, %v3751, %v3753
      %v3757 = vsel %vm501, 0, %v3751
      %v3760 = vsel %vm501, %v3753, 0
      %v3762 = vmul.bf16 %v3757, %v440
      %v3763 = vmul.bf16 %v3754, %v441
      %v3764 = vmul.bf16 %v3757, %v530
      %v3765 = vmul.bf16 %v3754, %v534
      %v3766 = vmul.bf16 %v3760, %v532
      %v3767 = vmul.bf16 %v3757, %v550
      %v3768 = vmul.bf16 %v3754, %v554
      %v3769 = vmul.bf16 %v3760, %v552
      %v3770 = vmul.bf16 %v3757, %v568
      %v3771 = vmul.bf16 %v3754, %v572
      %v3772 = vmul.bf16 %v3760, %v570
      %v3773 = vmul.bf16 %v3757, %v586
      %v3774 = vmul.bf16 %v3754, %v590
      %v3775 = vmul.bf16 %v3760, %v588
      %v3776 = vmul.bf16 %v3757, %v604
      %v3777 = vmul.bf16 %v3754, %v608
      %v3778 = vmul.bf16 %v3760, %v606
      %3781 = vrot.lane.b32.xlu0 %v3757, 127
      %v3782 = vpop.permute.xlu0 %3781
      %3783 = vrot.lane.b32.xlu0 %v3754, 127
      %v3784 = vpop.permute.xlu0 %3783
      %3785 = vrot.lane.b32.xlu0 %v3760, 127
      %v3786 = vpop.permute.xlu0 %3785
      %v3787 = vsel %vm645, %v3782, %v3784
      %v3788 = vsel %vm645, %v3784, %v3786
      %3794 = vrot.lane.b32.xlu0 %v3764, 126
      %v3795 = vpop.permute.xlu0 %3794
      %3796 = vrot.lane.b32.xlu0 %v3765, 126
      %v3797 = vpop.permute.xlu0 %3796
      %3798 = vrot.lane.b32.xlu0 %v3766, 126
      %v3799 = vpop.permute.xlu0 %3798
      %v3800 = vsel %vm685, %v3795, %v3797
      %v3801 = vsel %vm685, %v3797, %v3799
      %3807 = vrot.lane.b32.xlu0 %v3767, 112
      %v3808 = vpop.permute.xlu0 %3807
      %3809 = vrot.lane.b32.xlu0 %v3768, 112
      %v3810 = vpop.permute.xlu0 %3809
      %3811 = vrot.lane.b32.xlu0 %v3769, 112
      %v3812 = vpop.permute.xlu0 %3811
      %v3813 = vsel %vm725, %v3808, %v3810
      %v3814 = vsel %vm725, %v3810, %v3812
      %3817 = vrot.lane.b32.xlu0 %v3757, 111
      %v3818 = vpop.permute.xlu0 %3817
      %3819 = vrot.lane.b32.xlu0 %v3754, 111
      %v3820 = vpop.permute.xlu0 %3819
      %3821 = vrot.lane.b32.xlu0 %v3760, 111
      %v3822 = vpop.permute.xlu0 %3821
      %v3823 = vsel %vm756, %v3818, %v3820
      %v3824 = vsel %vm756, %v3820, %v3822
      %3830 = vrot.lane.b32.xlu0 %v3770, 110
      %v3831 = vpop.permute.xlu0 %3830
      %3832 = vrot.lane.b32.xlu0 %v3771, 110
      %v3833 = vpop.permute.xlu0 %3832
      %3834 = vrot.lane.b32.xlu0 %v3772, 110
      %v3835 = vpop.permute.xlu0 %3834
      %v3836 = vsel %vm796, %v3831, %v3833
      %v3837 = vsel %vm796, %v3833, %v3835
      %3843 = vrot.lane.b32.xlu0 %v3773, 96
      %v3844 = vpop.permute.xlu0 %3843
      %3845 = vrot.lane.b32.xlu0 %v3774, 96
      %v3846 = vpop.permute.xlu0 %3845
      %3847 = vrot.lane.b32.xlu0 %v3775, 96
      %v3848 = vpop.permute.xlu0 %3847
      %v3849 = vsel %vm836, %v3844, %v3846
      %v3850 = vsel %vm836, %v3846, %v3848
      %3853 = vrot.lane.b32.xlu0 %v3757, 95
      %v3854 = vpop.permute.xlu0 %3853
      %3855 = vrot.lane.b32.xlu0 %v3754, 95
      %v3856 = vpop.permute.xlu0 %3855
      %3857 = vrot.lane.b32.xlu0 %v3760, 95
      %v3858 = vpop.permute.xlu0 %3857
      %v3859 = vsel %vm867, %v3854, %v3856
      %v3860 = vsel %vm867, %v3856, %v3858
      %3866 = vrot.lane.b32.xlu0 %v3776, 94
      %v3867 = vpop.permute.xlu0 %3866
      %3868 = vrot.lane.b32.xlu0 %v3777, 94
      %v3869 = vpop.permute.xlu0 %3868
      %3870 = vrot.lane.b32.xlu0 %v3778, 94
      %v3871 = vpop.permute.xlu0 %3870
      %v3872 = vsel %vm907, %v3867, %v3869
      %v3873 = vsel %vm907, %v3869, %v3871
      %3877 = vset.pattern.permute.xlu0 0
      %3878 = vperm.xlu0 %3877, %v3744
      %v3879 = vpop.permute.xlu0 %3878
      %3882 = vset.pattern.permute.xlu0 0
      %3883 = vperm.xlu0 %3882, %v3745
      %v3884 = vpop.permute.xlu0 %3883
      %v3888 = vunpack.c.l.b16 %v3741
      %v3889 = vunpack.c.h.b16 %v3741
      %v3890 = vunpack.c.l.b16 %v3742
      %v3891 = vunpack.c.h.b16 %v3742
      %v3892 = vpack.c.b16 %v3890, %v3888
      %v3893 = vpack.c.b16 %v3891, %v3889
      %v3896 = vsel %vm1877, %v3893, 0
      %3898 = vmatprep.subr.bf16.mxu0 %v3763
      %3899 = vmatpush1.bf16.msra.mxu0 %v3762
      %3900 = vmatprep.subr.bf16.mxu0 %v3788
      %3901 = vmatpush1.bf16.msra.mxu0 %v3787
      %3902 = vmatprep.subr.bf16.mxu0 %v3801
      %3903 = vmatpush1.bf16.msra.mxu0 %v3800
      %3904 = vmatprep.subr.bf16.mxu0 %v3814
      %3905 = vmatpush1.bf16.msra.mxu0 %v3813
      %3906 = vmatprep.subr.bf16.mxu0 %v3824
      %3907 = vmatpush1.bf16.msra.mxu0 %v3823
      %3908 = vmatprep.subr.bf16.mxu0 %v3837
      %3909 = vmatpush1.bf16.msra.mxu0 %v3836
      %3910 = vmatprep.subr.bf16.mxu0 %v3850
      %3911 = vmatpush1.bf16.msra.mxu0 %v3849
      %3912 = vmatprep.subr.bf16.mxu0 %v3860
      %3913 = vmatpush1.bf16.msra.mxu0 %v3859
      %3914 = vmatprep.subr.bf16.mxu0 %v3873
      %3915 = vmatpush1.bf16.msra.mxu0 %v3872
      %3916 = vmatprep.subr.bf16.mxu0 0
      %3917 = vmatpush1.bf16.msra.mxu0 0
      %3918 = vmatprep.subr.bf16.mxu0 0
      %3919 = vmatpush1.bf16.msra.mxu0 0
      %3920 = vmatprep.subr.bf16.mxu0 0
      %3921 = vmatpush1.bf16.msra.mxu0 0
      %3922 = vmatprep.subr.bf16.mxu0 0
      %3923 = vmatpush1.bf16.msra.mxu0 0
      %3924 = vmatprep.subr.bf16.mxu0 0
      %3925 = vmatpush1.bf16.msra.mxu0 0
      %3926 = vmatprep.subr.bf16.mxu0 0
      %3927 = vmatpush1.bf16.msra.mxu0 0
      %3928 = vmatprep.subr.bf16.mxu0 0
      %3929 = vmatpush1.bf16.msra.mxu0 0
      %3930 = vmatprep.mubr.bf16.mxu0 %v3896
      %3931 = vmatmul.mubr.bf16.gmra.mrb[0].mxu0 %v3892
      %v3932 = vpop.f32.mrb[0].mxu0
      %v3933 = vadd.f32 %v3879, %v3932
      %v3934 = vpop.f32.mrb[0].mxu0
      %v3935 = vadd.f32 %v3879, %v3934
      %v3936 = vpop.f32.mrb[0].mxu0
      %v3937 = vadd.f32 %v3884, %v3936
      %v3938 = vpop.f32.mrb[0].mxu0
      %v3939 = vadd.f32 %v3884, %v3938
      %3940 = vdwg.mxu0
      %v3941 = vadd.f32 %v3933, %v3531
      %v3942 = vadd.f32 %v3935, %v3532
      %v3943 = vadd.f32 %v3937, %v3533
      %v3944 = vadd.f32 %v3939, %v3534
      %s3945 = scalar_lea.vmem %s4, 128
      %v3946 = vld [vmem:[%s3945] sm:$0xff]
      %v3947 = vld [vmem:[%s3945 + $0x8] sm:$0xff]
      %s3948 = scalar_lea.vmem %s5, 128
      %v3949 = vld [vmem:[%s3948] sm:$0xff]
      %v3950 = vld [vmem:[%s3948 + $0x8] sm:$0xff]
      %v3951 = vpack.c.bf16 %v3943, %v3941
      %v3952 = vpack.c.bf16 %v3944, %v3942
      %3955 = vrot.lane.b32.xlu0 %v3951, 17
      %v3956 = vpop.permute.xlu0 %3955
      %3957 = vrot.lane.b32.xlu0 %v3952, 17
      %v3958 = vpop.permute.xlu0 %3957
      %v3959 = vsel %vm494, %v3956, %v3958
      %v3962 = vsel %vm501, 0, %v3956
      %v3965 = vsel %vm501, %v3958, 0
      %v3967 = vmul.bf16 %v3962, %v440
      %v3968 = vmul.bf16 %v3959, %v441
      %v3969 = vmul.bf16 %v3962, %v530
      %v3970 = vmul.bf16 %v3959, %v534
      %v3971 = vmul.bf16 %v3965, %v532
      %v3972 = vmul.bf16 %v3962, %v550
      %v3973 = vmul.bf16 %v3959, %v554
      %v3974 = vmul.bf16 %v3965, %v552
      %v3975 = vmul.bf16 %v3962, %v568
      %v3976 = vmul.bf16 %v3959, %v572
      %v3977 = vmul.bf16 %v3965, %v570
      %v3978 = vmul.bf16 %v3962, %v586
      %v3979 = vmul.bf16 %v3959, %v590
      %v3980 = vmul.bf16 %v3965, %v588
      %v3981 = vmul.bf16 %v3962, %v604
      %v3982 = vmul.bf16 %v3959, %v608
      %v3983 = vmul.bf16 %v3965, %v606
      %3986 = vrot.lane.b32.xlu0 %v3962, 127
      %v3987 = vpop.permute.xlu0 %3986
      %3988 = vrot.lane.b32.xlu0 %v3959, 127
      %v3989 = vpop.permute.xlu0 %3988
      %3990 = vrot.lane.b32.xlu0 %v3965, 127
      %v3991 = vpop.permute.xlu0 %3990
      %v3992 = vsel %vm645, %v3987, %v3989
      %v3993 = vsel %vm645, %v3989, %v3991
      %3999 = vrot.lane.b32.xlu0 %v3969, 126
      %v4000 = vpop.permute.xlu0 %3999
      %4001 = vrot.lane.b32.xlu0 %v3970, 126
      %v4002 = vpop.permute.xlu0 %4001
      %4003 = vrot.lane.b32.xlu0 %v3971, 126
      %v4004 = vpop.permute.xlu0 %4003
      %v4005 = vsel %vm685, %v4000, %v4002
      %v4006 = vsel %vm685, %v4002, %v4004
      %4012 = vrot.lane.b32.xlu0 %v3972, 112
      %v4013 = vpop.permute.xlu0 %4012
      %4014 = vrot.lane.b32.xlu0 %v3973, 112
      %v4015 = vpop.permute.xlu0 %4014
      %4016 = vrot.lane.b32.xlu0 %v3974, 112
      %v4017 = vpop.permute.xlu0 %4016
      %v4018 = vsel %vm725, %v4013, %v4015
      %v4019 = vsel %vm725, %v4015, %v4017
      %4022 = vrot.lane.b32.xlu0 %v3962, 111
      %v4023 = vpop.permute.xlu0 %4022
      %4024 = vrot.lane.b32.xlu0 %v3959, 111
      %v4025 = vpop.permute.xlu0 %4024
      %4026 = vrot.lane.b32.xlu0 %v3965, 111
      %v4027 = vpop.permute.xlu0 %4026
      %v4028 = vsel %vm756, %v4023, %v4025
      %v4029 = vsel %vm756, %v4025, %v4027
      %4035 = vrot.lane.b32.xlu0 %v3975, 110
      %v4036 = vpop.permute.xlu0 %4035
      %4037 = vrot.lane.b32.xlu0 %v3976, 110
      %v4038 = vpop.permute.xlu0 %4037
      %4039 = vrot.lane.b32.xlu0 %v3977, 110
      %v4040 = vpop.permute.xlu0 %4039
      %v4041 = vsel %vm796, %v4036, %v4038
      %v4042 = vsel %vm796, %v4038, %v4040
      %4048 = vrot.lane.b32.xlu0 %v3978, 96
      %v4049 = vpop.permute.xlu0 %4048
      %4050 = vrot.lane.b32.xlu0 %v3979, 96
      %v4051 = vpop.permute.xlu0 %4050
      %4052 = vrot.lane.b32.xlu0 %v3980, 96
      %v4053 = vpop.permute.xlu0 %4052
      %v4054 = vsel %vm836, %v4049, %v4051
      %v4055 = vsel %vm836, %v4051, %v4053
      %4058 = vrot.lane.b32.xlu0 %v3962, 95
      %v4059 = vpop.permute.xlu0 %4058
      %4060 = vrot.lane.b32.xlu0 %v3959, 95
      %v4061 = vpop.permute.xlu0 %4060
      %4062 = vrot.lane.b32.xlu0 %v3965, 95
      %v4063 = vpop.permute.xlu0 %4062
      %v4064 = vsel %vm867, %v4059, %v4061
      %v4065 = vsel %vm867, %v4061, %v4063
      %4071 = vrot.lane.b32.xlu0 %v3981, 94
      %v4072 = vpop.permute.xlu0 %4071
      %4073 = vrot.lane.b32.xlu0 %v3982, 94
      %v4074 = vpop.permute.xlu0 %4073
      %4075 = vrot.lane.b32.xlu0 %v3983, 94
      %v4076 = vpop.permute.xlu0 %4075
      %v4077 = vsel %vm907, %v4072, %v4074
      %v4078 = vsel %vm907, %v4074, %v4076
      %4082 = vset.pattern.permute.xlu0 0
      %4083 = vperm.xlu0 %4082, %v3949
      %v4084 = vpop.permute.xlu0 %4083
      %4087 = vset.pattern.permute.xlu0 0
      %4088 = vperm.xlu0 %4087, %v3950
      %v4089 = vpop.permute.xlu0 %4088
      %v4093 = vunpack.c.l.b16 %v3946
      %v4094 = vunpack.c.h.b16 %v3946
      %v4095 = vunpack.c.l.b16 %v3947
      %v4096 = vunpack.c.h.b16 %v3947
      %v4097 = vpack.c.b16 %v4095, %v4093
      %v4098 = vpack.c.b16 %v4096, %v4094
      %v4101 = vsel %vm1877, %v4098, 0
      %4103 = vmatprep.subr.bf16.mxu0 %v3968
      %4104 = vmatpush1.bf16.msra.mxu0 %v3967
      %4105 = vmatprep.subr.bf16.mxu0 %v3993
      %4106 = vmatpush1.bf16.msra.mxu0 %v3992
      %4107 = vmatprep.subr.bf16.mxu0 %v4006
      %4108 = vmatpush1.bf16.msra.mxu0 %v4005
      %4109 = vmatprep.subr.bf16.mxu0 %v4019
      %4110 = vmatpush1.bf16.msra.mxu0 %v4018
      %4111 = vmatprep.subr.bf16.mxu0 %v4029
      %4112 = vmatpush1.bf16.msra.mxu0 %v4028
      %4113 = vmatprep.subr.bf16.mxu0 %v4042
      %4114 = vmatpush1.bf16.msra.mxu0 %v4041
      %4115 = vmatprep.subr.bf16.mxu0 %v4055
      %4116 = vmatpush1.bf16.msra.mxu0 %v4054
      %4117 = vmatprep.subr.bf16.mxu0 %v4065
      %4118 = vmatpush1.bf16.msra.mxu0 %v4064
      %4119 = vmatprep.subr.bf16.mxu0 %v4078
      %4120 = vmatpush1.bf16.msra.mxu0 %v4077
      %4121 = vmatprep.subr.bf16.mxu0 0
      %4122 = vmatpush1.bf16.msra.mxu0 0
      %4123 = vmatprep.subr.bf16.mxu0 0
      %4124 = vmatpush1.bf16.msra.mxu0 0
      %4125 = vmatprep.subr.bf16.mxu0 0
      %4126 = vmatpush1.bf16.msra.mxu0 0
      %4127 = vmatprep.subr.bf16.mxu0 0
      %4128 = vmatpush1.bf16.msra.mxu0 0
      %4129 = vmatprep.subr.bf16.mxu0 0
      %4130 = vmatpush1.bf16.msra.mxu0 0
      %4131 = vmatprep.subr.bf16.mxu0 0
      %4132 = vmatpush1.bf16.msra.mxu0 0
      %4133 = vmatprep.subr.bf16.mxu0 0
      %4134 = vmatpush1.bf16.msra.mxu0 0
      %4135 = vmatprep.mubr.bf16.mxu0 %v4101
      %4136 = vmatmul.mubr.bf16.gmra.mrb[0].mxu0 %v4097
      %v4137 = vpop.f32.mrb[0].mxu0
      %v4138 = vadd.f32 %v4084, %v4137
      %v4139 = vpop.f32.mrb[0].mxu0
      %v4140 = vadd.f32 %v4084, %v4139
      %v4141 = vpop.f32.mrb[0].mxu0
      %v4142 = vadd.f32 %v4089, %v4141
      %v4143 = vpop.f32.mrb[0].mxu0
      %v4144 = vadd.f32 %v4089, %v4143
      %4145 = vdwg.mxu0
      %v4146 = vmax.f32 %v4138, 0.0
      %v4147 = vmax.f32 %v4140, 0.0
      %v4148 = vmax.f32 %v4142, 0.0
      %v4149 = vmax.f32 %v4144, 0.0
      %s4150 = scalar_lea.vmem %s4, 144
      %v4151 = vld [vmem:[%s4150] sm:$0xff]
      %v4152 = vld [vmem:[%s4150 + $0x8] sm:$0xff]
      %s4153 = scalar_lea.vmem %s5, 144
      %v4154 = vld [vmem:[%s4153] sm:$0xff]
      %v4155 = vld [vmem:[%s4153 + $0x8] sm:$0xff]
      %v4156 = vpack.c.bf16 %v4148, %v4146
      %v4157 = vpack.c.bf16 %v4149, %v4147
      %4160 = vrot.lane.b32.xlu0 %v4156, 17
      %v4161 = vpop.permute.xlu0 %4160
      %4162 = vrot.lane.b32.xlu0 %v4157, 17
      %v4163 = vpop.permute.xlu0 %4162
      %v4164 = vsel %vm494, %v4161, %v4163
      %v4167 = vsel %vm501, 0, %v4161
      %v4170 = vsel %vm501, %v4163, 0
      %v4172 = vmul.bf16 %v4167, %v440
      %v4173 = vmul.bf16 %v4164, %v441
      %v4174 = vmul.bf16 %v4167, %v530
      %v4175 = vmul.bf16 %v4164, %v534
      %v4176 = vmul.bf16 %v4170, %v532
      %v4177 = vmul.bf16 %v4167, %v550
      %v4178 = vmul.bf16 %v4164, %v554
      %v4179 = vmul.bf16 %v4170, %v552
      %v4180 = vmul.bf16 %v4167, %v568
      %v4181 = vmul.bf16 %v4164, %v572
      %v4182 = vmul.bf16 %v4170, %v570
      %v4183 = vmul.bf16 %v4167, %v586
      %v4184 = vmul.bf16 %v4164, %v590
      %v4185 = vmul.bf16 %v4170, %v588
      %v4186 = vmul.bf16 %v4167, %v604
      %v4187 = vmul.bf16 %v4164, %v608
      %v4188 = vmul.bf16 %v4170, %v606
      %4191 = vrot.lane.b32.xlu0 %v4167, 127
      %v4192 = vpop.permute.xlu0 %4191
      %4193 = vrot.lane.b32.xlu0 %v4164, 127
      %v4194 = vpop.permute.xlu0 %4193
      %4195 = vrot.lane.b32.xlu0 %v4170, 127
      %v4196 = vpop.permute.xlu0 %4195
      %v4197 = vsel %vm645, %v4192, %v4194
      %v4198 = vsel %vm645, %v4194, %v4196
      %4204 = vrot.lane.b32.xlu0 %v4174, 126
      %v4205 = vpop.permute.xlu0 %4204
      %4206 = vrot.lane.b32.xlu0 %v4175, 126
      %v4207 = vpop.permute.xlu0 %4206
      %4208 = vrot.lane.b32.xlu0 %v4176, 126
      %v4209 = vpop.permute.xlu0 %4208
      %v4210 = vsel %vm685, %v4205, %v4207
      %v4211 = vsel %vm685, %v4207, %v4209
      %4217 = vrot.lane.b32.xlu0 %v4177, 112
      %v4218 = vpop.permute.xlu0 %4217
      %4219 = vrot.lane.b32.xlu0 %v4178, 112
      %v4220 = vpop.permute.xlu0 %4219
      %4221 = vrot.lane.b32.xlu0 %v4179, 112
      %v4222 = vpop.permute.xlu0 %4221
      %v4223 = vsel %vm725, %v4218, %v4220
      %v4224 = vsel %vm725, %v4220, %v4222
      %4227 = vrot.lane.b32.xlu0 %v4167, 111
      %v4228 = vpop.permute.xlu0 %4227
      %4229 = vrot.lane.b32.xlu0 %v4164, 111
      %v4230 = vpop.permute.xlu0 %4229
      %4231 = vrot.lane.b32.xlu0 %v4170, 111
      %v4232 = vpop.permute.xlu0 %4231
      %v4233 = vsel %vm756, %v4228, %v4230
      %v4234 = vsel %vm756, %v4230, %v4232
      %4240 = vrot.lane.b32.xlu0 %v4180, 110
      %v4241 = vpop.permute.xlu0 %4240
      %4242 = vrot.lane.b32.xlu0 %v4181, 110
      %v4243 = vpop.permute.xlu0 %4242
      %4244 = vrot.lane.b32.xlu0 %v4182, 110
      %v4245 = vpop.permute.xlu0 %4244
      %v4246 = vsel %vm796, %v4241, %v4243
      %v4247 = vsel %vm796, %v4243, %v4245
      %4253 = vrot.lane.b32.xlu0 %v4183, 96
      %v4254 = vpop.permute.xlu0 %4253
      %4255 = vrot.lane.b32.xlu0 %v4184, 96
      %v4256 = vpop.permute.xlu0 %4255
      %4257 = vrot.lane.b32.xlu0 %v4185, 96
      %v4258 = vpop.permute.xlu0 %4257
      %v4259 = vsel %vm836, %v4254, %v4256
      %v4260 = vsel %vm836, %v4256, %v4258
      %4263 = vrot.lane.b32.xlu0 %v4167, 95
      %v4264 = vpop.permute.xlu0 %4263
      %4265 = vrot.lane.b32.xlu0 %v4164, 95
      %v4266 = vpop.permute.xlu0 %4265
      %4267 = vrot.lane.b32.xlu0 %v4170, 95
      %v4268 = vpop.permute.xlu0 %4267
      %v4269 = vsel %vm867, %v4264, %v4266
      %v4270 = vsel %vm867, %v4266, %v4268
      %4276 = vrot.lane.b32.xlu0 %v4186, 94
      %v4277 = vpop.permute.xlu0 %4276
      %4278 = vrot.lane.b32.xlu0 %v4187, 94
      %v4279 = vpop.permute.xlu0 %4278
      %4280 = vrot.lane.b32.xlu0 %v4188, 94
      %v4281 = vpop.permute.xlu0 %4280
      %v4282 = vsel %vm907, %v4277, %v4279
      %v4283 = vsel %vm907, %v4279, %v4281
      %4287 = vset.pattern.permute.xlu0 0
      %4288 = vperm.xlu0 %4287, %v4154
      %v4289 = vpop.permute.xlu0 %4288
      %4292 = vset.pattern.permute.xlu0 0
      %4293 = vperm.xlu0 %4292, %v4155
      %v4294 = vpop.permute.xlu0 %4293
      %v4298 = vunpack.c.l.b16 %v4151
      %v4299 = vunpack.c.h.b16 %v4151
      %v4300 = vunpack.c.l.b16 %v4152
      %v4301 = vunpack.c.h.b16 %v4152
      %v4302 = vpack.c.b16 %v4300, %v4298
      %v4303 = vpack.c.b16 %v4301, %v4299
      %v4306 = vsel %vm1877, %v4303, 0
      %4308 = vmatprep.subr.bf16.mxu0 %v4173
      %4309 = vmatpush1.bf16.msra.mxu0 %v4172
      %4310 = vmatprep.subr.bf16.mxu0 %v4198
      %4311 = vmatpush1.bf16.msra.mxu0 %v4197
      %4312 = vmatprep.subr.bf16.mxu0 %v4211
      %4313 = vmatpush1.bf16.msra.mxu0 %v4210
      %4314 = vmatprep.subr.bf16.mxu0 %v4224
      %4315 = vmatpush1.bf16.msra.mxu0 %v4223
      %4316 = vmatprep.subr.bf16.mxu0 %v4234
      %4317 = vmatpush1.bf16.msra.mxu0 %v4233
      %4318 = vmatprep.subr.bf16.mxu0 %v4247
      %4319 = vmatpush1.bf16.msra.mxu0 %v4246
      %4320 = vmatprep.subr.bf16.mxu0 %v4260
      %4321 = vmatpush1.bf16.msra.mxu0 %v4259
      %4322 = vmatprep.subr.bf16.mxu0 %v4270
      %4323 = vmatpush1.bf16.msra.mxu0 %v4269
      %4324 = vmatprep.subr.bf16.mxu0 %v4283
      %4325 = vmatpush1.bf16.msra.mxu0 %v4282
      %4326 = vmatprep.subr.bf16.mxu0 0
      %4327 = vmatpush1.bf16.msra.mxu0 0
      %4328 = vmatprep.subr.bf16.mxu0 0
      %4329 = vmatpush1.bf16.msra.mxu0 0
      %4330 = vmatprep.subr.bf16.mxu0 0
      %4331 = vmatpush1.bf16.msra.mxu0 0
      %4332 = vmatprep.subr.bf16.mxu0 0
      %4333 = vmatpush1.bf16.msra.mxu0 0
      %4334 = vmatprep.subr.bf16.mxu0 0
      %4335 = vmatpush1.bf16.msra.mxu0 0
      %4336 = vmatprep.subr.bf16.mxu0 0
      %4337 = vmatpush1.bf16.msra.mxu0 0
      %4338 = vmatprep.subr.bf16.mxu0 0
      %4339 = vmatpush1.bf16.msra.mxu0 0
      %4340 = vmatprep.mubr.bf16.mxu0 %v4306
      %4341 = vmatmul.mubr.bf16.gmra.mrb[0].mxu0 %v4302
      %v4342 = vpop.f32.mrb[0].mxu0
      %v4343 = vadd.f32 %v4289, %v4342
      %v4344 = vpop.f32.mrb[0].mxu0
      %v4345 = vadd.f32 %v4289, %v4344
      %v4346 = vpop.f32.mrb[0].mxu0
      %v4347 = vadd.f32 %v4294, %v4346
      %v4348 = vpop.f32.mrb[0].mxu0
      %v4349 = vadd.f32 %v4294, %v4348
      %4350 = vdwg.mxu0
      %v4351 = vadd.f32 %v4343, %v3941
      %v4352 = vadd.f32 %v4345, %v3942
      %v4353 = vadd.f32 %v4347, %v3943
      %v4354 = vadd.f32 %v4349, %v3944
      %v4355 = vld [vmem:[%s6] sm:$0xff]
      %v4356 = vld [vmem:[%s6 + $0x8] sm:$0xff]
      %v4357 = vld [vmem:[%s6 + $0x10] sm:$0xff]
      %v4358 = vld [vmem:[%s6 + $0x18] sm:$0xff]
      %v4359 = vld [vmem:[%s6 + $0x20] sm:$0xff]
      %v4360 = vld [vmem:[%s6 + $0x28] sm:$0xff]
      %v4361 = vld [vmem:[%s7] sm:$0xff]
      %v4362 = vld [vmem:[%s7 + $0x8] sm:$0xff]
      %v4363 = vld [vmem:[%s7 + $0x10] sm:$0xff]
      %v4364 = vld [vmem:[%s7 + $0x18] sm:$0xff]
      %v4365 = vld [vmem:[%s7 + $0x20] sm:$0xff]
      %v4366 = vld [vmem:[%s7 + $0x28] sm:$0xff]
      %v4367 = vpack.c.bf16 %v4353, %v4351
      %v4368 = vpack.c.bf16 %v4354, %v4352
      %4371 = vrot.lane.b32.xlu0 %v4367, 17
      %v4372 = vpop.permute.xlu0 %4371
      %4373 = vrot.lane.b32.xlu0 %v4368, 17
      %v4374 = vpop.permute.xlu0 %4373
      %v4375 = vsel %vm494, %v4372, %v4374
      %v4378 = vsel %vm501, 0, %v4372
      %v4381 = vsel %vm501, %v4374, 0
      %v4383 = vmul.bf16 %v4378, %v440
      %v4384 = vmul.bf16 %v4375, %v441
      %v4385 = vmul.bf16 %v4378, %v530
      %v4386 = vmul.bf16 %v4375, %v534
      %v4387 = vmul.bf16 %v4381, %v532
      %v4388 = vmul.bf16 %v4378, %v550
      %v4389 = vmul.bf16 %v4375, %v554
      %v4390 = vmul.bf16 %v4381, %v552
      %v4391 = vmul.bf16 %v4378, %v568
      %v4392 = vmul.bf16 %v4375, %v572
      %v4393 = vmul.bf16 %v4381, %v570
      %v4394 = vmul.bf16 %v4378, %v586
      %v4395 = vmul.bf16 %v4375, %v590
      %v4396 = vmul.bf16 %v4381, %v588
      %v4397 = vmul.bf16 %v4378, %v604
      %v4398 = vmul.bf16 %v4375, %v608
      %v4399 = vmul.bf16 %v4381, %v606
      %4402 = vrot.lane.b32.xlu0 %v4378, 127
      %v4403 = vpop.permute.xlu0 %4402
      %4404 = vrot.lane.b32.xlu0 %v4375, 127
      %v4405 = vpop.permute.xlu0 %4404
      %4406 = vrot.lane.b32.xlu0 %v4381, 127
      %v4407 = vpop.permute.xlu0 %4406
      %v4408 = vsel %vm645, %v4403, %v4405
      %v4409 = vsel %vm645, %v4405, %v4407
      %4415 = vrot.lane.b32.xlu0 %v4385, 126
      %v4416 = vpop.permute.xlu0 %4415
      %4417 = vrot.lane.b32.xlu0 %v4386, 126
      %v4418 = vpop.permute.xlu0 %4417
      %4419 = vrot.lane.b32.xlu0 %v4387, 126
      %v4420 = vpop.permute.xlu0 %4419
      %v4421 = vsel %vm685, %v4416, %v4418
      %v4422 = vsel %vm685, %v4418, %v4420
      %4428 = vrot.lane.b32.xlu0 %v4388, 112
      %v4429 = vpop.permute.xlu0 %4428
      %4430 = vrot.lane.b32.xlu0 %v4389, 112
      %v4431 = vpop.permute.xlu0 %4430
      %4432 = vrot.lane.b32.xlu0 %v4390, 112
      %v4433 = vpop.permute.xlu0 %4432
      %v4434 = vsel %vm725, %v4429, %v4431
      %v4435 = vsel %vm725, %v4431, %v4433
      %4438 = vrot.lane.b32.xlu0 %v4378, 111
      %v4439 = vpop.permute.xlu0 %4438
      %4440 = vrot.lane.b32.xlu0 %v4375, 111
      %v4441 = vpop.permute.xlu0 %4440
      %4442 = vrot.lane.b32.xlu0 %v4381, 111
      %v4443 = vpop.permute.xlu0 %4442
      %v4444 = vsel %vm756, %v4439, %v4441
      %v4445 = vsel %vm756, %v4441, %v4443
      %4451 = vrot.lane.b32.xlu0 %v4391, 110
      %v4452 = vpop.permute.xlu0 %4451
      %4453 = vrot.lane.b32.xlu0 %v4392, 110
      %v4454 = vpop.permute.xlu0 %4453
      %4455 = vrot.lane.b32.xlu0 %v4393, 110
      %v4456 = vpop.permute.xlu0 %4455
      %v4457 = vsel %vm796, %v4452, %v4454
      %v4458 = vsel %vm796, %v4454, %v4456
      %4464 = vrot.lane.b32.xlu0 %v4394, 96
      %v4465 = vpop.permute.xlu0 %4464
      %4466 = vrot.lane.b32.xlu0 %v4395, 96
      %v4467 = vpop.permute.xlu0 %4466
      %4468 = vrot.lane.b32.xlu0 %v4396, 96
      %v4469 = vpop.permute.xlu0 %4468
      %v4470 = vsel %vm836, %v4465, %v4467
      %v4471 = vsel %vm836, %v4467, %v4469
      %4474 = vrot.lane.b32.xlu0 %v4378, 95
      %v4475 = vpop.permute.xlu0 %4474
      %4476 = vrot.lane.b32.xlu0 %v4375, 95
      %v4477 = vpop.permute.xlu0 %4476
      %4478 = vrot.lane.b32.xlu0 %v4381, 95
      %v4479 = vpop.permute.xlu0 %4478
      %v4480 = vsel %vm867, %v4475, %v4477
      %v4481 = vsel %vm867, %v4477, %v4479
      %4487 = vrot.lane.b32.xlu0 %v4397, 94
      %v4488 = vpop.permute.xlu0 %4487
      %4489 = vrot.lane.b32.xlu0 %v4398, 94
      %v4490 = vpop.permute.xlu0 %4489
      %4491 = vrot.lane.b32.xlu0 %v4399, 94
      %v4492 = vpop.permute.xlu0 %4491
      %v4493 = vsel %vm907, %v4488, %v4490
      %v4494 = vsel %vm907, %v4490, %v4492
      %4498 = vset.pattern.permute.xlu0 0
      %4499 = vperm.xlu0 %4498, %v4361
      %v4500 = vpop.permute.xlu0 %4499
      %4503 = vset.pattern.permute.xlu0 0
      %4504 = vperm.xlu0 %4503, %v4362
      %v4505 = vpop.permute.xlu0 %4504
      %4508 = vset.pattern.permute.xlu0 0
      %4509 = vperm.xlu0 %4508, %v4363
      %v4510 = vpop.permute.xlu0 %4509
      %4513 = vset.pattern.permute.xlu0 0
      %4514 = vperm.xlu0 %4513, %v4364
      %v4515 = vpop.permute.xlu0 %4514
      %4518 = vset.pattern.permute.xlu0 0
      %4519 = vperm.xlu0 %4518, %v4365
      %v4520 = vpop.permute.xlu0 %4519
      %4523 = vset.pattern.permute.xlu0 0
      %4524 = vperm.xlu0 %4523, %v4366
      %v4525 = vpop.permute.xlu0 %4524
      %v4533 = vunpack.c.l.b16 %v4355
      %v4534 = vunpack.c.h.b16 %v4355
      %v4535 = vunpack.c.l.b16 %v4356
      %v4536 = vunpack.c.h.b16 %v4356
      %v4537 = vunpack.c.l.b16 %v4357
      %v4538 = vunpack.c.h.b16 %v4357
      %v4539 = vunpack.c.l.b16 %v4358
      %v4540 = vunpack.c.h.b16 %v4358
      %v4541 = vunpack.c.l.b16 %v4359
      %v4542 = vunpack.c.h.b16 %v4359
      %v4543 = vunpack.c.l.b16 %v4360
      %v4544 = vunpack.c.h.b16 %v4360
      %v4545 = vpack.c.b16 %v4535, %v4533
      %v4546 = vpack.c.b16 %v4536, %v4534
      %v4547 = vpack.c.b16 %v4539, %v4537
      %v4548 = vpack.c.b16 %v4540, %v4538
      %v4549 = vpack.c.b16 %v4543, %v4541
      %v4550 = vpack.c.b16 %v4544, %v4542
      %v4555 = vsel %vm1877, %v4546, 0
      %v4558 = vsel %vm1877, %v4548, 0
      %v4561 = vsel %vm1877, %v4550, 0
      %4563 = vmatprep.subr.bf16.mxu0 %v4384
      %4564 = vmatpush1.bf16.msra.mxu0 %v4383
      %4565 = vmatprep.subr.bf16.mxu0 %v4409
      %4566 = vmatpush1.bf16.msra.mxu0 %v4408
      %4567 = vmatprep.subr.bf16.mxu0 %v4422
      %4568 = vmatpush1.bf16.msra.mxu0 %v4421
      %4569 = vmatprep.subr.bf16.mxu0 %v4435
      %4570 = vmatpush1.bf16.msra.mxu0 %v4434
      %4571 = vmatprep.subr.bf16.mxu0 %v4445
      %4572 = vmatpush1.bf16.msra.mxu0 %v4444
      %4573 = vmatprep.subr.bf16.mxu0 %v4458
      %4574 = vmatpush1.bf16.msra.mxu0 %v4457
      %4575 = vmatprep.subr.bf16.mxu0 %v4471
      %4576 = vmatpush1.bf16.msra.mxu0 %v4470
      %4577 = vmatprep.subr.bf16.mxu0 %v4481
      %4578 = vmatpush1.bf16.msra.mxu0 %v4480
      %4579 = vmatprep.subr.bf16.mxu0 %v4494
      %4580 = vmatpush1.bf16.msra.mxu0 %v4493
      %4581 = vmatprep.subr.bf16.mxu0 0
      %4582 = vmatpush1.bf16.msra.mxu0 0
      %4583 = vmatprep.subr.bf16.mxu0 0
      %4584 = vmatpush1.bf16.msra.mxu0 0
      %4585 = vmatprep.subr.bf16.mxu0 0
      %4586 = vmatpush1.bf16.msra.mxu0 0
      %4587 = vmatprep.subr.bf16.mxu0 0
      %4588 = vmatpush1.bf16.msra.mxu0 0
      %4589 = vmatprep.subr.bf16.mxu0 0
      %4590 = vmatpush1.bf16.msra.mxu0 0
      %4591 = vmatprep.subr.bf16.mxu0 0
      %4592 = vmatpush1.bf16.msra.mxu0 0
      %4593 = vmatprep.subr.bf16.mxu0 0
      %4594 = vmatpush1.bf16.msra.mxu0 0
      %4595 = vmatprep.mubr.bf16.mxu0 %v4555
      %4596 = vmatmul.mubr.bf16.gmra.mrb[0].mxu0 %v4545
      %v4597 = vpop.f32.mrb[0].mxu0
      %v4598 = vadd.f32 %v4500, %v4597
      %v4599 = vpop.f32.mrb[0].mxu0
      %v4600 = vadd.f32 %v4500, %v4599
      %v4601 = vpop.f32.mrb[0].mxu0
      %v4602 = vadd.f32 %v4505, %v4601
      %v4603 = vpop.f32.mrb[0].mxu0
      %v4604 = vadd.f32 %v4505, %v4603
      %4605 = vmatprep.mubr.bf16.mxu0 %v4558
      %4606 = vmatmul.mubr.bf16.gmra.mrb[0].mxu0 %v4547
      %v4607 = vpop.f32.mrb[0].mxu0
      %v4608 = vadd.f32 %v4510, %v4607
      %v4609 = vpop.f32.mrb[0].mxu0
      %v4610 = vadd.f32 %v4510, %v4609
      %v4611 = vpop.f32.mrb[0].mxu0
      %v4612 = vadd.f32 %v4515, %v4611
      %v4613 = vpop.f32.mrb[0].mxu0
      %v4614 = vadd.f32 %v4515, %v4613
      %4615 = vmatprep.mubr.bf16.mxu0 %v4561
      %4616 = vmatmul.mubr.bf16.gmra.mrb[0].mxu0 %v4549
      %v4617 = vpop.f32.mrb[0].mxu0
      %v4618 = vadd.f32 %v4520, %v4617
      %v4619 = vpop.f32.mrb[0].mxu0
      %v4620 = vadd.f32 %v4520, %v4619
      %v4621 = vpop.f32.mrb[0].mxu0
      %v4622 = vadd.f32 %v4525, %v4621
      %v4623 = vpop.f32.mrb[0].mxu0
      %v4624 = vadd.f32 %v4525, %v4623
      %4625 = vdwg.mxu0
      %v4626 = vmax.f32 %v4598, 0.0
      %v4627 = vmax.f32 %v4600, 0.0
      %v4628 = vmax.f32 %v4602, 0.0
      %v4629 = vmax.f32 %v4604, 0.0
      %v4630 = vmax.f32 %v4608, 0.0
      %v4631 = vmax.f32 %v4610, 0.0
      %v4632 = vmax.f32 %v4612, 0.0
      %v4633 = vmax.f32 %v4614, 0.0
      %v4634 = vmax.f32 %v4618, 0.0
      %v4635 = vmax.f32 %v4620, 0.0
      %v4636 = vmax.f32 %v4622, 0.0
      %v4637 = vmax.f32 %v4624, 0.0
      %v4638 = vld [vmem:[%s8] sm:$0xff]
      %v4639 = vld [vmem:[%s8 + $0x8] sm:$0xff]
      %v4640 = vld [vmem:[%s8 + $0x10] sm:$0xff]
      %v4641 = vld [vmem:[%s8 + $0x18] sm:$0xff]
      %v4642 = vld [vmem:[%s8 + $0x20] sm:$0xff]
      %v4643 = vld [vmem:[%s8 + $0x28] sm:$0xff]
      %v4644 = vld [vmem:[%s8 + $0x30] sm:$0xff]
      %v4645 = vld [vmem:[%s8 + $0x38] sm:$0xff]
      %v4646 = vld [vmem:[%s8 + $0x40] sm:$0xff]
      %v4647 = vld [vmem:[%s8 + $0x48] sm:$0xff]
      %v4648 = vld [vmem:[%s8 + $0x50] sm:$0xff]
      %v4649 = vld [vmem:[%s8 + $0x58] sm:$0xff]
      %v4650 = vld [vmem:[%s8 + $0x60] sm:$0xff]
      %v4651 = vld [vmem:[%s8 + $0x68] sm:$0xff]
      %v4652 = vld [vmem:[%s8 + $0x70] sm:$0xff]
      %v4653 = vld [vmem:[%s8 + $0x78] sm:$0xff]
      %v4654 = vld [vmem:[%s8 + $0x80] sm:$0xff]
      %v4655 = vld [vmem:[%s8 + $0x88] sm:$0xff]
      %v4656 = vld [vmem:[%s8 + $0x90] sm:$0xff]
      %v4657 = vld [vmem:[%s8 + $0x98] sm:$0xff]
      %v4658 = vld [vmem:[%s8 + $0xa0] sm:$0xff]
      %v4659 = vld [vmem:[%s8 + $0xa8] sm:$0xff]
      %v4660 = vld [vmem:[%s8 + $0xb0] sm:$0xff]
      %v4661 = vld [vmem:[%s8 + $0xb8] sm:$0xff]
      %v4662 = vld [vmem:[%s8 + $0xc0] sm:$0xff]
      %v4663 = vld [vmem:[%s8 + $0xc8] sm:$0xff]
      %v4664 = vld [vmem:[%s8 + $0xd0] sm:$0xff]
      %v4665 = vld [vmem:[%s8 + $0xd8] sm:$0xff]
      %v4666 = vld [vmem:[%s8 + $0xe0] sm:$0xff]
      %v4667 = vld [vmem:[%s8 + $0xe8] sm:$0xff]
      %v4668 = vld [vmem:[%s8 + $0xf0] sm:$0xff]
      %v4669 = vld [vmem:[%s8 + $0xf8] sm:$0xff]
      %v4670 = vld [vmem:[%s8 + $0x100] sm:$0xff]
      %v4671 = vld [vmem:[%s8 + $0x108] sm:$0xff]
      %v4672 = vld [vmem:[%s8 + $0x110] sm:$0xff]
      %v4673 = vld [vmem:[%s8 + $0x118] sm:$0xff]
      %v4674 = vld [vmem:[%s9] sm:$0xff]
      %v4675 = vld [vmem:[%s9 + $0x8] sm:$0xff]
      %v4676 = vld [vmem:[%s9 + $0x10] sm:$0xff]
      %v4677 = vld [vmem:[%s9 + $0x18] sm:$0xff]
      %v4678 = vld [vmem:[%s9 + $0x20] sm:$0xff]
      %v4679 = vld [vmem:[%s9 + $0x28] sm:$0xff]
      %v4680 = vld [vmem:[%s9 + $0x30] sm:$0xff]
      %v4681 = vld [vmem:[%s9 + $0x38] sm:$0xff]
      %v4682 = vld [vmem:[%s9 + $0x40] sm:$0xff]
      %v4683 = vld [vmem:[%s9 + $0x48] sm:$0xff]
      %v4684 = vld [vmem:[%s9 + $0x50] sm:$0xff]
      %v4685 = vld [vmem:[%s9 + $0x58] sm:$0xff]
      %v4686 = vld [vmem:[%s9 + $0x60] sm:$0xff]
      %v4687 = vld [vmem:[%s9 + $0x68] sm:$0xff]
      %v4688 = vld [vmem:[%s9 + $0x70] sm:$0xff]
      %v4689 = vld [vmem:[%s9 + $0x78] sm:$0xff]
      %v4690 = vld [vmem:[%s9 + $0x80] sm:$0xff]
      %v4691 = vld [vmem:[%s9 + $0x88] sm:$0xff]
      %v4692 = vpack.c.bf16 %v4628, %v4626
      %v4693 = vpack.c.bf16 %v4629, %v4627
      %v4694 = vpack.c.bf16 %v4632, %v4630
      %v4695 = vpack.c.bf16 %v4633, %v4631
      %v4696 = vpack.c.bf16 %v4636, %v4634
      %v4697 = vpack.c.bf16 %v4637, %v4635
      %4704 = vrot.lane.b32.xlu0 %v4692, 17
      %v4705 = vpop.permute.xlu0 %4704
      %4706 = vrot.lane.b32.xlu0 %v4693, 17
      %v4707 = vpop.permute.xlu0 %4706
      %4708 = vrot.lane.b32.xlu0 %v4694, 17
      %v4709 = vpop.permute.xlu0 %4708
      %4710 = vrot.lane.b32.xlu0 %v4695, 17
      %v4711 = vpop.permute.xlu0 %4710
      %4712 = vrot.lane.b32.xlu0 %v4696, 17
      %v4713 = vpop.permute.xlu0 %4712
      %4714 = vrot.lane.b32.xlu0 %v4697, 17
      %v4715 = vpop.permute.xlu0 %4714
      %v4716 = vsel %vm494, %v4705, %v4707
      %v4717 = vsel %vm494, %v4709, %v4711
      %v4718 = vsel %vm494, %v4713, %v4715
      %v4723 = vsel %vm501, 0, %v4705
      %v4726 = vsel %vm501, 0, %v4709
      %v4729 = vsel %vm501, 0, %v4713
      %v4732 = vsel %vm501, %v4707, 0
      %v4735 = vsel %vm501, %v4711, 0
      %v4738 = vsel %vm501, %v4715, 0
      %v4740 = vmul.bf16 %v4723, %v440
      %v4741 = vmul.bf16 %v4716, %v441
      %v4742 = vmul.bf16 %v4726, %v440
      %v4743 = vmul.bf16 %v4717, %v441
      %v4744 = vmul.bf16 %v4729, %v440
      %v4745 = vmul.bf16 %v4718, %v441
      %v4746 = vmul.bf16 %v4723, %v530
      %v4747 = vmul.bf16 %v4716, %v534
      %v4748 = vmul.bf16 %v4732, %v532
      %v4749 = vmul.bf16 %v4726, %v530
      %v4750 = vmul.bf16 %v4717, %v534
      %v4751 = vmul.bf16 %v4735, %v532
      %v4752 = vmul.bf16 %v4729, %v530
      %v4753 = vmul.bf16 %v4718, %v534
      %v4754 = vmul.bf16 %v4738, %v532
      %v4755 = vmul.bf16 %v4723, %v550
      %v4756 = vmul.bf16 %v4716, %v554
      %v4757 = vmul.bf16 %v4732, %v552
      %v4758 = vmul.bf16 %v4726, %v550
      %v4759 = vmul.bf16 %v4717, %v554
      %v4760 = vmul.bf16 %v4735, %v552
      %v4761 = vmul.bf16 %v4729, %v550
      %v4762 = vmul.bf16 %v4718, %v554
      %v4763 = vmul.bf16 %v4738, %v552
      %v4764 = vmul.bf16 %v4723, %v568
      %v4765 = vmul.bf16 %v4716, %v572
      %v4766 = vmul.bf16 %v4732, %v570
      %v4767 = vmul.bf16 %v4726, %v568
      %v4768 = vmul.bf16 %v4717, %v572
      %v4769 = vmul.bf16 %v4735, %v570
      %v4770 = vmul.bf16 %v4729, %v568
      %v4771 = vmul.bf16 %v4718, %v572
      %v4772 = vmul.bf16 %v4738, %v570
      %v4773 = vmul.bf16 %v4723, %v586
      %v4774 = vmul.bf16 %v4716, %v590
      %v4775 = vmul.bf16 %v4732, %v588
      %v4776 = vmul.bf16 %v4726, %v586
      %v4777 = vmul.bf16 %v4717, %v590
      %v4778 = vmul.bf16 %v4735, %v588
      %v4779 = vmul.bf16 %v4729, %v586
      %v4780 = vmul.bf16 %v4718, %v590
      %v4781 = vmul.bf16 %v4738, %v588
      %v4782 = vmul.bf16 %v4723, %v604
      %v4783 = vmul.bf16 %v4716, %v608
      %v4784 = vmul.bf16 %v4732, %v606
      %v4785 = vmul.bf16 %v4726, %v604
      %v4786 = vmul.bf16 %v4717, %v608
      %v4787 = vmul.bf16 %v4735, %v606
      %v4788 = vmul.bf16 %v4729, %v604
      %v4789 = vmul.bf16 %v4718, %v608
      %v4790 = vmul.bf16 %v4738, %v606
      %4797 = vrot.lane.b32.xlu0 %v4723, 127
      %v4798 = vpop.permute.xlu0 %4797
      %4799 = vrot.lane.b32.xlu0 %v4716, 127
      %v4800 = vpop.permute.xlu0 %4799
      %4801 = vrot.lane.b32.xlu0 %v4732, 127
      %v4802 = vpop.permute.xlu0 %4801
      %4803 = vrot.lane.b32.xlu0 %v4726, 127
      %v4804 = vpop.permute.xlu0 %4803
      %4805 = vrot.lane.b32.xlu0 %v4717, 127
      %v4806 = vpop.permute.xlu0 %4805
      %4807 = vrot.lane.b32.xlu0 %v4735, 127
      %v4808 = vpop.permute.xlu0 %4807
      %4809 = vrot.lane.b32.xlu0 %v4729, 127
      %v4810 = vpop.permute.xlu0 %4809
      %4811 = vrot.lane.b32.xlu0 %v4718, 127
      %v4812 = vpop.permute.xlu0 %4811
      %4813 = vrot.lane.b32.xlu0 %v4738, 127
      %v4814 = vpop.permute.xlu0 %4813
      %v4815 = vsel %vm645, %v4798, %v4800
      %v4816 = vsel %vm645, %v4800, %v4802
      %v4817 = vsel %vm645, %v4804, %v4806
      %v4818 = vsel %vm645, %v4806, %v4808
      %v4819 = vsel %vm645, %v4810, %v4812
      %v4820 = vsel %vm645, %v4812, %v4814
      %4836 = vrot.lane.b32.xlu0 %v4746, 126
      %v4837 = vpop.permute.xlu0 %4836
      %4838 = vrot.lane.b32.xlu0 %v4747, 126
      %v4839 = vpop.permute.xlu0 %4838
      %4840 = vrot.lane.b32.xlu0 %v4748, 126
      %v4841 = vpop.permute.xlu0 %4840
      %4842 = vrot.lane.b32.xlu0 %v4749, 126
      %v4843 = vpop.permute.xlu0 %4842
      %4844 = vrot.lane.b32.xlu0 %v4750, 126
      %v4845 = vpop.permute.xlu0 %4844
      %4846 = vrot.lane.b32.xlu0 %v4751, 126
      %v4847 = vpop.permute.xlu0 %4846
      %4848 = vrot.lane.b32.xlu0 %v4752, 126
      %v4849 = vpop.permute.xlu0 %4848
      %4850 = vrot.lane.b32.xlu0 %v4753, 126
      %v4851 = vpop.permute.xlu0 %4850
      %4852 = vrot.lane.b32.xlu0 %v4754, 126
      %v4853 = vpop.permute.xlu0 %4852
      %v4854 = vsel %vm685, %v4837, %v4839
      %v4855 = vsel %vm685, %v4839, %v4841
      %v4856 = vsel %vm685, %v4843, %v4845
      %v4857 = vsel %vm685, %v4845, %v4847
      %v4858 = vsel %vm685, %v4849, %v4851
      %v4859 = vsel %vm685, %v4851, %v4853
      %4875 = vrot.lane.b32.xlu0 %v4755, 112
      %v4876 = vpop.permute.xlu0 %4875
      %4877 = vrot.lane.b32.xlu0 %v4756, 112
      %v4878 = vpop.permute.xlu0 %4877
      %4879 = vrot.lane.b32.xlu0 %v4757, 112
      %v4880 = vpop.permute.xlu0 %4879
      %4881 = vrot.lane.b32.xlu0 %v4758, 112
      %v4882 = vpop.permute.xlu0 %4881
      %4883 = vrot.lane.b32.xlu0 %v4759, 112
      %v4884 = vpop.permute.xlu0 %4883
      %4885 = vrot.lane.b32.xlu0 %v4760, 112
      %v4886 = vpop.permute.xlu0 %4885
      %4887 = vrot.lane.b32.xlu0 %v4761, 112
      %v4888 = vpop.permute.xlu0 %4887
      %4889 = vrot.lane.b32.xlu0 %v4762, 112
      %v4890 = vpop.permute.xlu0 %4889
      %4891 = vrot.lane.b32.xlu0 %v4763, 112
      %v4892 = vpop.permute.xlu0 %4891
      %v4893 = vsel %vm725, %v4876, %v4878
      %v4894 = vsel %vm725, %v4878, %v4880
      %v4895 = vsel %vm725, %v4882, %v4884
      %v4896 = vsel %vm725, %v4884, %v4886
      %v4897 = vsel %vm725, %v4888, %v4890
      %v4898 = vsel %vm725, %v4890, %v4892
      %4905 = vrot.lane.b32.xlu0 %v4723, 111
      %v4906 = vpop.permute.xlu0 %4905
      %4907 = vrot.lane.b32.xlu0 %v4716, 111
      %v4908 = vpop.permute.xlu0 %4907
      %4909 = vrot.lane.b32.xlu0 %v4732, 111
      %v4910 = vpop.permute.xlu0 %4909
      %4911 = vrot.lane.b32.xlu0 %v4726, 111
      %v4912 = vpop.permute.xlu0 %4911
      %4913 = vrot.lane.b32.xlu0 %v4717, 111
      %v4914 = vpop.permute.xlu0 %4913
      %4915 = vrot.lane.b32.xlu0 %v4735, 111
      %v4916 = vpop.permute.xlu0 %4915
      %4917 = vrot.lane.b32.xlu0 %v4729, 111
      %v4918 = vpop.permute.xlu0 %4917
      %4919 = vrot.lane.b32.xlu0 %v4718, 111
      %v4920 = vpop.permute.xlu0 %4919
      %4921 = vrot.lane.b32.xlu0 %v4738, 111
      %v4922 = vpop.permute.xlu0 %4921
      %v4923 = vsel %vm756, %v4906, %v4908
      %v4924 = vsel %vm756, %v4908, %v4910
      %v4925 = vsel %vm756, %v4912, %v4914
      %v4926 = vsel %vm756, %v4914, %v4916
      %v4927 = vsel %vm756, %v4918, %v4920
      %v4928 = vsel %vm756, %v4920, %v4922
      %4944 = vrot.lane.b32.xlu0 %v4764, 110
      %v4945 = vpop.permute.xlu0 %4944
      %4946 = vrot.lane.b32.xlu0 %v4765, 110
      %v4947 = vpop.permute.xlu0 %4946
      %4948 = vrot.lane.b32.xlu0 %v4766, 110
      %v4949 = vpop.permute.xlu0 %4948
      %4950 = vrot.lane.b32.xlu0 %v4767, 110
      %v4951 = vpop.permute.xlu0 %4950
      %4952 = vrot.lane.b32.xlu0 %v4768, 110
      %v4953 = vpop.permute.xlu0 %4952
      %4954 = vrot.lane.b32.xlu0 %v4769, 110
      %v4955 = vpop.permute.xlu0 %4954
      %4956 = vrot.lane.b32.xlu0 %v4770, 110
      %v4957 = vpop.permute.xlu0 %4956
      %4958 = vrot.lane.b32.xlu0 %v4771, 110
      %v4959 = vpop.permute.xlu0 %4958
      %4960 = vrot.lane.b32.xlu0 %v4772, 110
      %v4961 = vpop.permute.xlu0 %4960
      %v4962 = vsel %vm796, %v4945, %v4947
      %v4963 = vsel %vm796, %v4947, %v4949
      %v4964 = vsel %vm796, %v4951, %v4953
      %v4965 = vsel %vm796, %v4953, %v4955
      %v4966 = vsel %vm796, %v4957, %v4959
      %v4967 = vsel %vm796, %v4959, %v4961
      %4983 = vrot.lane.b32.xlu0 %v4773, 96
      %v4984 = vpop.permute.xlu0 %4983
      %4985 = vrot.lane.b32.xlu0 %v4774, 96
      %v4986 = vpop.permute.xlu0 %4985
      %4987 = vrot.lane.b32.xlu0 %v4775, 96
      %v4988 = vpop.permute.xlu0 %4987
      %4989 = vrot.lane.b32.xlu0 %v4776, 96
      %v4990 = vpop.permute.xlu0 %4989
      %4991 = vrot.lane.b32.xlu0 %v4777, 96
      %v4992 = vpop.permute.xlu0 %4991
      %4993 = vrot.lane.b32.xlu0 %v4778, 96
      %v4994 = vpop.permute.xlu0 %4993
      %4995 = vrot.lane.b32.xlu0 %v4779, 96
      %v4996 = vpop.permute.xlu0 %4995
      %4997 = vrot.lane.b32.xlu0 %v4780, 96
      %v4998 = vpop.permute.xlu0 %4997
      %4999 = vrot.lane.b32.xlu0 %v4781, 96
      %v5000 = vpop.permute.xlu0 %4999
      %v5001 = vsel %vm836, %v4984, %v4986
      %v5002 = vsel %vm836, %v4986, %v4988
      %v5003 = vsel %vm836, %v4990, %v4992
      %v5004 = vsel %vm836, %v4992, %v4994
      %v5005 = vsel %vm836, %v4996, %v4998
      %v5006 = vsel %vm836, %v4998, %v5000
      %5013 = vrot.lane.b32.xlu0 %v4723, 95
      %v5014 = vpop.permute.xlu0 %5013
      %5015 = vrot.lane.b32.xlu0 %v4716, 95
      %v5016 = vpop.permute.xlu0 %5015
      %5017 = vrot.lane.b32.xlu0 %v4732, 95
      %v5018 = vpop.permute.xlu0 %5017
      %5019 = vrot.lane.b32.xlu0 %v4726, 95
      %v5020 = vpop.permute.xlu0 %5019
      %5021 = vrot.lane.b32.xlu0 %v4717, 95
      %v5022 = vpop.permute.xlu0 %5021
      %5023 = vrot.lane.b32.xlu0 %v4735, 95
      %v5024 = vpop.permute.xlu0 %5023
      %5025 = vrot.lane.b32.xlu0 %v4729, 95
      %v5026 = vpop.permute.xlu0 %5025
      %5027 = vrot.lane.b32.xlu0 %v4718, 95
      %v5028 = vpop.permute.xlu0 %5027
      %5029 = vrot.lane.b32.xlu0 %v4738, 95
      %v5030 = vpop.permute.xlu0 %5029
      %v5031 = vsel %vm867, %v5014, %v5016
      %v5032 = vsel %vm867, %v5016, %v5018
      %v5033 = vsel %vm867, %v5020, %v5022
      %v5034 = vsel %vm867, %v5022, %v5024
      %v5035 = vsel %vm867, %v5026, %v5028
      %v5036 = vsel %vm867, %v5028, %v5030
      %5052 = vrot.lane.b32.xlu0 %v4782, 94
      %v5053 = vpop.permute.xlu0 %5052
      %5054 = vrot.lane.b32.xlu0 %v4783, 94
      %v5055 = vpop.permute.xlu0 %5054
      %5056 = vrot.lane.b32.xlu0 %v4784, 94
      %v5057 = vpop.permute.xlu0 %5056
      %5058 = vrot.lane.b32.xlu0 %v4785, 94
      %v5059 = vpop.permute.xlu0 %5058
      %5060 = vrot.lane.b32.xlu0 %v4786, 94
      %v5061 = vpop.permute.xlu0 %5060
      %5062 = vrot.lane.b32.xlu0 %v4787, 94
      %v5063 = vpop.permute.xlu0 %5062
      %5064 = vrot.lane.b32.xlu0 %v4788, 94
      %v5065 = vpop.permute.xlu0 %5064
      %5066 = vrot.lane.b32.xlu0 %v4789, 94
      %v5067 = vpop.permute.xlu0 %5066
      %5068 = vrot.lane.b32.xlu0 %v4790, 94
      %v5069 = vpop.permute.xlu0 %5068
      %v5070 = vsel %vm907, %v5053, %v5055
      %v5071 = vsel %vm907, %v5055, %v5057
      %v5072 = vsel %vm907, %v5059, %v5061
      %v5073 = vsel %vm907, %v5061, %v5063
      %v5074 = vsel %vm907, %v5065, %v5067
      %v5075 = vsel %vm907, %v5067, %v5069
      %5083 = vset.pattern.permute.xlu0 0
      %5084 = vperm.xlu0 %5083, %v4674
      %v5085 = vpop.permute.xlu0 %5084
      %5088 = vset.pattern.permute.xlu0 0
      %5089 = vperm.xlu0 %5088, %v4675
      %v5090 = vpop.permute.xlu0 %5089
      %5093 = vset.pattern.permute.xlu0 0
      %5094 = vperm.xlu0 %5093, %v4676
      %v5095 = vpop.permute.xlu0 %5094
      %5098 = vset.pattern.permute.xlu0 0
      %5099 = vperm.xlu0 %5098, %v4677
      %v5100 = vpop.permute.xlu0 %5099
      %5103 = vset.pattern.permute.xlu0 0
      %5104 = vperm.xlu0 %5103, %v4678
      %v5105 = vpop.permute.xlu0 %5104
      %5108 = vset.pattern.permute.xlu0 0
      %5109 = vperm.xlu0 %5108, %v4679
      %v5110 = vpop.permute.xlu0 %5109
      %5113 = vset.pattern.permute.xlu0 0
      %5114 = vperm.xlu0 %5113, %v4680
      %v5115 = vpop.permute.xlu0 %5114
      %5118 = vset.pattern.permute.xlu0 0
      %5119 = vperm.xlu0 %5118, %v4681
      %v5120 = vpop.permute.xlu0 %5119
      %5123 = vset.pattern.permute.xlu0 0
      %5124 = vperm.xlu0 %5123, %v4682
      %v5125 = vpop.permute.xlu0 %5124
      %5128 = vset.pattern.permute.xlu0 0
      %5129 = vperm.xlu0 %5128, %v4683
      %v5130 = vpop.permute.xlu0 %5129
      %5133 = vset.pattern.permute.xlu0 0
      %5134 = vperm.xlu0 %5133, %v4684
      %v5135 = vpop.permute.xlu0 %5134
      %5138 = vset.pattern.permute.xlu0 0
      %5139 = vperm.xlu0 %5138, %v4685
      %v5140 = vpop.permute.xlu0 %5139
      %5143 = vset.pattern.permute.xlu0 0
      %5144 = vperm.xlu0 %5143, %v4686
      %v5145 = vpop.permute.xlu0 %5144
      %5148 = vset.pattern.permute.xlu0 0
      %5149 = vperm.xlu0 %5148, %v4687
      %v5150 = vpop.permute.xlu0 %5149
      %5153 = vset.pattern.permute.xlu0 0
      %5154 = vperm.xlu0 %5153, %v4688
      %v5155 = vpop.permute.xlu0 %5154
      %5158 = vset.pattern.permute.xlu0 0
      %5159 = vperm.xlu0 %5158, %v4689
      %v5160 = vpop.permute.xlu0 %5159
      %5163 = vset.pattern.permute.xlu0 0
      %5164 = vperm.xlu0 %5163, %v4690
      %v5165 = vpop.permute.xlu0 %5164
      %5168 = vset.pattern.permute.xlu0 0
      %5169 = vperm.xlu0 %5168, %v4691
      %v5170 = vpop.permute.xlu0 %5169
      %v5208 = vunpack.c.l.b16 %v4638
      %v5209 = vunpack.c.h.b16 %v4638
      %v5210 = vunpack.c.l.b16 %v4639
      %v5211 = vunpack.c.h.b16 %v4639
      %v5212 = vunpack.c.l.b16 %v4640
      %v5213 = vunpack.c.h.b16 %v4640
      %v5214 = vunpack.c.l.b16 %v4641
      %v5215 = vunpack.c.h.b16 %v4641
      %v5216 = vunpack.c.l.b16 %v4642
      %v5217 = vunpack.c.h.b16 %v4642
      %v5218 = vunpack.c.l.b16 %v4643
      %v5219 = vunpack.c.h.b16 %v4643
      %v5220 = vunpack.c.l.b16 %v4644
      %v5221 = vunpack.c.h.b16 %v4644
      %v5222 = vunpack.c.l.b16 %v4645
      %v5223 = vunpack.c.h.b16 %v4645
      %v5224 = vunpack.c.l.b16 %v4646
      %v5225 = vunpack.c.h.b16 %v4646
      %v5226 = vunpack.c.l.b16 %v4647
      %v5227 = vunpack.c.h.b16 %v4647
      %v5228 = vunpack.c.l.b16 %v4648
      %v5229 = vunpack.c.h.b16 %v4648
      %v5230 = vunpack.c.l.b16 %v4649
      %v5231 = vunpack.c.h.b16 %v4649
      %v5232 = vunpack.c.l.b16 %v4650
      %v5233 = vunpack.c.h.b16 %v4650
      %v5234 = vunpack.c.l.b16 %v4651
      %v5235 = vunpack.c.h.b16 %v4651
      %v5236 = vunpack.c.l.b16 %v4652
      %v5237 = vunpack.c.h.b16 %v4652
      %v5238 = vunpack.c.l.b16 %v4653
      %v5239 = vunpack.c.h.b16 %v4653
      %v5240 = vunpack.c.l.b16 %v4654
      %v5241 = vunpack.c.h.b16 %v4654
      %v5242 = vunpack.c.l.b16 %v4655
      %v5243 = vunpack.c.h.b16 %v4655
      %v5244 = vunpack.c.l.b16 %v4656
      %v5245 = vunpack.c.h.b16 %v4656
      %v5246 = vunpack.c.l.b16 %v4657
      %v5247 = vunpack.c.h.b16 %v4657
      %v5248 = vunpack.c.l.b16 %v4658
      %v5249 = vunpack.c.h.b16 %v4658
      %v5250 = vunpack.c.l.b16 %v4659
      %v5251 = vunpack.c.h.b16 %v4659
      %v5252 = vunpack.c.l.b16 %v4660
      %v5253 = vunpack.c.h.b16 %v4660
      %v5254 = vunpack.c.l.b16 %v4661
      %v5255 = vunpack.c.h.b16 %v4661
      %v5256 = vunpack.c.l.b16 %v4662
      %v5257 = vunpack.c.h.b16 %v4662
      %v5258 = vunpack.c.l.b16 %v4663
      %v5259 = vunpack.c.h.b16 %v4663
      %v5260 = vunpack.c.l.b16 %v4664
      %v5261 = vunpack.c.h.b16 %v4664
      %v5262 = vunpack.c.l.b16 %v4665
      %v5263 = vunpack.c.h.b16 %v4665
      %v5264 = vunpack.c.l.b16 %v4666
      %v5265 = vunpack.c.h.b16 %v4666
      %v5266 = vunpack.c.l.b16 %v4667
      %v5267 = vunpack.c.h.b16 %v4667
      %v5268 = vunpack.c.l.b16 %v4668
      %v5269 = vunpack.c.h.b16 %v4668
      %v5270 = vunpack.c.l.b16 %v4669
      %v5271 = vunpack.c.h.b16 %v4669
      %v5272 = vunpack.c.l.b16 %v4670
      %v5273 = vunpack.c.h.b16 %v4670
      %v5274 = vunpack.c.l.b16 %v4671
      %v5275 = vunpack.c.h.b16 %v4671
      %v5276 = vunpack.c.l.b16 %v4672
      %v5277 = vunpack.c.h.b16 %v4672
      %v5278 = vunpack.c.l.b16 %v4673
      %v5279 = vunpack.c.h.b16 %v4673
      %v5280 = vpack.c.b16 %v5212, %v5208
      %v5281 = vpack.c.b16 %v5213, %v5209
      %v5282 = vpack.c.b16 %v5214, %v5210
      %v5283 = vpack.c.b16 %v5215, %v5211
      %v5284 = vpack.c.b16 %v5220, %v5216
      %v5285 = vpack.c.b16 %v5221, %v5217
      %v5286 = vpack.c.b16 %v5222, %v5218
      %v5287 = vpack.c.b16 %v5223, %v5219
      %v5288 = vpack.c.b16 %v5228, %v5224
      %v5289 = vpack.c.b16 %v5229, %v5225
      %v5290 = vpack.c.b16 %v5230, %v5226
      %v5291 = vpack.c.b16 %v5231, %v5227
      %v5292 = vpack.c.b16 %v5236, %v5232
      %v5293 = vpack.c.b16 %v5237, %v5233
      %v5294 = vpack.c.b16 %v5238, %v5234
      %v5295 = vpack.c.b16 %v5239, %v5235
      %v5296 = vpack.c.b16 %v5244, %v5240
      %v5297 = vpack.c.b16 %v5245, %v5241
      %v5298 = vpack.c.b16 %v5246, %v5242
      %v5299 = vpack.c.b16 %v5247, %v5243
      %v5300 = vpack.c.b16 %v5252, %v5248
      %v5301 = vpack.c.b16 %v5253, %v5249
      %v5302 = vpack.c.b16 %v5254, %v5250
      %v5303 = vpack.c.b16 %v5255, %v5251
      %v5304 = vpack.c.b16 %v5260, %v5256
      %v5305 = vpack.c.b16 %v5261, %v5257
      %v5306 = vpack.c.b16 %v5262, %v5258
      %v5307 = vpack.c.b16 %v5263, %v5259
      %v5308 = vpack.c.b16 %v5268, %v5264
      %v5309 = vpack.c.b16 %v5269, %v5265
      %v5310 = vpack.c.b16 %v5270, %v5266
      %v5311 = vpack.c.b16 %v5271, %v5267
      %v5312 = vpack.c.b16 %v5276, %v5272
      %v5313 = vpack.c.b16 %v5277, %v5273
      %v5314 = vpack.c.b16 %v5278, %v5274
      %v5315 = vpack.c.b16 %v5279, %v5275
      %v5344 = vsel %vm1410, %v5283, 0
      %v5347 = vsel %vm1410, %v5287, 0
      %v5350 = vsel %vm1410, %v5291, 0
      %v5353 = vsel %vm1410, %v5295, 0
      %v5356 = vsel %vm1410, %v5299, 0
      %v5359 = vsel %vm1410, %v5303, 0
      %v5362 = vsel %vm1410, %v5307, 0
      %v5365 = vsel %vm1410, %v5311, 0
      %v5368 = vsel %vm1410, %v5315, 0
      %5370 = vmatprep.subr.bf16.mxu0 %v4741
      %5371 = vmatpush1.bf16.msra.mxu0 %v4740
      %5372 = vmatprep.subr.bf16.mxu0 %v4743
      %5373 = vmatpush1.bf16.msra.mxu0 %v4742
      %5374 = vmatprep.subr.bf16.mxu0 %v4745
      %5375 = vmatpush1.bf16.msra.mxu0 %v4744
      %5376 = vmatprep.subr.bf16.mxu0 %v4816
      %5377 = vmatpush1.bf16.msra.mxu0 %v4815
      %5378 = vmatprep.subr.bf16.mxu0 %v4818
      %5379 = vmatpush1.bf16.msra.mxu0 %v4817
      %5380 = vmatprep.subr.bf16.mxu0 %v4820
      %5381 = vmatpush1.bf16.msra.mxu0 %v4819
      %5382 = vmatprep.subr.bf16.mxu0 %v4855
      %5383 = vmatpush1.bf16.msra.mxu0 %v4854
      %5384 = vmatprep.subr.bf16.mxu0 %v4857
      %5385 = vmatpush1.bf16.msra.mxu0 %v4856
      %5386 = vmatprep.subr.bf16.mxu0 %v4859
      %5387 = vmatpush1.bf16.msra.mxu0 %v4858
      %5388 = vmatprep.subr.bf16.mxu0 %v4894
      %5389 = vmatpush1.bf16.msra.mxu0 %v4893
      %5390 = vmatprep.subr.bf16.mxu0 %v4896
      %5391 = vmatpush1.bf16.msra.mxu0 %v4895
      %5392 = vmatprep.subr.bf16.mxu0 %v4898
      %5393 = vmatpush1.bf16.msra.mxu0 %v4897
      %5394 = vmatprep.subr.bf16.mxu0 %v4924
      %5395 = vmatpush1.bf16.msra.mxu0 %v4923
      %5396 = vmatprep.subr.bf16.mxu0 %v4926
      %5397 = vmatpush1.bf16.msra.mxu0 %v4925
      %5398 = vmatprep.subr.bf16.mxu0 %v4928
      %5399 = vmatpush1.bf16.msra.mxu0 %v4927
      %5400 = vmatprep.subr.bf16.mxu0 %v4963
      %5401 = vmatpush1.bf16.msra.mxu0 %v4962
      %5402 = vmatprep.mubr.bf16.mxu0 %v5281
      %5403 = vmatmul.mubr.bf16.gmra.mrb[0].mxu0 %v5280
      %v5404 = vpop.f32.mrb[0].mxu0
      %v5405 = vadd.f32 %v5085, %v5404
      %v5406 = vpop.f32.mrb[0].mxu0
      %v5407 = vadd.f32 %v5085, %v5406
      %v5408 = vpop.f32.mrb[0].mxu0
      %v5409 = vadd.f32 %v5090, %v5408
      %v5410 = vpop.f32.mrb[0].mxu0
      %v5411 = vadd.f32 %v5090, %v5410
      %5412 = vmatprep.mubr.bf16.mxu0 %v5285
      %5413 = vmatmul.mubr.bf16.gmra.mrb[0].mxu0 %v5284
      %v5414 = vpop.f32.mrb[0].mxu0
      %v5415 = vadd.f32 %v5095, %v5414
      %v5416 = vpop.f32.mrb[0].mxu0
      %v5417 = vadd.f32 %v5095, %v5416
      %v5418 = vpop.f32.mrb[0].mxu0
      %v5419 = vadd.f32 %v5100, %v5418
      %v5420 = vpop.f32.mrb[0].mxu0
      %v5421 = vadd.f32 %v5100, %v5420
      %5422 = vmatprep.mubr.bf16.mxu0 %v5289
      %5423 = vmatmul.mubr.bf16.gmra.mrb[0].mxu0 %v5288
      %v5424 = vpop.f32.mrb[0].mxu0
      %v5425 = vadd.f32 %v5105, %v5424
      %v5426 = vpop.f32.mrb[0].mxu0
      %v5427 = vadd.f32 %v5105, %v5426
      %v5428 = vpop.f32.mrb[0].mxu0
      %v5429 = vadd.f32 %v5110, %v5428
      %v5430 = vpop.f32.mrb[0].mxu0
      %v5431 = vadd.f32 %v5110, %v5430
      %5432 = vmatprep.mubr.bf16.mxu0 %v5293
      %5433 = vmatmul.mubr.bf16.gmra.mrb[0].mxu0 %v5292
      %v5434 = vpop.f32.mrb[0].mxu0
      %v5435 = vadd.f32 %v5115, %v5434
      %v5436 = vpop.f32.mrb[0].mxu0
      %v5437 = vadd.f32 %v5115, %v5436
      %v5438 = vpop.f32.mrb[0].mxu0
      %v5439 = vadd.f32 %v5120, %v5438
      %v5440 = vpop.f32.mrb[0].mxu0
      %v5441 = vadd.f32 %v5120, %v5440
      %5442 = vmatprep.mubr.bf16.mxu0 %v5297
      %5443 = vmatmul.mubr.bf16.gmra.mrb[0].mxu0 %v5296
      %v5444 = vpop.f32.mrb[0].mxu0
      %v5445 = vadd.f32 %v5125, %v5444
      %v5446 = vpop.f32.mrb[0].mxu0
      %v5447 = vadd.f32 %v5125, %v5446
      %v5448 = vpop.f32.mrb[0].mxu0
      %v5449 = vadd.f32 %v5130, %v5448
      %v5450 = vpop.f32.mrb[0].mxu0
      %v5451 = vadd.f32 %v5130, %v5450
      %5452 = vmatprep.mubr.bf16.mxu0 %v5301
      %5453 = vmatmul.mubr.bf16.gmra.mrb[0].mxu0 %v5300
      %v5454 = vpop.f32.mrb[0].mxu0
      %v5455 = vadd.f32 %v5135, %v5454
      %v5456 = vpop.f32.mrb[0].mxu0
      %v5457 = vadd.f32 %v5135, %v5456
      %v5458 = vpop.f32.mrb[0].mxu0
      %v5459 = vadd.f32 %v5140, %v5458
      %v5460 = vpop.f32.mrb[0].mxu0
      %v5461 = vadd.f32 %v5140, %v5460
      %5462 = vmatprep.mubr.bf16.mxu0 %v5305
      %5463 = vmatmul.mubr.bf16.gmra.mrb[0].mxu0 %v5304
      %v5464 = vpop.f32.mrb[0].mxu0
      %v5465 = vadd.f32 %v5145, %v5464
      %v5466 = vpop.f32.mrb[0].mxu0
      %v5467 = vadd.f32 %v5145, %v5466
      %v5468 = vpop.f32.mrb[0].mxu0
      %v5469 = vadd.f32 %v5150, %v5468
      %v5470 = vpop.f32.mrb[0].mxu0
      %v5471 = vadd.f32 %v5150, %v5470
      %5472 = vmatprep.mubr.bf16.mxu0 %v5309
      %5473 = vmatmul.mubr.bf16.gmra.mrb[0].mxu0 %v5308
      %v5474 = vpop.f32.mrb[0].mxu0
      %v5475 = vadd.f32 %v5155, %v5474
      %v5476 = vpop.f32.mrb[0].mxu0
      %v5477 = vadd.f32 %v5155, %v5476
      %v5478 = vpop.f32.mrb[0].mxu0
      %v5479 = vadd.f32 %v5160, %v5478
      %v5480 = vpop.f32.mrb[0].mxu0
      %v5481 = vadd.f32 %v5160, %v5480
      %5482 = vmatprep.mubr.bf16.mxu0 %v5313
      %5483 = vmatmul.mubr.bf16.gmra.mrb[0].mxu0 %v5312
      %v5484 = vpop.f32.mrb[0].mxu0
      %v5485 = vadd.f32 %v5165, %v5484
      %v5486 = vpop.f32.mrb[0].mxu0
      %v5487 = vadd.f32 %v5165, %v5486
      %v5488 = vpop.f32.mrb[0].mxu0
      %v5489 = vadd.f32 %v5170, %v5488
      %v5490 = vpop.f32.mrb[0].mxu0
      %v5491 = vadd.f32 %v5170, %v5490
      %5492 = vdwg.mxu0
      %5493 = vmatprep.subr.bf16.mxu0 %v4965
      %5494 = vmatpush1.bf16.msra.mxu0 %v4964
      %5495 = vmatprep.subr.bf16.mxu0 %v4967
      %5496 = vmatpush1.bf16.msra.mxu0 %v4966
      %5497 = vmatprep.subr.bf16.mxu0 %v5002
      %5498 = vmatpush1.bf16.msra.mxu0 %v5001
      %5499 = vmatprep.subr.bf16.mxu0 %v5004
      %5500 = vmatpush1.bf16.msra.mxu0 %v5003
      %5501 = vmatprep.subr.bf16.mxu0 %v5006
      %5502 = vmatpush1.bf16.msra.mxu0 %v5005
      %5503 = vmatprep.subr.bf16.mxu0 %v5032
      %5504 = vmatpush1.bf16.msra.mxu0 %v5031
      %5505 = vmatprep.subr.bf16.mxu0 %v5034
      %5506 = vmatpush1.bf16.msra.mxu0 %v5033
      %5507 = vmatprep.subr.bf16.mxu0 %v5036
      %5508 = vmatpush1.bf16.msra.mxu0 %v5035
      %5509 = vmatprep.subr.bf16.mxu0 %v5071
      %5510 = vmatpush1.bf16.msra.mxu0 %v5070
      %5511 = vmatprep.subr.bf16.mxu0 %v5073
      %5512 = vmatpush1.bf16.msra.mxu0 %v5072
      %5513 = vmatprep.subr.bf16.mxu0 %v5075
      %5514 = vmatpush1.bf16.msra.mxu0 %v5074
      %5515 = vmatprep.subr.bf16.mxu0 0
      %5516 = vmatpush1.bf16.msra.mxu0 0
      %5517 = vmatprep.subr.bf16.mxu0 0
      %5518 = vmatpush1.bf16.msra.mxu0 0
      %5519 = vmatprep.subr.bf16.mxu0 0
      %5520 = vmatpush1.bf16.msra.mxu0 0
      %5521 = vmatprep.subr.bf16.mxu0 0
      %5522 = vmatpush1.bf16.msra.mxu0 0
      %5523 = vmatprep.subr.bf16.mxu0 0
      %5524 = vmatpush1.bf16.msra.mxu0 0
      %5525 = vmatprep.mubr.bf16.mxu0 %v5344
      %5526 = vmatmul.mubr.bf16.gmra.mrb[0].mxu0 %v5282
      %v5527 = vpop.f32.mrb[0].mxu0
      %v5528 = vadd.f32 %v5405, %v5527
      %v5529 = vpop.f32.mrb[0].mxu0
      %v5530 = vadd.f32 %v5407, %v5529
      %v5531 = vpop.f32.mrb[0].mxu0
      %v5532 = vadd.f32 %v5409, %v5531
      %v5533 = vpop.f32.mrb[0].mxu0
      %v5534 = vadd.f32 %v5411, %v5533
      %5535 = vmatprep.mubr.bf16.mxu0 %v5347
      %5536 = vmatmul.mubr.bf16.gmra.mrb[0].mxu0 %v5286
      %v5537 = vpop.f32.mrb[0].mxu0
      %v5538 = vadd.f32 %v5415, %v5537
      %v5539 = vpop.f32.mrb[0].mxu0
      %v5540 = vadd.f32 %v5417, %v5539
      %v5541 = vpop.f32.mrb[0].mxu0
      %v5542 = vadd.f32 %v5419, %v5541
      %v5543 = vpop.f32.mrb[0].mxu0
      %v5544 = vadd.f32 %v5421, %v5543
      %5545 = vmatprep.mubr.bf16.mxu0 %v5350
      %5546 = vmatmul.mubr.bf16.gmra.mrb[0].mxu0 %v5290
      %v5547 = vpop.f32.mrb[0].mxu0
      %v5548 = vadd.f32 %v5425, %v5547
      %v5549 = vpop.f32.mrb[0].mxu0
      %v5550 = vadd.f32 %v5427, %v5549
      %v5551 = vpop.f32.mrb[0].mxu0
      %v5552 = vadd.f32 %v5429, %v5551
      %v5553 = vpop.f32.mrb[0].mxu0
      %v5554 = vadd.f32 %v5431, %v5553
      %5555 = vmatprep.mubr.bf16.mxu0 %v5353
      %5556 = vmatmul.mubr.bf16.gmra.mrb[0].mxu0 %v5294
      %v5557 = vpop.f32.mrb[0].mxu0
      %v5558 = vadd.f32 %v5435, %v5557
      %v5559 = vpop.f32.mrb[0].mxu0
      %v5560 = vadd.f32 %v5437, %v5559
      %v5561 = vpop.f32.mrb[0].mxu0
      %v5562 = vadd.f32 %v5439, %v5561
      %v5563 = vpop.f32.mrb[0].mxu0
      %v5564 = vadd.f32 %v5441, %v5563
      %5565 = vmatprep.mubr.bf16.mxu0 %v5356
      %5566 = vmatmul.mubr.bf16.gmra.mrb[0].mxu0 %v5298
      %v5567 = vpop.f32.mrb[0].mxu0
      %v5568 = vadd.f32 %v5445, %v5567
      %v5569 = vpop.f32.mrb[0].mxu0
      %v5570 = vadd.f32 %v5447, %v5569
      %v5571 = vpop.f32.mrb[0].mxu0
      %v5572 = vadd.f32 %v5449, %v5571
      %v5573 = vpop.f32.mrb[0].mxu0
      %v5574 = vadd.f32 %v5451, %v5573
      %5575 = vmatprep.mubr.bf16.mxu0 %v5359
      %5576 = vmatmul.mubr.bf16.gmra.mrb[0].mxu0 %v5302
      %v5577 = vpop.f32.mrb[0].mxu0
      %v5578 = vadd.f32 %v5455, %v5577
      %v5579 = vpop.f32.mrb[0].mxu0
      %v5580 = vadd.f32 %v5457, %v5579
      %v5581 = vpop.f32.mrb[0].mxu0
      %v5582 = vadd.f32 %v5459, %v5581
      %v5583 = vpop.f32.mrb[0].mxu0
      %v5584 = vadd.f32 %v5461, %v5583
      %5585 = vmatprep.mubr.bf16.mxu0 %v5362
      %5586 = vmatmul.mubr.bf16.gmra.mrb[0].mxu0 %v5306
      %v5587 = vpop.f32.mrb[0].mxu0
      %v5588 = vadd.f32 %v5465, %v5587
      %v5589 = vpop.f32.mrb[0].mxu0
      %v5590 = vadd.f32 %v5467, %v5589
      %v5591 = vpop.f32.mrb[0].mxu0
      %v5592 = vadd.f32 %v5469, %v5591
      %v5593 = vpop.f32.mrb[0].mxu0
      %v5594 = vadd.f32 %v5471, %v5593
      %5595 = vmatprep.mubr.bf16.mxu0 %v5365
      %5596 = vmatmul.mubr.bf16.gmra.mrb[0].mxu0 %v5310
      %v5597 = vpop.f32.mrb[0].mxu0
      %v5598 = vadd.f32 %v5475, %v5597
      %v5599 = vpop.f32.mrb[0].mxu0
      %v5600 = vadd.f32 %v5477, %v5599
      %v5601 = vpop.f32.mrb[0].mxu0
      %v5602 = vadd.f32 %v5479, %v5601
      %v5603 = vpop.f32.mrb[0].mxu0
      %v5604 = vadd.f32 %v5481, %v5603
      %5605 = vmatprep.mubr.bf16.mxu0 %v5368
      %5606 = vmatmul.mubr.bf16.gmra.mrb[0].mxu0 %v5314
      %v5607 = vpop.f32.mrb[0].mxu0
      %v5608 = vadd.f32 %v5485, %v5607
      %v5609 = vpop.f32.mrb[0].mxu0
      %v5610 = vadd.f32 %v5487, %v5609
      %v5611 = vpop.f32.mrb[0].mxu0
      %v5612 = vadd.f32 %v5489, %v5611
      %v5613 = vpop.f32.mrb[0].mxu0
      %v5614 = vadd.f32 %v5491, %v5613
      %5615 = vdwg.mxu0
      %5616 = vst [vmem:[%s414] sm:$0xff] %v5528
      %5617 = vst [vmem:[%s414 + $0x8] sm:$0xff] %v5530
      %5618 = vst [vmem:[%s414 + $0x10] sm:$0xff] %v5532
      %5619 = vst [vmem:[%s414 + $0x18] sm:$0xff] %v5534
      %5620 = vst [vmem:[%s414 + $0x20] sm:$0xff] %v5538
      %5621 = vst [vmem:[%s414 + $0x28] sm:$0xff] %v5540
      %5622 = vst [vmem:[%s414 + $0x30] sm:$0xff] %v5542
      %5623 = vst [vmem:[%s414 + $0x38] sm:$0xff] %v5544
      %5624 = vst [vmem:[%s414 + $0x40] sm:$0xff] %v5548
      %5625 = vst [vmem:[%s414 + $0x48] sm:$0xff] %v5550
      %5626 = vst [vmem:[%s414 + $0x50] sm:$0xff] %v5552
      %5627 = vst [vmem:[%s414 + $0x58] sm:$0xff] %v5554
      %5628 = vst [vmem:[%s414 + $0x60] sm:$0xff] %v5558
      %5629 = vst [vmem:[%s414 + $0x68] sm:$0xff] %v5560
      %5630 = vst [vmem:[%s414 + $0x70] sm:$0xff] %v5562
      %5631 = vst [vmem:[%s414 + $0x78] sm:$0xff] %v5564
      %5632 = vst [vmem:[%s414 + $0x80] sm:$0xff] %v5568
      %5633 = vst [vmem:[%s414 + $0x88] sm:$0xff] %v5570
      %5634 = vst [vmem:[%s414 + $0x90] sm:$0xff] %v5572
      %5635 = vst [vmem:[%s414 + $0x98] sm:$0xff] %v5574
      %5636 = vst [vmem:[%s414 + $0xa0] sm:$0xff] %v5578
      %5637 = vst [vmem:[%s414 + $0xa8] sm:$0xff] %v5580
      %5638 = vst [vmem:[%s414 + $0xb0] sm:$0xff] %v5582
      %5639 = vst [vmem:[%s414 + $0xb8] sm:$0xff] %v5584
      %5640 = vst [vmem:[%s414 + $0xc0] sm:$0xff] %v5588
      %5641 = vst [vmem:[%s414 + $0xc8] sm:$0xff] %v5590
      %5642 = vst [vmem:[%s414 + $0xd0] sm:$0xff] %v5592
      %5643 = vst [vmem:[%s414 + $0xd8] sm:$0xff] %v5594
      %5644 = vst [vmem:[%s414 + $0xe0] sm:$0xff] %v5598
      %5645 = vst [vmem:[%s414 + $0xe8] sm:$0xff] %v5600
      %5646 = vst [vmem:[%s414 + $0xf0] sm:$0xff] %v5602
      %5647 = vst [vmem:[%s414 + $0xf8] sm:$0xff] %v5604
      %5648 = vst [vmem:[%s414 + $0x100] sm:$0xff] %v5608
      %5649 = vst [vmem:[%s414 + $0x108] sm:$0xff] %v5610
      %5650 = vst [vmem:[%s414 + $0x110] sm:$0xff] %v5612
      %5651 = vst [vmem:[%s414 + $0x118] sm:$0xff] %v5614
      %5652 = vst [vmem:[%s419] sm:$0xff] %v4351
      %5653 = vst [vmem:[%s419 + $0x8] sm:$0xff] %v4352
      %5654 = vst [vmem:[%s419 + $0x10] sm:$0xff] %v4353
      %5655 = vst [vmem:[%s419 + $0x18] sm:$0xff] %v4354
      %p5656 = scmp.lt.s32.totalorder %s23, 1
      %s5657 = scalar_select %p5656, %s23, 1
      %s5658 = smul.addr %s5657, 36
      %s5659 = smul.addr %s5658, 8
      %s5660 = scalar_lea.vmem %s10, %s5659
      %p5661 = scmp.lt.s32.totalorder %s23, 1
      %s5662 = scalar_select %p5661, %s23, 1
      %s5663 = smul.addr %s5662, 4
      %s5664 = smul.addr %s5663, 8
      %s5665 = scalar_lea.vmem %s11, %s5664
      // Predicated region
      $region61: #{neuro_forward.1} parent=59 // pred_check
        %p5666 = pneg %p261
      $region62: #{neuro_forward.1} parent=59 // pred_check_branch
        %5668 = sbr.rel (%p5666) target = $region64
      $region63: #{neuro_forward.1} parent=59 // pred_region
        _
      $region64: #{neuro_forward.1} parent=59 // pred_fallthru
        _
      // Predicated region
      $region65: #{neuro_forward.1} parent=59 // pred_check
        %p5669 = pneg %p287
      $region66: #{neuro_forward.1} parent=59 // pred_check_branch
        %5671 = sbr.rel (%p5669) target = $region68
      $region67: #{neuro_forward.1} parent=59 // pred_region
        _
      $region68: #{neuro_forward.1} parent=59 // pred_fallthru
        _
    $region60: #{neuro_forward.1} parent=5 // pred_fallthru
      _
    %p5672 = scmp.le.s32.totalorder 2, %s18
    // Predicated region
    $region69: #{neuro_forward.1} parent=5 // pred_check
      %p5673 = pneg %p5672
    $region70: #{neuro_forward.1} parent=5 // pred_check_branch
      %5675 = sbr.rel (%p5673) target = $region72
    $region71: #{neuro_forward.1} parent=5 // pred_region
      %s5676 = ssub.s32 %s18, 2
      // Predicated region
      $region73: #{neuro_forward.1} parent=71 // pred_check
        %p5677 = pneg %p267
      $region74: #{neuro_forward.1} parent=71 // pred_check_branch
        %5679 = sbr.rel (%p5677) target = $region76
      $region75: #{neuro_forward.1} parent=71 // pred_region
        %p5680 = scmp.lt.s32.totalorder %s24, 1
        %s5681 = scalar_select %p5680, %s24, 1
        %s5682 = smul.addr %s5681, 36
        %s5683 = smul.addr %s5682, 8
        %s5684 = scalar_lea.vmem %s10, %s5683
      $region76: #{neuro_forward.1} parent=71 // pred_fallthru
        _
      // Predicated region
      $region77: #{neuro_forward.1} parent=71 // pred_check
        %p5685 = pneg %p293
      $region78: #{neuro_forward.1} parent=71 // pred_check_branch
        %5687 = sbr.rel (%p5685) target = $region80
      $region79: #{neuro_forward.1} parent=71 // pred_region
        %p5688 = scmp.lt.s32.totalorder %s24, 1
        %s5689 = scalar_select %p5688, %s24, 1
        %s5690 = smul.addr %s5689, 4
        %s5691 = smul.addr %s5690, 8
        %s5692 = scalar_lea.vmem %s11, %s5691
      $region80: #{neuro_forward.1} parent=71 // pred_fallthru
        _
    $region72: #{neuro_forward.1} parent=5 // pred_fallthru
      _
  $region6: #{neuro_forward.1} parent=0 // loop_footer
    %s22 = sadd.s32 1, %s18
  $region7: #{neuro_forward.1} parent=0 // loop_footer_branch
    %17 = sbr.rel target = $region3
  $region8: #{neuro_forward.1} parent=0 // loop_exit
    _

</llo_original>
